<compile_context>
chip_gen: v7x
topology: tpu7x:2x2x1
jax: 0.10.0
libtpu: 0.0.40
codegen_flags: <defaults>
</compile_context>

<pallas_src>
import functools

import jax
import jax.numpy as jnp
from jax.experimental import pallas as pl
from jax.experimental.pallas import tpu as pltpu

# ----------------------------- config ---------------------------------------
VOCAB = 128
D_MODEL = 32
N_HEADS = 4
D_HEAD = 8
INNER = N_HEADS * D_HEAD      # 32
D_FF = 64
N_BUCKETS = 32
MAX_DIST = 128
PAD_ID = 0
EOS_ID = 1
DEC_START_ID = 0              # T5 decoder_start_token_id == pad_token_id
NEG_INF = -1e9

# ------------------------- in-kernel helpers ---------------------------------
def _rms(x, w):
    var = jnp.mean(x * x, axis=-1, keepdims=True)
    return x * jax.lax.rsqrt(var + 1e-6) * w


def _softmax(s):
    m = jnp.max(s, axis=-1, keepdims=True)
    p = jnp.exp(s - m)
    l = jnp.sum(p, axis=-1, keepdims=True)
    return p * pl.reciprocal(l, approx=False)


def _bdot(a, b):
    # bf16 MXU operands, f32 accumulation.
    return jnp.dot(a.astype(jnp.bfloat16), b.astype(jnp.bfloat16),
                   preferred_element_type=jnp.float32)


def _bdot_t(a, b):
    # a[m,d] @ b[n,d]^T -> [m,n]  (contract last dims; MXU-native, no transpose)
    return jax.lax.dot_general(
        a.astype(jnp.bfloat16), b.astype(jnp.bfloat16),
        (((1,), (1,)), ((), ())), preferred_element_type=jnp.float32)


# --------------------- fused encoder-pass kernel -----------------------------
def _encoder_kernel(x_ref, pos_ref, mask_ref,
                    ln1_ref, wqkv_ref, wattno_ref, ln2_ref, wffi_ref, wffo_ref,
                    lnf_ref, wckv_ref,
                    ck_ref, cv_ref):
    x = x_ref[0]                       # [S, D]
    mask = mask_ref[0]                 # [1, S] additive padding mask
    posb = pos_ref[...]                # [H, S, S] relative-position bias

    # --- self attention (T5: no 1/sqrt(d), additive bias) ---
    h = _rms(x, ln1_ref[...])
    qkv = _bdot(h, wqkv_ref[...])      # [S, 3*INNER] fused QKV projection
    q = qkv[:, :INNER]
    k = qkv[:, INNER:2 * INNER]
    v = qkv[:, 2 * INNER:]
    wo_attn = wattno_ref[...]          # [INNER, D]
    attn = jnp.zeros_like(x)
    for hh in range(N_HEADS):
        sl = slice(hh * D_HEAD, (hh + 1) * D_HEAD)
        s = _bdot_t(q[:, sl], k[:, sl])            # [S, S]
        s = s + posb[hh] + mask
        p = _softmax(s)
        oh = _bdot(p, v[:, sl])                    # [S, Dh]
        attn = attn + _bdot(oh, wo_attn[sl, :])    # fold head into out-proj
    x = x + attn

    # --- FFN (relu) ---
    h = _rms(x, ln2_ref[...])
    ff = jnp.maximum(_bdot(h, wffi_ref[...]), 0.0)
    x = x + _bdot(ff, wffo_ref[...])

    # --- final norm + decoder cross-attention K/V (computed once here) ---
    y = _rms(x, lnf_ref[...])
    ckv = _bdot(y, wckv_ref[...])                  # [S, 2*INNER]
    ck_ref[0] = ckv[:, :INNER]
    cv_ref[0] = ckv[:, INNER:]


def encoder_forward(params, x_emb, enc_pos, enc_mask):
    BR, S, D = x_emb.shape
    e = params["enc"]
    d = params["dec"]
    return pl.pallas_call(
        _encoder_kernel,
        out_shape=(jax.ShapeDtypeStruct((BR, S, INNER), jnp.float32),
                   jax.ShapeDtypeStruct((BR, S, INNER), jnp.float32)),
        grid=(BR,),
        in_specs=[
            pl.BlockSpec((1, S, D), lambda b: (b, 0, 0)),          # x
            pl.BlockSpec((N_HEADS, S, S), lambda b: (0, 0, 0)),    # rel-pos bias
            pl.BlockSpec((1, 1, S), lambda b: (b, 0, 0)),          # pad mask
            pl.BlockSpec((1, D), lambda b: (0, 0)),                # ln1
            pl.BlockSpec((D, 3 * INNER), lambda b: (0, 0)),        # fused Wqkv
            pl.BlockSpec((INNER, D), lambda b: (0, 0)),            # attn out proj
            pl.BlockSpec((1, D), lambda b: (0, 0)),                # ln2
            pl.BlockSpec((D, D_FF), lambda b: (0, 0)),             # ffn in
            pl.BlockSpec((D_FF, D), lambda b: (0, 0)),             # ffn out
            pl.BlockSpec((1, D), lambda b: (0, 0)),                # ln_f
            pl.BlockSpec((D, 2 * INNER), lambda b: (0, 0)),        # cross K|V proj
        ],
        out_specs=(pl.BlockSpec((1, S, INNER), lambda b: (b, 0, 0)),
                   pl.BlockSpec((1, S, INNER), lambda b: (b, 0, 0))),
        compiler_params=pltpu.CompilerParams(dimension_semantics=("parallel",)),
    )(x_emb, enc_pos, enc_mask, e["ln1"], e["w_qkv"], e["w_attn_o"], e["ln2"],
      e["w_ff_in"], e["w_ff_out"], e["ln_f"], d["w_ckv"])


# ----------------- fused single-token decoder-step kernel --------------------
def _decoder_step_kernel(t_ref,                                    # scalar prefetch
                         x_ref, pos_ref, encmask_ref, kc_ref, vc_ref,
                         ck_ref, cv_ref,
                         ln1_ref, wqkv_ref, wso_ref, ln2_ref, wcq_ref, wco_ref,
                         ln3_ref, wffi_ref, wffo_ref, lnf_ref, lmw_ref,
                         logits_ref, kout_ref, vout_ref):
    t = t_ref[0]
    x = x_ref[0]                       # [1, D] current-token embedding
    enc_mask = encmask_ref[0]          # [1, S]
    posb = pos_ref[...]                # [H, Tmax] bias row for query position t

    # ---- self attention with KV cache ----
    h = _rms(x, ln1_ref[...])
    qkv = _bdot(h, wqkv_ref[...])      # [1, 3*INNER]
    q = qkv[:, :INNER]
    k_new = qkv[:, INNER:2 * INNER]
    v_new = qkv[:, 2 * INNER:]

    k_all = kc_ref[0]                  # [Tmax, INNER]
    v_all = vc_ref[0]
    tmax = k_all.shape[0]
    row = jax.lax.broadcasted_iota(jnp.int32, (tmax, 1), 0)
    is_t = row == t
    k_all = jnp.where(is_t, k_new, k_all)       # write new K/V into row t
    v_all = jnp.where(is_t, v_new, v_all)
    kout_ref[0] = k_all
    vout_ref[0] = v_all

    key_pos = jax.lax.broadcasted_iota(jnp.int32, (1, tmax), 1)
    causal = jnp.where(key_pos <= t, 0.0, NEG_INF)               # [1, Tmax]

    wso = wso_ref[...]
    attn = jnp.zeros_like(x)
    for hh in range(N_HEADS):
        sl = slice(hh * D_HEAD, (hh + 1) * D_HEAD)
        s = _bdot_t(q[:, sl], k_all[:, sl])                      # [1, Tmax]
        s = s + posb[hh:hh + 1, :] + causal
        p = _softmax(s)
        oh = _bdot(p, v_all[:, sl])                              # [1, Dh]
        attn = attn + _bdot(oh, wso[sl, :])
    x = x + attn

    # ---- cross attention (no rel-pos bias in T5 cross-attn) ----
    h = _rms(x, ln2_ref[...])
    qc = _bdot(h, wcq_ref[...])                                  # [1, INNER]
    ck = ck_ref[0]                                               # [S, INNER]
    cv = cv_ref[0]
    wco = wco_ref[...]
    attn = jnp.zeros_like(x)
    for hh in range(N_HEADS):
        sl = slice(hh * D_HEAD, (hh + 1) * D_HEAD)
        s = _bdot_t(qc[:, sl], ck[:, sl]) + enc_mask             # [1, S]
        p = _softmax(s)
        oh = _bdot(p, cv[:, sl])
        attn = attn + _bdot(oh, wco[sl, :])
    x = x + attn

    # ---- FFN ----
    h = _rms(x, ln3_ref[...])
    ff = jnp.maximum(_bdot(h, wffi_ref[...]), 0.0)
    x = x + _bdot(ff, wffo_ref[...])

    # ---- final norm + tied lm_head (only the active position) ----
    y = _rms(x, lnf_ref[...])
    logits_ref[0] = _bdot(y, lmw_ref[...])                       # [1, VOCAB]


def decoder_step(params, x_t, pos_row, enc_mask, k_cache, v_cache,
                 cross_k, cross_v, lm_w, t):
    BR = x_t.shape[0]
    Tmax = k_cache.shape[1]
    S = cross_k.shape[1]
    d = params["dec"]

    grid_spec = pltpu.PrefetchScalarGridSpec(
        num_scalar_prefetch=1,
        grid=(BR,),
        in_specs=[
            pl.BlockSpec((1, 1, D_MODEL), lambda b, t: (b, 0, 0)),      # x_t
            pl.BlockSpec((N_HEADS, Tmax), lambda b, t: (0, 0)),         # pos bias row
            pl.BlockSpec((1, 1, S), lambda b, t: (b, 0, 0)),            # enc pad mask
            pl.BlockSpec((1, Tmax, INNER), lambda b, t: (b, 0, 0)),     # K cache
            pl.BlockSpec((1, Tmax, INNER), lambda b, t: (b, 0, 0)),     # V cache
            pl.BlockSpec((1, S, INNER), lambda b, t: (b, 0, 0)),        # cross K
            pl.BlockSpec((1, S, INNER), lambda b, t: (b, 0, 0)),        # cross V
            pl.BlockSpec((1, D_MODEL), lambda b, t: (0, 0)),            # ln1
            pl.BlockSpec((D_MODEL, 3 * INNER), lambda b, t: (0, 0)),    # fused self QKV
            pl.BlockSpec((INNER, D_MODEL), lambda b, t: (0, 0)),        # self out proj
            pl.BlockSpec((1, D_MODEL), lambda b, t: (0, 0)),            # ln2
            pl.BlockSpec((D_MODEL, INNER), lambda b, t: (0, 0)),        # cross Q
            pl.BlockSpec((INNER, D_MODEL), lambda b, t: (0, 0)),        # cross out proj
            pl.BlockSpec((1, D_MODEL), lambda b, t: (0, 0)),            # ln3
            pl.BlockSpec((D_MODEL, D_FF), lambda b, t: (0, 0)),         # ffn in
            pl.BlockSpec((D_FF, D_MODEL), lambda b, t: (0, 0)),         # ffn out
            pl.BlockSpec((1, D_MODEL), lambda b, t: (0, 0)),            # ln_f
            pl.BlockSpec((D_MODEL, VOCAB), lambda b, t: (0, 0)),        # lm head (D,V)
        ],
        out_specs=[
            pl.BlockSpec((1, 1, VOCAB), lambda b, t: (b, 0, 0)),        # logits
            pl.BlockSpec((1, Tmax, INNER), lambda b, t: (b, 0, 0)),     # new K cache
            pl.BlockSpec((1, Tmax, INNER), lambda b, t: (b, 0, 0)),     # new V cache
        ],
    )
    # TODO(synk): could add input_output_aliases for the KV cache buffers; with
    # these sizes the re-written 8 KiB/step per sequence is negligible.
    return pl.pallas_call(
        _decoder_step_kernel,
        out_shape=[jax.ShapeDtypeStruct((BR, 1, VOCAB), jnp.float32),
                   jax.ShapeDtypeStruct((BR, Tmax, INNER), jnp.float32),
                   jax.ShapeDtypeStruct((BR, Tmax, INNER), jnp.float32)],
        grid_spec=grid_spec,
        compiler_params=pltpu.CompilerParams(dimension_semantics=("parallel",)),
    )(jnp.reshape(t, (1,)).astype(jnp.int32),
      x_t, pos_row, enc_mask, k_cache, v_cache, cross_k, cross_v,
      d["ln1"], d["w_sqkv"], d["w_sattn_o"], d["ln2"], d["w_cq"], d["w_cattn_o"],
      d["ln3"], d["w_ff_in"], d["w_ff_out"], d["ln_f"], lm_w)


# ----------------------------- glue (plain JAX) ------------------------------
def _relative_position_bucket(rel_pos, bidirectional, num_buckets, max_distance):
    buckets = jnp.zeros_like(rel_pos)
    if bidirectional:
        num_buckets //= 2
        buckets = buckets + (rel_pos > 0).astype(jnp.int32) * num_buckets
        rel_pos = jnp.abs(rel_pos)
    else:
        rel_pos = -jnp.minimum(rel_pos, 0)
    max_exact = num_buckets // 2
    is_small = rel_pos < max_exact
    rp_f = jnp.maximum(rel_pos.astype(jnp.float32), 1.0)
    large = max_exact + (jnp.log(rp_f / max_exact)
                         / jnp.log(max_distance / max_exact)
                         * (num_buckets - max_exact)).astype(jnp.int32)
    large = jnp.minimum(large, num_buckets - 1)
    return buckets + jnp.where(is_small, rel_pos, large)


def position_bias(rel_emb, qlen, klen, bidirectional):
    ctx = jnp.arange(qlen)[:, None]
    mem = jnp.arange(klen)[None, :]
    bucket = _relative_position_bucket(mem - ctx, bidirectional, N_BUCKETS, MAX_DIST)
    vals = rel_emb[bucket]                         # [q, k, H]
    return vals.transpose(2, 0, 1)                 # [H, q, k]


def _generate(params, input_ids, attention_mask, rng, *, max_length, do_sample,
              top_k, num_return_sequences):
    B, S = input_ids.shape
    R = num_return_sequences
    BR = B * R
    ids = jnp.repeat(input_ids, R, axis=0)                 # == repeat_interleave
    mask = jnp.repeat(attention_mask, R, axis=0)

    emb = params["emb"]
    x_emb = emb[ids]                                                    # [BR,S,D]
    enc_pos = position_bias(params["enc_rel_bias"], S, S, True)         # [H,S,S]
    enc_mask = jnp.where(mask > 0, 0.0, NEG_INF).astype(jnp.float32).reshape(BR, 1, S)

    cross_k, cross_v = encoder_forward(params, x_emb, enc_pos, enc_mask)

    # Precompute decoder rel-pos bias table and pre-scaled/transposed lm head once.
    dec_pos = position_bias(params["dec_rel_bias"], max_length, max_length, False)
    lm_w = (emb * (D_MODEL ** -0.5)).T                                  # [D, V]

    dec = jnp.full((BR, max_length), PAD_ID, jnp.int32).at[:, 0].set(DEC_START_ID)
    k_cache = jnp.zeros((BR, max_length, INNER), jnp.float32)
    v_cache = jnp.zeros((BR, max_length, INNER), jnp.float32)
    finished = jnp.zeros((BR,), jnp.bool_)

    def body(t, carry):
        dec, k_cache, v_cache, finished, rng = carry
        cur = jax.lax.dynamic_slice_in_dim(dec, t, 1, axis=1)           # [BR,1]
        x_t = emb[cur]                                                  # [BR,1,D]
        pos_row = jax.lax.dynamic_slice_in_dim(dec_pos, t, 1, axis=1)[:, 0, :]
        logits, k_cache, v_cache = decoder_step(
            params, x_t, pos_row, enc_mask, k_cache, v_cache,
            cross_k, cross_v, lm_w, t)
        step_logits = logits[:, 0, :]                                   # [BR,V]
        if do_sample:
            topv, topi = jax.lax.top_k(step_logits, top_k)
            rng, sub = jax.random.split(rng)
            choice = jax.random.categorical(sub, topv, axis=-1)
            next_tok = jnp.take_along_axis(topi, choice[:, None], axis=-1)[:, 0]
        else:
            next_tok = jnp.argmax(step_logits, axis=-1)
        next_tok = jnp.where(finished, PAD_ID, next_tok).astype(jnp.int32)
        dec = jax.lax.dynamic_update_slice_in_dim(dec, next_tok[:, None], t + 1, axis=1)
        finished = finished | (next_tok == EOS_ID)
        return dec, k_cache, v_cache, finished, rng

    dec, *_ = jax.lax.fori_loop(0, max_length - 1, body,
                                (dec, k_cache, v_cache, finished, rng))
    return dec


_generate_jit = jax.jit(
    _generate,
    static_argnames=("max_length", "do_sample", "top_k", "num_return_sequences"))


def query_generator_forward(params, input_ids, attention_mask, *, max_length=64,
                            do_sample=True, top_k=10, num_return_sequences=5,
                            rng=None):
    """Mirrors QueryGenerator.forward: returns generated token ids of shape
    [batch * num_return_sequences, max_length]."""
    # TODO(synk): dropout / loss path omitted (generate() runs the LM in eval
    # mode); HF's early-stop-when-all-finished is replaced by fixed-length
    # decoding with post-EOS PAD masking (identical outputs).
    if rng is None:
        rng = jax.random.PRNGKey(0)
    return _generate_jit(params, input_ids, attention_mask, rng,
                         max_length=max_length, do_sample=do_sample, top_k=top_k,
                         num_return_sequences=num_return_sequences)


# ------------------------- deterministic param init --------------------------
def init_params(key):
    ks = iter(jax.random.split(key, 24))

    def w(shape, scale=0.05):
        return (jax.random.normal(next(ks), shape) * scale).astype(jnp.float32)

    ones = lambda: jnp.ones((1, D_MODEL), jnp.float32)
    return {
        "emb": w((VOCAB, D_MODEL), 1.0),
        "enc_rel_bias": w((N_BUCKETS, N_HEADS), 0.1),
        "dec_rel_bias": w((N_BUCKETS, N_HEADS), 0.1),
        "enc": {"ln1": ones(), "w_qkv": w((D_MODEL, 3 * INNER)),
                "w_attn_o": w((INNER, D_MODEL)),
                "ln2": ones(), "w_ff_in": w((D_MODEL, D_FF)),
                "w_ff_out": w((D_FF, D_MODEL)), "ln_f": ones()},
        "dec": {"ln1": ones(), "w_sqkv": w((D_MODEL, 3 * INNER)),
                "w_sattn_o": w((INNER, D_MODEL)),
                "ln2": ones(), "w_cq": w((D_MODEL, INNER)),
                "w_ckv": w((D_MODEL, 2 * INNER)), "w_cattn_o": w((INNER, D_MODEL)),
                "ln3": ones(), "w_ff_in": w((D_MODEL, D_FF)),
                "w_ff_out": w((D_FF, D_MODEL)), "ln_f": ones()},
    }


if __name__ == "__main__":
    key = jax.random.PRNGKey(0)
    pkey, ikey, skey = jax.random.split(key, 3)
    params = init_params(pkey)

    B, S = 2, 8
    input_ids = jax.random.randint(ikey, (B, S), 2, VOCAB).astype(jnp.int32)
    attention_mask = jnp.array([[1, 1, 1, 1, 1, 1, 1, 1],
                                [1, 1, 1, 1, 1, 1, 0, 0]], dtype=jnp.int32)

    out = query_generator_forward(params, input_ids, attention_mask,
                                  max_length=8, do_sample=True, top_k=10,
                                  num_return_sequences=2, rng=skey)
    out = jax.block_until_ready(out)
    assert out.shape == (B * 2, 8) and out.dtype == jnp.int32
    print("KERNEL_OK")
</pallas_src>

<mosaic_0001>
module attributes {stable_mosaic.version = 11 : i64} {
  func.func @_encoder_kernel(%arg0: i32, %arg1: memref<1x8x32xf32, #tpu.memory_space<vmem>>, %arg2: memref<4x8x8xf32, #tpu.memory_space<vmem>>, %arg3: memref<1x1x8xf32, #tpu.memory_space<vmem>>, %arg4: memref<1x32xf32, #tpu.memory_space<vmem>>, %arg5: memref<32x96xf32, #tpu.memory_space<vmem>>, %arg6: memref<32x32xf32, #tpu.memory_space<vmem>>, %arg7: memref<1x32xf32, #tpu.memory_space<vmem>>, %arg8: memref<32x64xf32, #tpu.memory_space<vmem>>, %arg9: memref<64x32xf32, #tpu.memory_space<vmem>>, %arg10: memref<1x32xf32, #tpu.memory_space<vmem>>, %arg11: memref<32x64xf32, #tpu.memory_space<vmem>>, %arg12: memref<1x8x32xf32, #tpu.memory_space<vmem>>, %arg13: memref<1x8x32xf32, #tpu.memory_space<vmem>>) attributes {dimension_semantics = [#tpu.dimension_semantics<parallel>], iteration_bounds = array<i64: 4>, scalar_prefetch = 0 : i64, scratch_operands = 0 : i64, tpu.core_type = #tpu.core_type<tc>, window_params = [{transform_indices = @transform_0, window_bounds = array<i64: 1, 8, 32>}, {pipeline_mode = #tpu.pipeline_mode<synchronous>, transform_indices = @transform_1, window_bounds = array<i64: 4, 8, 8>}, {transform_indices = @transform_2, window_bounds = array<i64: 1, 1, 8>}, {pipeline_mode = #tpu.pipeline_mode<synchronous>, transform_indices = @transform_3, window_bounds = array<i64: 1, 32>}, {pipeline_mode = #tpu.pipeline_mode<synchronous>, transform_indices = @transform_4, window_bounds = array<i64: 32, 96>}, {pipeline_mode = #tpu.pipeline_mode<synchronous>, transform_indices = @transform_5, window_bounds = array<i64: 32, 32>}, {pipeline_mode = #tpu.pipeline_mode<synchronous>, transform_indices = @transform_6, window_bounds = array<i64: 1, 32>}, {pipeline_mode = #tpu.pipeline_mode<synchronous>, transform_indices = @transform_7, window_bounds = array<i64: 32, 64>}, {pipeline_mode = #tpu.pipeline_mode<synchronous>, transform_indices = @transform_8, window_bounds = array<i64: 64, 32>}, {pipeline_mode = #tpu.pipeline_mode<synchronous>, transform_indices = @transform_9, window_bounds = array<i64: 1, 32>}, {pipeline_mode = #tpu.pipeline_mode<synchronous>, transform_indices = @transform_10, window_bounds = array<i64: 32, 64>}, {transform_indices = @transform_11, window_bounds = array<i64: 1, 8, 32>}, {transform_indices = @transform_12, window_bounds = array<i64: 1, 8, 32>}]} {
    %c0 = arith.constant 0 : index
    %c0_0 = arith.constant 0 : index
    %c0_1 = arith.constant 0 : index
    %0 = vector.load %arg1[%c0, %c0_0, %c0_1] : memref<1x8x32xf32, #tpu.memory_space<vmem>>, vector<1x8x32xf32>
    %1 = vector.shape_cast %0 : vector<1x8x32xf32> to vector<8x32xf32>
    %c0_2 = arith.constant 0 : index
    %c0_3 = arith.constant 0 : index
    %c0_4 = arith.constant 0 : index
    %2 = vector.load %arg3[%c0_2, %c0_3, %c0_4] : memref<1x1x8xf32, #tpu.memory_space<vmem>>, vector<1x1x8xf32>
    %3 = vector.shape_cast %2 : vector<1x1x8xf32> to vector<1x8xf32>
    %c0_5 = arith.constant 0 : index
    %c0_6 = arith.constant 0 : index
    %c0_7 = arith.constant 0 : index
    %4 = vector.load %arg2[%c0_5, %c0_6, %c0_7] : memref<4x8x8xf32, #tpu.memory_space<vmem>>, vector<4x8x8xf32>
    %c0_8 = arith.constant 0 : index
    %c0_9 = arith.constant 0 : index
    %5 = vector.load %arg4[%c0_8, %c0_9] : memref<1x32xf32, #tpu.memory_space<vmem>>, vector<1x32xf32>
    %6 = arith.mulf %1, %1 : vector<8x32xf32>
    %cst = arith.constant dense<0.000000e+00> : vector<8xf32>
    %7 = vector.multi_reduction <add>, %6, %cst [1] : vector<8x32xf32> to vector<8xf32>
    %8 = vector.shape_cast %7 : vector<8xf32> to vector<8x1xf32>
    %cst_10 = arith.constant 3.200000e+01 : f32
    %9 = vector.broadcast %cst_10 : f32 to vector<8x1xf32>
    %10 = arith.divf %8, %9 : vector<8x1xf32>
    %cst_11 = arith.constant 9.99999997E-7 : f32
    %11 = vector.broadcast %cst_11 : f32 to vector<8x1xf32>
    %12 = arith.addf %10, %11 : vector<8x1xf32>
    %13 = math.rsqrt %12 : vector<8x1xf32>
    %14 = vector.broadcast %13 : vector<8x1xf32> to vector<8x32xf32>
    %15 = arith.mulf %1, %14 : vector<8x32xf32>
    %16 = vector.broadcast %5 : vector<1x32xf32> to vector<8x32xf32>
    %17 = arith.mulf %15, %16 : vector<8x32xf32>
    %c0_12 = arith.constant 0 : index
    %c0_13 = arith.constant 0 : index
    %18 = vector.load %arg5[%c0_12, %c0_13] : memref<32x96xf32, #tpu.memory_space<vmem>>, vector<32x96xf32>
    %19 = arith.truncf %17 : vector<8x32xf32> to vector<8x32xbf16>
    %20 = arith.truncf %18 : vector<32x96xf32> to vector<32x96xbf16>
    %cst_14 = arith.constant dense<0.000000e+00> : vector<8x96xf32>
    %21 = tpu.matmul %19, %20, %cst_14 {dimension_numbers = #tpu.dot_dimension_numbers<[1], [0], [0], [1], [0, 0, 1, 1], [], []>} : vector<8x32xbf16>, vector<32x96xbf16>, vector<8x96xf32> -> vector<8x96xf32>
    %22 = vector.extract_strided_slice %21 {offsets = [0, 0], sizes = [8, 32], strides = [1, 1]} : vector<8x96xf32> to vector<8x32xf32>
    %23 = vector.extract_strided_slice %21 {offsets = [0, 32], sizes = [8, 32], strides = [1, 1]} : vector<8x96xf32> to vector<8x32xf32>
    %24 = vector.extract_strided_slice %21 {offsets = [0, 64], sizes = [8, 32], strides = [1, 1]} : vector<8x96xf32> to vector<8x32xf32>
    %c0_15 = arith.constant 0 : index
    %c0_16 = arith.constant 0 : index
    %25 = vector.load %arg6[%c0_15, %c0_16] : memref<32x32xf32, #tpu.memory_space<vmem>>, vector<32x32xf32>
    %cst_17 = arith.constant 0.000000e+00 : f32
    %26 = vector.broadcast %cst_17 : f32 to vector<8x32xf32>
    %27 = vector.extract_strided_slice %22 {offsets = [0, 0], sizes = [8, 8], strides = [1, 1]} : vector<8x32xf32> to vector<8x8xf32>
    %28 = vector.extract_strided_slice %23 {offsets = [0, 0], sizes = [8, 8], strides = [1, 1]} : vector<8x32xf32> to vector<8x8xf32>
    %29 = arith.truncf %27 : vector<8x8xf32> to vector<8x8xbf16>
    %30 = arith.truncf %28 : vector<8x8xf32> to vector<8x8xbf16>
    %cst_18 = arith.constant dense<0.000000e+00> : vector<8x8xf32>
    %31 = tpu.matmul %29, %30, %cst_18 {dimension_numbers = #tpu.dot_dimension_numbers<[1], [1], [0], [0], [0, 0, 1, 0], [], []>} : vector<8x8xbf16>, vector<8x8xbf16>, vector<8x8xf32> -> vector<8x8xf32>
    %32 = vector.extract_strided_slice %4 {offsets = [0, 0, 0], sizes = [1, 8, 8], strides = [1, 1, 1]} : vector<4x8x8xf32> to vector<1x8x8xf32>
    %33 = vector.shape_cast %32 : vector<1x8x8xf32> to vector<8x8xf32>
    %34 = arith.addf %31, %33 : vector<8x8xf32>
    %35 = vector.broadcast %3 : vector<1x8xf32> to vector<8x8xf32>
    %36 = arith.addf %34, %35 : vector<8x8xf32>
    %cst_19 = arith.constant dense<0xFF800000> : vector<8xf32>
    %37 = vector.multi_reduction <maximumf>, %36, %cst_19 [1] : vector<8x8xf32> to vector<8xf32>
    %38 = vector.shape_cast %37 : vector<8xf32> to vector<8x1xf32>
    %39 = vector.broadcast %38 : vector<8x1xf32> to vector<8x8xf32>
    %40 = arith.subf %36, %39 : vector<8x8xf32>
    %41 = math.exp %40 : vector<8x8xf32>
    %cst_20 = arith.constant dense<0.000000e+00> : vector<8xf32>
    %42 = vector.multi_reduction <add>, %41, %cst_20 [1] : vector<8x8xf32> to vector<8xf32>
    %43 = vector.shape_cast %42 : vector<8xf32> to vector<8x1xf32>
    %44 = tpu.reciprocal %43 : vector<8x1xf32> -> vector<8x1xf32>
    %45 = vector.broadcast %44 : vector<8x1xf32> to vector<8x8xf32>
    %46 = arith.mulf %41, %45 : vector<8x8xf32>
    %47 = vector.extract_strided_slice %24 {offsets = [0, 0], sizes = [8, 8], strides = [1, 1]} : vector<8x32xf32> to vector<8x8xf32>
    %48 = arith.truncf %46 : vector<8x8xf32> to vector<8x8xbf16>
    %49 = arith.truncf %47 : vector<8x8xf32> to vector<8x8xbf16>
    %cst_21 = arith.constant dense<0.000000e+00> : vector<8x8xf32>
    %50 = tpu.matmul %48, %49, %cst_21 {dimension_numbers = #tpu.dot_dimension_numbers<[1], [0], [0], [1], [0, 0, 1, 1], [], []>} : vector<8x8xbf16>, vector<8x8xbf16>, vector<8x8xf32> -> vector<8x8xf32>
    %51 = vector.extract_strided_slice %25 {offsets = [0, 0], sizes = [8, 32], strides = [1, 1]} : vector<32x32xf32> to vector<8x32xf32>
    %52 = arith.truncf %50 : vector<8x8xf32> to vector<8x8xbf16>
    %53 = arith.truncf %51 : vector<8x32xf32> to vector<8x32xbf16>
    %cst_22 = arith.constant dense<0.000000e+00> : vector<8x32xf32>
    %54 = tpu.matmul %52, %53, %cst_22 {dimension_numbers = #tpu.dot_dimension_numbers<[1], [0], [0], [1], [0, 0, 1, 1], [], []>} : vector<8x8xbf16>, vector<8x32xbf16>, vector<8x32xf32> -> vector<8x32xf32>
    %55 = arith.addf %26, %54 : vector<8x32xf32>
    %56 = vector.extract_strided_slice %22 {offsets = [0, 8], sizes = [8, 8], strides = [1, 1]} : vector<8x32xf32> to vector<8x8xf32>
    %57 = vector.extract_strided_slice %23 {offsets = [0, 8], sizes = [8, 8], strides = [1, 1]} : vector<8x32xf32> to vector<8x8xf32>
    %58 = arith.truncf %56 : vector<8x8xf32> to vector<8x8xbf16>
    %59 = arith.truncf %57 : vector<8x8xf32> to vector<8x8xbf16>
    %cst_23 = arith.constant dense<0.000000e+00> : vector<8x8xf32>
    %60 = tpu.matmul %58, %59, %cst_23 {dimension_numbers = #tpu.dot_dimension_numbers<[1], [1], [0], [0], [0, 0, 1, 0], [], []>} : vector<8x8xbf16>, vector<8x8xbf16>, vector<8x8xf32> -> vector<8x8xf32>
    %61 = vector.extract_strided_slice %4 {offsets = [1, 0, 0], sizes = [1, 8, 8], strides = [1, 1, 1]} : vector<4x8x8xf32> to vector<1x8x8xf32>
    %62 = vector.shape_cast %61 : vector<1x8x8xf32> to vector<8x8xf32>
    %63 = arith.addf %60, %62 : vector<8x8xf32>
    %64 = vector.broadcast %3 : vector<1x8xf32> to vector<8x8xf32>
    %65 = arith.addf %63, %64 : vector<8x8xf32>
    %cst_24 = arith.constant dense<0xFF800000> : vector<8xf32>
    %66 = vector.multi_reduction <maximumf>, %65, %cst_24 [1] : vector<8x8xf32> to vector<8xf32>
    %67 = vector.shape_cast %66 : vector<8xf32> to vector<8x1xf32>
    %68 = vector.broadcast %67 : vector<8x1xf32> to vector<8x8xf32>
    %69 = arith.subf %65, %68 : vector<8x8xf32>
    %70 = math.exp %69 : vector<8x8xf32>
    %cst_25 = arith.constant dense<0.000000e+00> : vector<8xf32>
    %71 = vector.multi_reduction <add>, %70, %cst_25 [1] : vector<8x8xf32> to vector<8xf32>
    %72 = vector.shape_cast %71 : vector<8xf32> to vector<8x1xf32>
    %73 = tpu.reciprocal %72 : vector<8x1xf32> -> vector<8x1xf32>
    %74 = vector.broadcast %73 : vector<8x1xf32> to vector<8x8xf32>
    %75 = arith.mulf %70, %74 : vector<8x8xf32>
    %76 = vector.extract_strided_slice %24 {offsets = [0, 8], sizes = [8, 8], strides = [1, 1]} : vector<8x32xf32> to vector<8x8xf32>
    %77 = arith.truncf %75 : vector<8x8xf32> to vector<8x8xbf16>
    %78 = arith.truncf %76 : vector<8x8xf32> to vector<8x8xbf16>
    %cst_26 = arith.constant dense<0.000000e+00> : vector<8x8xf32>
    %79 = tpu.matmul %77, %78, %cst_26 {dimension_numbers = #tpu.dot_dimension_numbers<[1], [0], [0], [1], [0, 0, 1, 1], [], []>} : vector<8x8xbf16>, vector<8x8xbf16>, vector<8x8xf32> -> vector<8x8xf32>
    %80 = vector.extract_strided_slice %25 {offsets = [8, 0], sizes = [8, 32], strides = [1, 1]} : vector<32x32xf32> to vector<8x32xf32>
    %81 = arith.truncf %79 : vector<8x8xf32> to vector<8x8xbf16>
    %82 = arith.truncf %80 : vector<8x32xf32> to vector<8x32xbf16>
    %cst_27 = arith.constant dense<0.000000e+00> : vector<8x32xf32>
    %83 = tpu.matmul %81, %82, %cst_27 {dimension_numbers = #tpu.dot_dimension_numbers<[1], [0], [0], [1], [0, 0, 1, 1], [], []>} : vector<8x8xbf16>, vector<8x32xbf16>, vector<8x32xf32> -> vector<8x32xf32>
    %84 = arith.addf %55, %83 : vector<8x32xf32>
    %85 = vector.extract_strided_slice %22 {offsets = [0, 16], sizes = [8, 8], strides = [1, 1]} : vector<8x32xf32> to vector<8x8xf32>
    %86 = vector.extract_strided_slice %23 {offsets = [0, 16], sizes = [8, 8], strides = [1, 1]} : vector<8x32xf32> to vector<8x8xf32>
    %87 = arith.truncf %85 : vector<8x8xf32> to vector<8x8xbf16>
    %88 = arith.truncf %86 : vector<8x8xf32> to vector<8x8xbf16>
    %cst_28 = arith.constant dense<0.000000e+00> : vector<8x8xf32>
    %89 = tpu.matmul %87, %88, %cst_28 {dimension_numbers = #tpu.dot_dimension_numbers<[1], [1], [0], [0], [0, 0, 1, 0], [], []>} : vector<8x8xbf16>, vector<8x8xbf16>, vector<8x8xf32> -> vector<8x8xf32>
    %90 = vector.extract_strided_slice %4 {offsets = [2, 0, 0], sizes = [1, 8, 8], strides = [1, 1, 1]} : vector<4x8x8xf32> to vector<1x8x8xf32>
    %91 = vector.shape_cast %90 : vector<1x8x8xf32> to vector<8x8xf32>
    %92 = arith.addf %89, %91 : vector<8x8xf32>
    %93 = vector.broadcast %3 : vector<1x8xf32> to vector<8x8xf32>
    %94 = arith.addf %92, %93 : vector<8x8xf32>
    %cst_29 = arith.constant dense<0xFF800000> : vector<8xf32>
    %95 = vector.multi_reduction <maximumf>, %94, %cst_29 [1] : vector<8x8xf32> to vector<8xf32>
    %96 = vector.shape_cast %95 : vector<8xf32> to vector<8x1xf32>
    %97 = vector.broadcast %96 : vector<8x1xf32> to vector<8x8xf32>
    %98 = arith.subf %94, %97 : vector<8x8xf32>
    %99 = math.exp %98 : vector<8x8xf32>
    %cst_30 = arith.constant dense<0.000000e+00> : vector<8xf32>
    %100 = vector.multi_reduction <add>, %99, %cst_30 [1] : vector<8x8xf32> to vector<8xf32>
    %101 = vector.shape_cast %100 : vector<8xf32> to vector<8x1xf32>
    %102 = tpu.reciprocal %101 : vector<8x1xf32> -> vector<8x1xf32>
    %103 = vector.broadcast %102 : vector<8x1xf32> to vector<8x8xf32>
    %104 = arith.mulf %99, %103 : vector<8x8xf32>
    %105 = vector.extract_strided_slice %24 {offsets = [0, 16], sizes = [8, 8], strides = [1, 1]} : vector<8x32xf32> to vector<8x8xf32>
    %106 = arith.truncf %104 : vector<8x8xf32> to vector<8x8xbf16>
    %107 = arith.truncf %105 : vector<8x8xf32> to vector<8x8xbf16>
    %cst_31 = arith.constant dense<0.000000e+00> : vector<8x8xf32>
    %108 = tpu.matmul %106, %107, %cst_31 {dimension_numbers = #tpu.dot_dimension_numbers<[1], [0], [0], [1], [0, 0, 1, 1], [], []>} : vector<8x8xbf16>, vector<8x8xbf16>, vector<8x8xf32> -> vector<8x8xf32>
    %109 = vector.extract_strided_slice %25 {offsets = [16, 0], sizes = [8, 32], strides = [1, 1]} : vector<32x32xf32> to vector<8x32xf32>
    %110 = arith.truncf %108 : vector<8x8xf32> to vector<8x8xbf16>
    %111 = arith.truncf %109 : vector<8x32xf32> to vector<8x32xbf16>
    %cst_32 = arith.constant dense<0.000000e+00> : vector<8x32xf32>
    %112 = tpu.matmul %110, %111, %cst_32 {dimension_numbers = #tpu.dot_dimension_numbers<[1], [0], [0], [1], [0, 0, 1, 1], [], []>} : vector<8x8xbf16>, vector<8x32xbf16>, vector<8x32xf32> -> vector<8x32xf32>
    %113 = arith.addf %84, %112 : vector<8x32xf32>
    %114 = vector.extract_strided_slice %22 {offsets = [0, 24], sizes = [8, 8], strides = [1, 1]} : vector<8x32xf32> to vector<8x8xf32>
    %115 = vector.extract_strided_slice %23 {offsets = [0, 24], sizes = [8, 8], strides = [1, 1]} : vector<8x32xf32> to vector<8x8xf32>
    %116 = arith.truncf %114 : vector<8x8xf32> to vector<8x8xbf16>
    %117 = arith.truncf %115 : vector<8x8xf32> to vector<8x8xbf16>
    %cst_33 = arith.constant dense<0.000000e+00> : vector<8x8xf32>
    %118 = tpu.matmul %116, %117, %cst_33 {dimension_numbers = #tpu.dot_dimension_numbers<[1], [1], [0], [0], [0, 0, 1, 0], [], []>} : vector<8x8xbf16>, vector<8x8xbf16>, vector<8x8xf32> -> vector<8x8xf32>
    %119 = vector.extract_strided_slice %4 {offsets = [3, 0, 0], sizes = [1, 8, 8], strides = [1, 1, 1]} : vector<4x8x8xf32> to vector<1x8x8xf32>
    %120 = vector.shape_cast %119 : vector<1x8x8xf32> to vector<8x8xf32>
    %121 = arith.addf %118, %120 : vector<8x8xf32>
    %122 = vector.broadcast %3 : vector<1x8xf32> to vector<8x8xf32>
    %123 = arith.addf %121, %122 : vector<8x8xf32>
    %cst_34 = arith.constant dense<0xFF800000> : vector<8xf32>
    %124 = vector.multi_reduction <maximumf>, %123, %cst_34 [1] : vector<8x8xf32> to vector<8xf32>
    %125 = vector.shape_cast %124 : vector<8xf32> to vector<8x1xf32>
    %126 = vector.broadcast %125 : vector<8x1xf32> to vector<8x8xf32>
    %127 = arith.subf %123, %126 : vector<8x8xf32>
    %128 = math.exp %127 : vector<8x8xf32>
    %cst_35 = arith.constant dense<0.000000e+00> : vector<8xf32>
    %129 = vector.multi_reduction <add>, %128, %cst_35 [1] : vector<8x8xf32> to vector<8xf32>
    %130 = vector.shape_cast %129 : vector<8xf32> to vector<8x1xf32>
    %131 = tpu.reciprocal %130 : vector<8x1xf32> -> vector<8x1xf32>
    %132 = vector.broadcast %131 : vector<8x1xf32> to vector<8x8xf32>
    %133 = arith.mulf %128, %132 : vector<8x8xf32>
    %134 = vector.extract_strided_slice %24 {offsets = [0, 24], sizes = [8, 8], strides = [1, 1]} : vector<8x32xf32> to vector<8x8xf32>
    %135 = arith.truncf %133 : vector<8x8xf32> to vector<8x8xbf16>
    %136 = arith.truncf %134 : vector<8x8xf32> to vector<8x8xbf16>
    %cst_36 = arith.constant dense<0.000000e+00> : vector<8x8xf32>
    %137 = tpu.matmul %135, %136, %cst_36 {dimension_numbers = #tpu.dot_dimension_numbers<[1], [0], [0], [1], [0, 0, 1, 1], [], []>} : vector<8x8xbf16>, vector<8x8xbf16>, vector<8x8xf32> -> vector<8x8xf32>
    %138 = vector.extract_strided_slice %25 {offsets = [24, 0], sizes = [8, 32], strides = [1, 1]} : vector<32x32xf32> to vector<8x32xf32>
    %139 = arith.truncf %137 : vector<8x8xf32> to vector<8x8xbf16>
    %140 = arith.truncf %138 : vector<8x32xf32> to vector<8x32xbf16>
    %cst_37 = arith.constant dense<0.000000e+00> : vector<8x32xf32>
    %141 = tpu.matmul %139, %140, %cst_37 {dimension_numbers = #tpu.dot_dimension_numbers<[1], [0], [0], [1], [0, 0, 1, 1], [], []>} : vector<8x8xbf16>, vector<8x32xbf16>, vector<8x32xf32> -> vector<8x32xf32>
    %142 = arith.addf %113, %141 : vector<8x32xf32>
    %143 = arith.addf %1, %142 : vector<8x32xf32>
    %c0_38 = arith.constant 0 : index
    %c0_39 = arith.constant 0 : index
    %144 = vector.load %arg7[%c0_38, %c0_39] : memref<1x32xf32, #tpu.memory_space<vmem>>, vector<1x32xf32>
    %145 = arith.mulf %143, %143 : vector<8x32xf32>
    %cst_40 = arith.constant dense<0.000000e+00> : vector<8xf32>
    %146 = vector.multi_reduction <add>, %145, %cst_40 [1] : vector<8x32xf32> to vector<8xf32>
    %147 = vector.shape_cast %146 : vector<8xf32> to vector<8x1xf32>
    %cst_41 = arith.constant 3.200000e+01 : f32
    %148 = vector.broadcast %cst_41 : f32 to vector<8x1xf32>
    %149 = arith.divf %147, %148 : vector<8x1xf32>
    %cst_42 = arith.constant 9.99999997E-7 : f32
    %150 = vector.broadcast %cst_42 : f32 to vector<8x1xf32>
    %151 = arith.addf %149, %150 : vector<8x1xf32>
    %152 = math.rsqrt %151 : vector<8x1xf32>
    %153 = vector.broadcast %152 : vector<8x1xf32> to vector<8x32xf32>
    %154 = arith.mulf %143, %153 : vector<8x32xf32>
    %155 = vector.broadcast %144 : vector<1x32xf32> to vector<8x32xf32>
    %156 = arith.mulf %154, %155 : vector<8x32xf32>
    %c0_43 = arith.constant 0 : index
    %c0_44 = arith.constant 0 : index
    %157 = vector.load %arg8[%c0_43, %c0_44] : memref<32x64xf32, #tpu.memory_space<vmem>>, vector<32x64xf32>
    %158 = arith.truncf %156 : vector<8x32xf32> to vector<8x32xbf16>
    %159 = arith.truncf %157 : vector<32x64xf32> to vector<32x64xbf16>
    %cst_45 = arith.constant dense<0.000000e+00> : vector<8x64xf32>
    %160 = tpu.matmul %158, %159, %cst_45 {dimension_numbers = #tpu.dot_dimension_numbers<[1], [0], [0], [1], [0, 0, 1, 1], [], []>} : vector<8x32xbf16>, vector<32x64xbf16>, vector<8x64xf32> -> vector<8x64xf32>
    %cst_46 = arith.constant 0.000000e+00 : f32
    %161 = vector.broadcast %cst_46 : f32 to vector<8x64xf32>
    %162 = arith.maximumf %160, %161 : vector<8x64xf32>
    %c0_47 = arith.constant 0 : index
    %c0_48 = arith.constant 0 : index
    %163 = vector.load %arg9[%c0_47, %c0_48] : memref<64x32xf32, #tpu.memory_space<vmem>>, vector<64x32xf32>
    %164 = arith.truncf %162 : vector<8x64xf32> to vector<8x64xbf16>
    %165 = arith.truncf %163 : vector<64x32xf32> to vector<64x32xbf16>
    %cst_49 = arith.constant dense<0.000000e+00> : vector<8x32xf32>
    %166 = tpu.matmul %164, %165, %cst_49 {dimension_numbers = #tpu.dot_dimension_numbers<[1], [0], [0], [1], [0, 0, 1, 1], [], []>} : vector<8x64xbf16>, vector<64x32xbf16>, vector<8x32xf32> -> vector<8x32xf32>
    %167 = arith.addf %143, %166 : vector<8x32xf32>
    %c0_50 = arith.constant 0 : index
    %c0_51 = arith.constant 0 : index
    %168 = vector.load %arg10[%c0_50, %c0_51] : memref<1x32xf32, #tpu.memory_space<vmem>>, vector<1x32xf32>
    %169 = arith.mulf %167, %167 : vector<8x32xf32>
    %cst_52 = arith.constant dense<0.000000e+00> : vector<8xf32>
    %170 = vector.multi_reduction <add>, %169, %cst_52 [1] : vector<8x32xf32> to vector<8xf32>
    %171 = vector.shape_cast %170 : vector<8xf32> to vector<8x1xf32>
    %cst_53 = arith.constant 3.200000e+01 : f32
    %172 = vector.broadcast %cst_53 : f32 to vector<8x1xf32>
    %173 = arith.divf %171, %172 : vector<8x1xf32>
    %cst_54 = arith.constant 9.99999997E-7 : f32
    %174 = vector.broadcast %cst_54 : f32 to vector<8x1xf32>
    %175 = arith.addf %173, %174 : vector<8x1xf32>
    %176 = math.rsqrt %175 : vector<8x1xf32>
    %177 = vector.broadcast %176 : vector<8x1xf32> to vector<8x32xf32>
    %178 = arith.mulf %167, %177 : vector<8x32xf32>
    %179 = vector.broadcast %168 : vector<1x32xf32> to vector<8x32xf32>
    %180 = arith.mulf %178, %179 : vector<8x32xf32>
    %c0_55 = arith.constant 0 : index
    %c0_56 = arith.constant 0 : index
    %181 = vector.load %arg11[%c0_55, %c0_56] : memref<32x64xf32, #tpu.memory_space<vmem>>, vector<32x64xf32>
    %182 = arith.truncf %180 : vector<8x32xf32> to vector<8x32xbf16>
    %183 = arith.truncf %181 : vector<32x64xf32> to vector<32x64xbf16>
    %cst_57 = arith.constant dense<0.000000e+00> : vector<8x64xf32>
    %184 = tpu.matmul %182, %183, %cst_57 {dimension_numbers = #tpu.dot_dimension_numbers<[1], [0], [0], [1], [0, 0, 1, 1], [], []>} : vector<8x32xbf16>, vector<32x64xbf16>, vector<8x64xf32> -> vector<8x64xf32>
    %185 = vector.extract_strided_slice %184 {offsets = [0, 0], sizes = [8, 32], strides = [1, 1]} : vector<8x64xf32> to vector<8x32xf32>
    %c0_58 = arith.constant 0 : index
    %c0_59 = arith.constant 0 : index
    %c0_60 = arith.constant 0 : index
    %186 = vector.load %arg12[%c0_58, %c0_59, %c0_60] : memref<1x8x32xf32, #tpu.memory_space<vmem>>, vector<1x8x32xf32>
    %187 = vector.shape_cast %186 : vector<1x8x32xf32> to vector<8x32xf32>
    %188 = vector.shape_cast %185 : vector<8x32xf32> to vector<1x8x32xf32>
    tpu.vector_store %arg12[%c0_58, %c0_59, %c0_60], %188 {strides = array<i32>} : memref<1x8x32xf32, #tpu.memory_space<vmem>>, vector<1x8x32xf32>,
    %189 = vector.extract_strided_slice %184 {offsets = [0, 32], sizes = [8, 32], strides = [1, 1]} : vector<8x64xf32> to vector<8x32xf32>
    %c0_61 = arith.constant 0 : index
    %c0_62 = arith.constant 0 : index
    %c0_63 = arith.constant 0 : index
    %190 = vector.load %arg13[%c0_61, %c0_62, %c0_63] : memref<1x8x32xf32, #tpu.memory_space<vmem>>, vector<1x8x32xf32>
    %191 = vector.shape_cast %190 : vector<1x8x32xf32> to vector<8x32xf32>
    %192 = vector.shape_cast %189 : vector<8x32xf32> to vector<1x8x32xf32>
    tpu.vector_store %arg13[%c0_61, %c0_62, %c0_63], %192 {strides = array<i32>} : memref<1x8x32xf32, #tpu.memory_space<vmem>>, vector<1x8x32xf32>,
    return
  }
  func.func @transform_0(%arg0: i32) -> (i32, i32, i32) {
    %c0_i32 = arith.constant 0 : i32
    %c0_i32_0 = arith.constant 0 : i32
    %c0_i32_1 = arith.constant 0 : i32
    return %arg0, %c0_i32, %c0_i32_0 : i32, i32, i32
  }
  func.func @transform_1(%arg0: i32) -> (i32, i32, i32) {
    %c0_i32 = arith.constant 0 : i32
    %c0_i32_0 = arith.constant 0 : i32
    %c0_i32_1 = arith.constant 0 : i32
    %c0_i32_2 = arith.constant 0 : i32
    return %c0_i32, %c0_i32_0, %c0_i32_1 : i32, i32, i32
  }
  func.func @transform_2(%arg0: i32) -> (i32, i32, i32) {
    %c0_i32 = arith.constant 0 : i32
    %c0_i32_0 = arith.constant 0 : i32
    %c0_i32_1 = arith.constant 0 : i32
    return %arg0, %c0_i32, %c0_i32_0 : i32, i32, i32
  }
  func.func @transform_3(%arg0: i32) -> (i32, i32) {
    %c0_i32 = arith.constant 0 : i32
    %c0_i32_0 = arith.constant 0 : i32
    %c0_i32_1 = arith.constant 0 : i32
    return %c0_i32, %c0_i32_0 : i32, i32
  }
  func.func @transform_4(%arg0: i32) -> (i32, i32) {
    %c0_i32 = arith.constant 0 : i32
    %c0_i32_0 = arith.constant 0 : i32
    %c0_i32_1 = arith.constant 0 : i32
    return %c0_i32, %c0_i32_0 : i32, i32
  }
  func.func @transform_5(%arg0: i32) -> (i32, i32) {
    %c0_i32 = arith.constant 0 : i32
    %c0_i32_0 = arith.constant 0 : i32
    %c0_i32_1 = arith.constant 0 : i32
    return %c0_i32, %c0_i32_0 : i32, i32
  }
  func.func @transform_6(%arg0: i32) -> (i32, i32) {
    %c0_i32 = arith.constant 0 : i32
    %c0_i32_0 = arith.constant 0 : i32
    %c0_i32_1 = arith.constant 0 : i32
    return %c0_i32, %c0_i32_0 : i32, i32
  }
  func.func @transform_7(%arg0: i32) -> (i32, i32) {
    %c0_i32 = arith.constant 0 : i32
    %c0_i32_0 = arith.constant 0 : i32
    %c0_i32_1 = arith.constant 0 : i32
    return %c0_i32, %c0_i32_0 : i32, i32
  }
  func.func @transform_8(%arg0: i32) -> (i32, i32) {
    %c0_i32 = arith.constant 0 : i32
    %c0_i32_0 = arith.constant 0 : i32
    %c0_i32_1 = arith.constant 0 : i32
    return %c0_i32, %c0_i32_0 : i32, i32
  }
  func.func @transform_9(%arg0: i32) -> (i32, i32) {
    %c0_i32 = arith.constant 0 : i32
    %c0_i32_0 = arith.constant 0 : i32
    %c0_i32_1 = arith.constant 0 : i32
    return %c0_i32, %c0_i32_0 : i32, i32
  }
  func.func @transform_10(%arg0: i32) -> (i32, i32) {
    %c0_i32 = arith.constant 0 : i32
    %c0_i32_0 = arith.constant 0 : i32
    %c0_i32_1 = arith.constant 0 : i32
    return %c0_i32, %c0_i32_0 : i32, i32
  }
  func.func @transform_11(%arg0: i32) -> (i32, i32, i32) {
    %c0_i32 = arith.constant 0 : i32
    %c0_i32_0 = arith.constant 0 : i32
    %c0_i32_1 = arith.constant 0 : i32
    return %arg0, %c0_i32, %c0_i32_0 : i32, i32, i32
  }
  func.func @transform_12(%arg0: i32) -> (i32, i32, i32) {
    %c0_i32 = arith.constant 0 : i32
    %c0_i32_0 = arith.constant 0 : i32
    %c0_i32_1 = arith.constant 0 : i32
    return %arg0, %c0_i32, %c0_i32_0 : i32, i32, i32
  }
}

module attributes {stable_mosaic.version = 11 : i64} {
  func.func @_decoder_step_kernel(%arg0: i32, %arg1: memref<1xi32, #tpu.memory_space<smem>>, %arg2: memref<1x1x32xf32, #tpu.memory_space<vmem>>, %arg3: memref<4x8xf32, #tpu.memory_space<vmem>>, %arg4: memref<1x1x8xf32, #tpu.memory_space<vmem>>, %arg5: memref<1x8x32xf32, #tpu.memory_space<vmem>>, %arg6: memref<1x8x32xf32, #tpu.memory_space<vmem>>, %arg7: memref<1x8x32xf32, #tpu.memory_space<vmem>>, %arg8: memref<1x8x32xf32, #tpu.memory_space<vmem>>, %arg9: memref<1x32xf32, #tpu.memory_space<vmem>>, %arg10: memref<32x96xf32, #tpu.memory_space<vmem>>, %arg11: memref<32x32xf32, #tpu.memory_space<vmem>>, %arg12: memref<1x32xf32, #tpu.memory_space<vmem>>, %arg13: memref<32x32xf32, #tpu.memory_space<vmem>>, %arg14: memref<32x32xf32, #tpu.memory_space<vmem>>, %arg15: memref<1x32xf32, #tpu.memory_space<vmem>>, %arg16: memref<32x64xf32, #tpu.memory_space<vmem>>, %arg17: memref<64x32xf32, #tpu.memory_space<vmem>>, %arg18: memref<1x32xf32, #tpu.memory_space<vmem>>, %arg19: memref<32x128xf32, #tpu.memory_space<vmem>>, %arg20: memref<1x1x128xf32, #tpu.memory_space<vmem>>, %arg21: memref<1x8x32xf32, #tpu.memory_space<vmem>>, %arg22: memref<1x8x32xf32, #tpu.memory_space<vmem>>) attributes {dimension_semantics = [#tpu.dimension_semantics<parallel>], iteration_bounds = array<i64: 4>, scalar_prefetch = 1 : i64, scratch_operands = 0 : i64, tpu.core_type = #tpu.core_type<tc>, window_params = [{transform_indices = @transform_0, window_bounds = array<i64: 1, 1, 32>}, {pipeline_mode = #tpu.pipeline_mode<synchronous>, transform_indices = @transform_1, window_bounds = array<i64: 4, 8>}, {transform_indices = @transform_2, window_bounds = array<i64: 1, 1, 8>}, {transform_indices = @transform_3, window_bounds = array<i64: 1, 8, 32>}, {transform_indices = @transform_4, window_bounds = array<i64: 1, 8, 32>}, {transform_indices = @transform_5, window_bounds = array<i64: 1, 8, 32>}, {transform_indices = @transform_6, window_bounds = array<i64: 1, 8, 32>}, {pipeline_mode = #tpu.pipeline_mode<synchronous>, transform_indices = @transform_7, window_bounds = array<i64: 1, 32>}, {pipeline_mode = #tpu.pipeline_mode<synchronous>, transform_indices = @transform_8, window_bounds = array<i64: 32, 96>}, {pipeline_mode = #tpu.pipeline_mode<synchronous>, transform_indices = @transform_9, window_bounds = array<i64: 32, 32>}, {pipeline_mode = #tpu.pipeline_mode<synchronous>, transform_indices = @transform_10, window_bounds = array<i64: 1, 32>}, {pipeline_mode = #tpu.pipeline_mode<synchronous>, transform_indices = @transform_11, window_bounds = array<i64: 32, 32>}, {pipeline_mode = #tpu.pipeline_mode<synchronous>, transform_indices = @transform_12, window_bounds = array<i64: 32, 32>}, {pipeline_mode = #tpu.pipeline_mode<synchronous>, transform_indices = @transform_13, window_bounds = array<i64: 1, 32>}, {pipeline_mode = #tpu.pipeline_mode<synchronous>, transform_indices = @transform_14, window_bounds = array<i64: 32, 64>}, {pipeline_mode = #tpu.pipeline_mode<synchronous>, transform_indices = @transform_15, window_bounds = array<i64: 64, 32>}, {pipeline_mode = #tpu.pipeline_mode<synchronous>, transform_indices = @transform_16, window_bounds = array<i64: 1, 32>}, {pipeline_mode = #tpu.pipeline_mode<synchronous>, transform_indices = @transform_17, window_bounds = array<i64: 32, 128>}, {transform_indices = @transform_18, window_bounds = array<i64: 1, 1, 128>}, {transform_indices = @transform_19, window_bounds = array<i64: 1, 8, 32>}, {transform_indices = @transform_20, window_bounds = array<i64: 1, 8, 32>}]} {
    %c0 = arith.constant 0 : index
    %0 = memref.load %arg1[%c0] : memref<1xi32, #tpu.memory_space<smem>>
    %c0_0 = arith.constant 0 : index
    %c0_1 = arith.constant 0 : index
    %c0_2 = arith.constant 0 : index
    %1 = vector.load %arg2[%c0_0, %c0_1, %c0_2] : memref<1x1x32xf32, #tpu.memory_space<vmem>>, vector<1x1x32xf32>
    %2 = vector.shape_cast %1 : vector<1x1x32xf32> to vector<1x32xf32>
    %c0_3 = arith.constant 0 : index
    %c0_4 = arith.constant 0 : index
    %c0_5 = arith.constant 0 : index
    %3 = vector.load %arg4[%c0_3, %c0_4, %c0_5] : memref<1x1x8xf32, #tpu.memory_space<vmem>>, vector<1x1x8xf32>
    %4 = vector.shape_cast %3 : vector<1x1x8xf32> to vector<1x8xf32>
    %c0_6 = arith.constant 0 : index
    %c0_7 = arith.constant 0 : index
    %5 = vector.load %arg3[%c0_6, %c0_7] : memref<4x8xf32, #tpu.memory_space<vmem>>, vector<4x8xf32>
    %c0_8 = arith.constant 0 : index
    %c0_9 = arith.constant 0 : index
    %6 = vector.load %arg9[%c0_8, %c0_9] : memref<1x32xf32, #tpu.memory_space<vmem>>, vector<1x32xf32>
    %7 = arith.mulf %2, %2 : vector<1x32xf32>
    %cst = arith.constant dense<0.000000e+00> : vector<1xf32>
    %8 = vector.multi_reduction <add>, %7, %cst [1] : vector<1x32xf32> to vector<1xf32>
    %9 = vector.shape_cast %8 : vector<1xf32> to vector<1x1xf32>
    %cst_10 = arith.constant 3.200000e+01 : f32
    %10 = vector.broadcast %cst_10 : f32 to vector<1x1xf32>
    %11 = arith.divf %9, %10 : vector<1x1xf32>
    %cst_11 = arith.constant 9.99999997E-7 : f32
    %12 = vector.broadcast %cst_11 : f32 to vector<1x1xf32>
    %13 = arith.addf %11, %12 : vector<1x1xf32>
    %14 = math.rsqrt %13 : vector<1x1xf32>
    %15 = vector.broadcast %14 : vector<1x1xf32> to vector<1x32xf32>
    %16 = arith.mulf %2, %15 : vector<1x32xf32>
    %17 = arith.mulf %16, %6 : vector<1x32xf32>
    %c0_12 = arith.constant 0 : index
    %c0_13 = arith.constant 0 : index
    %18 = vector.load %arg10[%c0_12, %c0_13] : memref<32x96xf32, #tpu.memory_space<vmem>>, vector<32x96xf32>
    %19 = arith.truncf %17 : vector<1x32xf32> to vector<1x32xbf16>
    %20 = arith.truncf %18 : vector<32x96xf32> to vector<32x96xbf16>
    %cst_14 = arith.constant dense<0.000000e+00> : vector<1x96xf32>
    %21 = tpu.matmul %19, %20, %cst_14 {dimension_numbers = #tpu.dot_dimension_numbers<[1], [0], [0], [1], [0, 0, 1, 1], [], []>} : vector<1x32xbf16>, vector<32x96xbf16>, vector<1x96xf32> -> vector<1x96xf32>
    %22 = vector.extract_strided_slice %21 {offsets = [0, 0], sizes = [1, 32], strides = [1, 1]} : vector<1x96xf32> to vector<1x32xf32>
    %23 = vector.extract_strided_slice %21 {offsets = [0, 32], sizes = [1, 32], strides = [1, 1]} : vector<1x96xf32> to vector<1x32xf32>
    %24 = vector.extract_strided_slice %21 {offsets = [0, 64], sizes = [1, 32], strides = [1, 1]} : vector<1x96xf32> to vector<1x32xf32>
    %c0_15 = arith.constant 0 : index
    %c0_16 = arith.constant 0 : index
    %c0_17 = arith.constant 0 : index
    %25 = vector.load %arg5[%c0_15, %c0_16, %c0_17] : memref<1x8x32xf32, #tpu.memory_space<vmem>>, vector<1x8x32xf32>
    %26 = vector.shape_cast %25 : vector<1x8x32xf32> to vector<8x32xf32>
    %c0_18 = arith.constant 0 : index
    %c0_19 = arith.constant 0 : index
    %c0_20 = arith.constant 0 : index
    %27 = vector.load %arg6[%c0_18, %c0_19, %c0_20] : memref<1x8x32xf32, #tpu.memory_space<vmem>>, vector<1x8x32xf32>
    %28 = vector.shape_cast %27 : vector<1x8x32xf32> to vector<8x32xf32>
    %29 = tpu.iota {dimensions = array<i32: 0>} : vector<8x1xi32>
    %30 = vector.broadcast %0 : i32 to vector<8x1xi32>
    %31 = arith.cmpi eq, %29, %30 : vector<8x1xi32>
    %32 = vector.shape_cast %31 : vector<8x1xi1> to vector<8x1xi1>
    %33 = vector.broadcast %32 : vector<8x1xi1> to vector<8x32xi1>
    %34 = vector.shape_cast %23 : vector<1x32xf32> to vector<1x32xf32>
    %35 = vector.broadcast %34 : vector<1x32xf32> to vector<8x32xf32>
    %36 = arith.select %33, %35, %26 : vector<8x32xi1>, vector<8x32xf32>
    %37 = vector.shape_cast %31 : vector<8x1xi1> to vector<8x1xi1>
    %38 = vector.broadcast %37 : vector<8x1xi1> to vector<8x32xi1>
    %39 = vector.shape_cast %24 : vector<1x32xf32> to vector<1x32xf32>
    %40 = vector.broadcast %39 : vector<1x32xf32> to vector<8x32xf32>
    %41 = arith.select %38, %40, %28 : vector<8x32xi1>, vector<8x32xf32>
    %c0_21 = arith.constant 0 : index
    %c0_22 = arith.constant 0 : index
    %c0_23 = arith.constant 0 : index
    %42 = vector.load %arg21[%c0_21, %c0_22, %c0_23] : memref<1x8x32xf32, #tpu.memory_space<vmem>>, vector<1x8x32xf32>
    %43 = vector.shape_cast %42 : vector<1x8x32xf32> to vector<8x32xf32>
    %44 = vector.shape_cast %36 : vector<8x32xf32> to vector<1x8x32xf32>
    tpu.vector_store %arg21[%c0_21, %c0_22, %c0_23], %44 {strides = array<i32>} : memref<1x8x32xf32, #tpu.memory_space<vmem>>, vector<1x8x32xf32>,
    %c0_24 = arith.constant 0 : index
    %c0_25 = arith.constant 0 : index
    %c0_26 = arith.constant 0 : index
    %45 = vector.load %arg22[%c0_24, %c0_25, %c0_26] : memref<1x8x32xf32, #tpu.memory_space<vmem>>, vector<1x8x32xf32>
    %46 = vector.shape_cast %45 : vector<1x8x32xf32> to vector<8x32xf32>
    %47 = vector.shape_cast %41 : vector<8x32xf32> to vector<1x8x32xf32>
    tpu.vector_store %arg22[%c0_24, %c0_25, %c0_26], %47 {strides = array<i32>} : memref<1x8x32xf32, #tpu.memory_space<vmem>>, vector<1x8x32xf32>,
    %48 = tpu.iota {dimensions = array<i32: 1>} : vector<1x8xi32>
    %49 = vector.broadcast %0 : i32 to vector<1x8xi32>
    %50 = arith.cmpi sle, %48, %49 : vector<1x8xi32>
    %cst_27 = arith.constant 0.000000e+00 : f32
    %cst_28 = arith.constant -1.000000e+09 : f32
    %51 = vector.broadcast %cst_27 : f32 to vector<1x8xf32>
    %52 = vector.broadcast %cst_28 : f32 to vector<1x8xf32>
    %53 = arith.select %50, %51, %52 : vector<1x8xi1>, vector<1x8xf32>
    %c0_29 = arith.constant 0 : index
    %c0_30 = arith.constant 0 : index
    %54 = vector.load %arg11[%c0_29, %c0_30] : memref<32x32xf32, #tpu.memory_space<vmem>>, vector<32x32xf32>
    %cst_31 = arith.constant 0.000000e+00 : f32
    %55 = vector.broadcast %cst_31 : f32 to vector<1x32xf32>
    %56 = vector.extract_strided_slice %22 {offsets = [0, 0], sizes = [1, 8], strides = [1, 1]} : vector<1x32xf32> to vector<1x8xf32>
    %57 = vector.extract_strided_slice %36 {offsets = [0, 0], sizes = [8, 8], strides = [1, 1]} : vector<8x32xf32> to vector<8x8xf32>
    %58 = arith.truncf %56 : vector<1x8xf32> to vector<1x8xbf16>
    %59 = arith.truncf %57 : vector<8x8xf32> to vector<8x8xbf16>
    %cst_32 = arith.constant dense<0.000000e+00> : vector<1x8xf32>
    %60 = tpu.matmul %58, %59, %cst_32 {dimension_numbers = #tpu.dot_dimension_numbers<[1], [1], [0], [0], [0, 0, 1, 0], [], []>} : vector<1x8xbf16>, vector<8x8xbf16>, vector<1x8xf32> -> vector<1x8xf32>
    %61 = vector.extract_strided_slice %5 {offsets = [0, 0], sizes = [1, 8], strides = [1, 1]} : vector<4x8xf32> to vector<1x8xf32>
    %62 = arith.addf %60, %61 : vector<1x8xf32>
    %63 = arith.addf %62, %53 : vector<1x8xf32>
    %cst_33 = arith.constant dense<0xFF800000> : vector<1xf32>
    %64 = vector.multi_reduction <maximumf>, %63, %cst_33 [1] : vector<1x8xf32> to vector<1xf32>
    %65 = vector.shape_cast %64 : vector<1xf32> to vector<1x1xf32>
    %66 = vector.broadcast %65 : vector<1x1xf32> to vector<1x8xf32>
    %67 = arith.subf %63, %66 : vector<1x8xf32>
    %68 = math.exp %67 : vector<1x8xf32>
    %cst_34 = arith.constant dense<0.000000e+00> : vector<1xf32>
    %69 = vector.multi_reduction <add>, %68, %cst_34 [1] : vector<1x8xf32> to vector<1xf32>
    %70 = vector.shape_cast %69 : vector<1xf32> to vector<1x1xf32>
    %71 = tpu.reciprocal %70 : vector<1x1xf32> -> vector<1x1xf32>
    %72 = vector.broadcast %71 : vector<1x1xf32> to vector<1x8xf32>
    %73 = arith.mulf %68, %72 : vector<1x8xf32>
    %74 = vector.extract_strided_slice %41 {offsets = [0, 0], sizes = [8, 8], strides = [1, 1]} : vector<8x32xf32> to vector<8x8xf32>
    %75 = arith.truncf %73 : vector<1x8xf32> to vector<1x8xbf16>
    %76 = arith.truncf %74 : vector<8x8xf32> to vector<8x8xbf16>
    %cst_35 = arith.constant dense<0.000000e+00> : vector<1x8xf32>
    %77 = tpu.matmul %75, %76, %cst_35 {dimension_numbers = #tpu.dot_dimension_numbers<[1], [0], [0], [1], [0, 0, 1, 1], [], []>} : vector<1x8xbf16>, vector<8x8xbf16>, vector<1x8xf32> -> vector<1x8xf32>
    %78 = vector.extract_strided_slice %54 {offsets = [0, 0], sizes = [8, 32], strides = [1, 1]} : vector<32x32xf32> to vector<8x32xf32>
    %79 = arith.truncf %77 : vector<1x8xf32> to vector<1x8xbf16>
    %80 = arith.truncf %78 : vector<8x32xf32> to vector<8x32xbf16>
    %cst_36 = arith.constant dense<0.000000e+00> : vector<1x32xf32>
    %81 = tpu.matmul %79, %80, %cst_36 {dimension_numbers = #tpu.dot_dimension_numbers<[1], [0], [0], [1], [0, 0, 1, 1], [], []>} : vector<1x8xbf16>, vector<8x32xbf16>, vector<1x32xf32> -> vector<1x32xf32>
    %82 = arith.addf %55, %81 : vector<1x32xf32>
    %83 = vector.extract_strided_slice %22 {offsets = [0, 8], sizes = [1, 8], strides = [1, 1]} : vector<1x32xf32> to vector<1x8xf32>
    %84 = vector.extract_strided_slice %36 {offsets = [0, 8], sizes = [8, 8], strides = [1, 1]} : vector<8x32xf32> to vector<8x8xf32>
    %85 = arith.truncf %83 : vector<1x8xf32> to vector<1x8xbf16>
    %86 = arith.truncf %84 : vector<8x8xf32> to vector<8x8xbf16>
    %cst_37 = arith.constant dense<0.000000e+00> : vector<1x8xf32>
    %87 = tpu.matmul %85, %86, %cst_37 {dimension_numbers = #tpu.dot_dimension_numbers<[1], [1], [0], [0], [0, 0, 1, 0], [], []>} : vector<1x8xbf16>, vector<8x8xbf16>, vector<1x8xf32> -> vector<1x8xf32>
    %88 = vector.extract_strided_slice %5 {offsets = [1, 0], sizes = [1, 8], strides = [1, 1]} : vector<4x8xf32> to vector<1x8xf32>
    %89 = arith.addf %87, %88 : vector<1x8xf32>
    %90 = arith.addf %89, %53 : vector<1x8xf32>
    %cst_38 = arith.constant dense<0xFF800000> : vector<1xf32>
    %91 = vector.multi_reduction <maximumf>, %90, %cst_38 [1] : vector<1x8xf32> to vector<1xf32>
    %92 = vector.shape_cast %91 : vector<1xf32> to vector<1x1xf32>
    %93 = vector.broadcast %92 : vector<1x1xf32> to vector<1x8xf32>
    %94 = arith.subf %90, %93 : vector<1x8xf32>
    %95 = math.exp %94 : vector<1x8xf32>
    %cst_39 = arith.constant dense<0.000000e+00> : vector<1xf32>
    %96 = vector.multi_reduction <add>, %95, %cst_39 [1] : vector<1x8xf32> to vector<1xf32>
    %97 = vector.shape_cast %96 : vector<1xf32> to vector<1x1xf32>
    %98 = tpu.reciprocal %97 : vector<1x1xf32> -> vector<1x1xf32>
    %99 = vector.broadcast %98 : vector<1x1xf32> to vector<1x8xf32>
    %100 = arith.mulf %95, %99 : vector<1x8xf32>
    %101 = vector.extract_strided_slice %41 {offsets = [0, 8], sizes = [8, 8], strides = [1, 1]} : vector<8x32xf32> to vector<8x8xf32>
    %102 = arith.truncf %100 : vector<1x8xf32> to vector<1x8xbf16>
    %103 = arith.truncf %101 : vector<8x8xf32> to vector<8x8xbf16>
    %cst_40 = arith.constant dense<0.000000e+00> : vector<1x8xf32>
    %104 = tpu.matmul %102, %103, %cst_40 {dimension_numbers = #tpu.dot_dimension_numbers<[1], [0], [0], [1], [0, 0, 1, 1], [], []>} : vector<1x8xbf16>, vector<8x8xbf16>, vector<1x8xf32> -> vector<1x8xf32>
    %105 = vector.extract_strided_slice %54 {offsets = [8, 0], sizes = [8, 32], strides = [1, 1]} : vector<32x32xf32> to vector<8x32xf32>
    %106 = arith.truncf %104 : vector<1x8xf32> to vector<1x8xbf16>
    %107 = arith.truncf %105 : vector<8x32xf32> to vector<8x32xbf16>
    %cst_41 = arith.constant dense<0.000000e+00> : vector<1x32xf32>
    %108 = tpu.matmul %106, %107, %cst_41 {dimension_numbers = #tpu.dot_dimension_numbers<[1], [0], [0], [1], [0, 0, 1, 1], [], []>} : vector<1x8xbf16>, vector<8x32xbf16>, vector<1x32xf32> -> vector<1x32xf32>
    %109 = arith.addf %82, %108 : vector<1x32xf32>
    %110 = vector.extract_strided_slice %22 {offsets = [0, 16], sizes = [1, 8], strides = [1, 1]} : vector<1x32xf32> to vector<1x8xf32>
    %111 = vector.extract_strided_slice %36 {offsets = [0, 16], sizes = [8, 8], strides = [1, 1]} : vector<8x32xf32> to vector<8x8xf32>
    %112 = arith.truncf %110 : vector<1x8xf32> to vector<1x8xbf16>
    %113 = arith.truncf %111 : vector<8x8xf32> to vector<8x8xbf16>
    %cst_42 = arith.constant dense<0.000000e+00> : vector<1x8xf32>
    %114 = tpu.matmul %112, %113, %cst_42 {dimension_numbers = #tpu.dot_dimension_numbers<[1], [1], [0], [0], [0, 0, 1, 0], [], []>} : vector<1x8xbf16>, vector<8x8xbf16>, vector<1x8xf32> -> vector<1x8xf32>
    %115 = vector.extract_strided_slice %5 {offsets = [2, 0], sizes = [1, 8], strides = [1, 1]} : vector<4x8xf32> to vector<1x8xf32>
    %116 = arith.addf %114, %115 : vector<1x8xf32>
    %117 = arith.addf %116, %53 : vector<1x8xf32>
    %cst_43 = arith.constant dense<0xFF800000> : vector<1xf32>
    %118 = vector.multi_reduction <maximumf>, %117, %cst_43 [1] : vector<1x8xf32> to vector<1xf32>
    %119 = vector.shape_cast %118 : vector<1xf32> to vector<1x1xf32>
    %120 = vector.broadcast %119 : vector<1x1xf32> to vector<1x8xf32>
    %121 = arith.subf %117, %120 : vector<1x8xf32>
    %122 = math.exp %121 : vector<1x8xf32>
    %cst_44 = arith.constant dense<0.000000e+00> : vector<1xf32>
    %123 = vector.multi_reduction <add>, %122, %cst_44 [1] : vector<1x8xf32> to vector<1xf32>
    %124 = vector.shape_cast %123 : vector<1xf32> to vector<1x1xf32>
    %125 = tpu.reciprocal %124 : vector<1x1xf32> -> vector<1x1xf32>
    %126 = vector.broadcast %125 : vector<1x1xf32> to vector<1x8xf32>
    %127 = arith.mulf %122, %126 : vector<1x8xf32>
    %128 = vector.extract_strided_slice %41 {offsets = [0, 16], sizes = [8, 8], strides = [1, 1]} : vector<8x32xf32> to vector<8x8xf32>
    %129 = arith.truncf %127 : vector<1x8xf32> to vector<1x8xbf16>
    %130 = arith.truncf %128 : vector<8x8xf32> to vector<8x8xbf16>
    %cst_45 = arith.constant dense<0.000000e+00> : vector<1x8xf32>
    %131 = tpu.matmul %129, %130, %cst_45 {dimension_numbers = #tpu.dot_dimension_numbers<[1], [0], [0], [1], [0, 0, 1, 1], [], []>} : vector<1x8xbf16>, vector<8x8xbf16>, vector<1x8xf32> -> vector<1x8xf32>
    %132 = vector.extract_strided_slice %54 {offsets = [16, 0], sizes = [8, 32], strides = [1, 1]} : vector<32x32xf32> to vector<8x32xf32>
    %133 = arith.truncf %131 : vector<1x8xf32> to vector<1x8xbf16>
    %134 = arith.truncf %132 : vector<8x32xf32> to vector<8x32xbf16>
    %cst_46 = arith.constant dense<0.000000e+00> : vector<1x32xf32>
    %135 = tpu.matmul %133, %134, %cst_46 {dimension_numbers = #tpu.dot_dimension_numbers<[1], [0], [0], [1], [0, 0, 1, 1], [], []>} : vector<1x8xbf16>, vector<8x32xbf16>, vector<1x32xf32> -> vector<1x32xf32>
    %136 = arith.addf %109, %135 : vector<1x32xf32>
    %137 = vector.extract_strided_slice %22 {offsets = [0, 24], sizes = [1, 8], strides = [1, 1]} : vector<1x32xf32> to vector<1x8xf32>
    %138 = vector.extract_strided_slice %36 {offsets = [0, 24], sizes = [8, 8], strides = [1, 1]} : vector<8x32xf32> to vector<8x8xf32>
    %139 = arith.truncf %137 : vector<1x8xf32> to vector<1x8xbf16>
    %140 = arith.truncf %138 : vector<8x8xf32> to vector<8x8xbf16>
    %cst_47 = arith.constant dense<0.000000e+00> : vector<1x8xf32>
    %141 = tpu.matmul %139, %140, %cst_47 {dimension_numbers = #tpu.dot_dimension_numbers<[1], [1], [0], [0], [0, 0, 1, 0], [], []>} : vector<1x8xbf16>, vector<8x8xbf16>, vector<1x8xf32> -> vector<1x8xf32>
    %142 = vector.extract_strided_slice %5 {offsets = [3, 0], sizes = [1, 8], strides = [1, 1]} : vector<4x8xf32> to vector<1x8xf32>
    %143 = arith.addf %141, %142 : vector<1x8xf32>
    %144 = arith.addf %143, %53 : vector<1x8xf32>
    %cst_48 = arith.constant dense<0xFF800000> : vector<1xf32>
    %145 = vector.multi_reduction <maximumf>, %144, %cst_48 [1] : vector<1x8xf32> to vector<1xf32>
    %146 = vector.shape_cast %145 : vector<1xf32> to vector<1x1xf32>
    %147 = vector.broadcast %146 : vector<1x1xf32> to vector<1x8xf32>
    %148 = arith.subf %144, %147 : vector<1x8xf32>
    %149 = math.exp %148 : vector<1x8xf32>
    %cst_49 = arith.constant dense<0.000000e+00> : vector<1xf32>
    %150 = vector.multi_reduction <add>, %149, %cst_49 [1] : vector<1x8xf32> to vector<1xf32>
    %151 = vector.shape_cast %150 : vector<1xf32> to vector<1x1xf32>
    %152 = tpu.reciprocal %151 : vector<1x1xf32> -> vector<1x1xf32>
    %153 = vector.broadcast %152 : vector<1x1xf32> to vector<1x8xf32>
    %154 = arith.mulf %149, %153 : vector<1x8xf32>
    %155 = vector.extract_strided_slice %41 {offsets = [0, 24], sizes = [8, 8], strides = [1, 1]} : vector<8x32xf32> to vector<8x8xf32>
    %156 = arith.truncf %154 : vector<1x8xf32> to vector<1x8xbf16>
    %157 = arith.truncf %155 : vector<8x8xf32> to vector<8x8xbf16>
    %cst_50 = arith.constant dense<0.000000e+00> : vector<1x8xf32>
    %158 = tpu.matmul %156, %157, %cst_50 {dimension_numbers = #tpu.dot_dimension_numbers<[1], [0], [0], [1], [0, 0, 1, 1], [], []>} : vector<1x8xbf16>, vector<8x8xbf16>, vector<1x8xf32> -> vector<1x8xf32>
    %159 = vector.extract_strided_slice %54 {offsets = [24, 0], sizes = [8, 32], strides = [1, 1]} : vector<32x32xf32> to vector<8x32xf32>
    %160 = arith.truncf %158 : vector<1x8xf32> to vector<1x8xbf16>
    %161 = arith.truncf %159 : vector<8x32xf32> to vector<8x32xbf16>
    %cst_51 = arith.constant dense<0.000000e+00> : vector<1x32xf32>
    %162 = tpu.matmul %160, %161, %cst_51 {dimension_numbers = #tpu.dot_dimension_numbers<[1], [0], [0], [1], [0, 0, 1, 1], [], []>} : vector<1x8xbf16>, vector<8x32xbf16>, vector<1x32xf32> -> vector<1x32xf32>
    %163 = arith.addf %136, %162 : vector<1x32xf32>
    %164 = arith.addf %2, %163 : vector<1x32xf32>
    %c0_52 = arith.constant 0 : index
    %c0_53 = arith.constant 0 : index
    %165 = vector.load %arg12[%c0_52, %c0_53] : memref<1x32xf32, #tpu.memory_space<vmem>>, vector<1x32xf32>
    %166 = arith.mulf %164, %164 : vector<1x32xf32>
    %cst_54 = arith.constant dense<0.000000e+00> : vector<1xf32>
    %167 = vector.multi_reduction <add>, %166, %cst_54 [1] : vector<1x32xf32> to vector<1xf32>
    %168 = vector.shape_cast %167 : vector<1xf32> to vector<1x1xf32>
    %cst_55 = arith.constant 3.200000e+01 : f32
    %169 = vector.broadcast %cst_55 : f32 to vector<1x1xf32>
    %170 = arith.divf %168, %169 : vector<1x1xf32>
    %cst_56 = arith.constant 9.99999997E-7 : f32
    %171 = vector.broadcast %cst_56 : f32 to vector<1x1xf32>
    %172 = arith.addf %170, %171 : vector<1x1xf32>
    %173 = math.rsqrt %172 : vector<1x1xf32>
    %174 = vector.broadcast %173 : vector<1x1xf32> to vector<1x32xf32>
    %175 = arith.mulf %164, %174 : vector<1x32xf32>
    %176 = arith.mulf %175, %165 : vector<1x32xf32>
    %c0_57 = arith.constant 0 : index
    %c0_58 = arith.constant 0 : index
    %177 = vector.load %arg13[%c0_57, %c0_58] : memref<32x32xf32, #tpu.memory_space<vmem>>, vector<32x32xf32>
    %178 = arith.truncf %176 : vector<1x32xf32> to vector<1x32xbf16>
    %179 = arith.truncf %177 : vector<32x32xf32> to vector<32x32xbf16>
    %cst_59 = arith.constant dense<0.000000e+00> : vector<1x32xf32>
    %180 = tpu.matmul %178, %179, %cst_59 {dimension_numbers = #tpu.dot_dimension_numbers<[1], [0], [0], [1], [0, 0, 1, 1], [], []>} : vector<1x32xbf16>, vector<32x32xbf16>, vector<1x32xf32> -> vector<1x32xf32>
    %c0_60 = arith.constant 0 : index
    %c0_61 = arith.constant 0 : index
    %c0_62 = arith.constant 0 : index
    %181 = vector.load %arg7[%c0_60, %c0_61, %c0_62] : memref<1x8x32xf32, #tpu.memory_space<vmem>>, vector<1x8x32xf32>
    %182 = vector.shape_cast %181 : vector<1x8x32xf32> to vector<8x32xf32>
    %c0_63 = arith.constant 0 : index
    %c0_64 = arith.constant 0 : index
    %c0_65 = arith.constant 0 : index
    %183 = vector.load %arg8[%c0_63, %c0_64, %c0_65] : memref<1x8x32xf32, #tpu.memory_space<vmem>>, vector<1x8x32xf32>
    %184 = vector.shape_cast %183 : vector<1x8x32xf32> to vector<8x32xf32>
    %c0_66 = arith.constant 0 : index
    %c0_67 = arith.constant 0 : index
    %185 = vector.load %arg14[%c0_66, %c0_67] : memref<32x32xf32, #tpu.memory_space<vmem>>, vector<32x32xf32>
    %cst_68 = arith.constant 0.000000e+00 : f32
    %186 = vector.broadcast %cst_68 : f32 to vector<1x32xf32>
    %187 = vector.extract_strided_slice %180 {offsets = [0, 0], sizes = [1, 8], strides = [1, 1]} : vector<1x32xf32> to vector<1x8xf32>
    %188 = vector.extract_strided_slice %182 {offsets = [0, 0], sizes = [8, 8], strides = [1, 1]} : vector<8x32xf32> to vector<8x8xf32>
    %189 = arith.truncf %187 : vector<1x8xf32> to vector<1x8xbf16>
    %190 = arith.truncf %188 : vector<8x8xf32> to vector<8x8xbf16>
    %cst_69 = arith.constant dense<0.000000e+00> : vector<1x8xf32>
    %191 = tpu.matmul %189, %190, %cst_69 {dimension_numbers = #tpu.dot_dimension_numbers<[1], [1], [0], [0], [0, 0, 1, 0], [], []>} : vector<1x8xbf16>, vector<8x8xbf16>, vector<1x8xf32> -> vector<1x8xf32>
    %192 = arith.addf %191, %4 : vector<1x8xf32>
    %cst_70 = arith.constant dense<0xFF800000> : vector<1xf32>
    %193 = vector.multi_reduction <maximumf>, %192, %cst_70 [1] : vector<1x8xf32> to vector<1xf32>
    %194 = vector.shape_cast %193 : vector<1xf32> to vector<1x1xf32>
    %195 = vector.broadcast %194 : vector<1x1xf32> to vector<1x8xf32>
    %196 = arith.subf %192, %195 : vector<1x8xf32>
    %197 = math.exp %196 : vector<1x8xf32>
    %cst_71 = arith.constant dense<0.000000e+00> : vector<1xf32>
    %198 = vector.multi_reduction <add>, %197, %cst_71 [1] : vector<1x8xf32> to vector<1xf32>
    %199 = vector.shape_cast %198 : vector<1xf32> to vector<1x1xf32>
    %200 = tpu.reciprocal %199 : vector<1x1xf32> -> vector<1x1xf32>
    %201 = vector.broadcast %200 : vector<1x1xf32> to vector<1x8xf32>
    %202 = arith.mulf %197, %201 : vector<1x8xf32>
    %203 = vector.extract_strided_slice %184 {offsets = [0, 0], sizes = [8, 8], strides = [1, 1]} : vector<8x32xf32> to vector<8x8xf32>
    %204 = arith.truncf %202 : vector<1x8xf32> to vector<1x8xbf16>
    %205 = arith.truncf %203 : vector<8x8xf32> to vector<8x8xbf16>
    %cst_72 = arith.constant dense<0.000000e+00> : vector<1x8xf32>
    %206 = tpu.matmul %204, %205, %cst_72 {dimension_numbers = #tpu.dot_dimension_numbers<[1], [0], [0], [1], [0, 0, 1, 1], [], []>} : vector<1x8xbf16>, vector<8x8xbf16>, vector<1x8xf32> -> vector<1x8xf32>
    %207 = vector.extract_strided_slice %185 {offsets = [0, 0], sizes = [8, 32], strides = [1, 1]} : vector<32x32xf32> to vector<8x32xf32>
    %208 = arith.truncf %206 : vector<1x8xf32> to vector<1x8xbf16>
    %209 = arith.truncf %207 : vector<8x32xf32> to vector<8x32xbf16>
    %cst_73 = arith.constant dense<0.000000e+00> : vector<1x32xf32>
    %210 = tpu.matmul %208, %209, %cst_73 {dimension_numbers = #tpu.dot_dimension_numbers<[1], [0], [0], [1], [0, 0, 1, 1], [], []>} : vector<1x8xbf16>, vector<8x32xbf16>, vector<1x32xf32> -> vector<1x32xf32>
    %211 = arith.addf %186, %210 : vector<1x32xf32>
    %212 = vector.extract_strided_slice %180 {offsets = [0, 8], sizes = [1, 8], strides = [1, 1]} : vector<1x32xf32> to vector<1x8xf32>
    %213 = vector.extract_strided_slice %182 {offsets = [0, 8], sizes = [8, 8], strides = [1, 1]} : vector<8x32xf32> to vector<8x8xf32>
    %214 = arith.truncf %212 : vector<1x8xf32> to vector<1x8xbf16>
    %215 = arith.truncf %213 : vector<8x8xf32> to vector<8x8xbf16>
    %cst_74 = arith.constant dense<0.000000e+00> : vector<1x8xf32>
    %216 = tpu.matmul %214, %215, %cst_74 {dimension_numbers = #tpu.dot_dimension_numbers<[1], [1], [0], [0], [0, 0, 1, 0], [], []>} : vector<1x8xbf16>, vector<8x8xbf16>, vector<1x8xf32> -> vector<1x8xf32>
    %217 = arith.addf %216, %4 : vector<1x8xf32>
    %cst_75 = arith.constant dense<0xFF800000> : vector<1xf32>
    %218 = vector.multi_reduction <maximumf>, %217, %cst_75 [1] : vector<1x8xf32> to vector<1xf32>
    %219 = vector.shape_cast %218 : vector<1xf32> to vector<1x1xf32>
    %220 = vector.broadcast %219 : vector<1x1xf32> to vector<1x8xf32>
    %221 = arith.subf %217, %220 : vector<1x8xf32>
    %222 = math.exp %221 : vector<1x8xf32>
    %cst_76 = arith.constant dense<0.000000e+00> : vector<1xf32>
    %223 = vector.multi_reduction <add>, %222, %cst_76 [1] : vector<1x8xf32> to vector<1xf32>
    %224 = vector.shape_cast %223 : vector<1xf32> to vector<1x1xf32>
    %225 = tpu.reciprocal %224 : vector<1x1xf32> -> vector<1x1xf32>
    %226 = vector.broadcast %225 : vector<1x1xf32> to vector<1x8xf32>
    %227 = arith.mulf %222, %226 : vector<1x8xf32>
    %228 = vector.extract_strided_slice %184 {offsets = [0, 8], sizes = [8, 8], strides = [1, 1]} : vector<8x32xf32> to vector<8x8xf32>
    %229 = arith.truncf %227 : vector<1x8xf32> to vector<1x8xbf16>
    %230 = arith.truncf %228 : vector<8x8xf32> to vector<8x8xbf16>
    %cst_77 = arith.constant dense<0.000000e+00> : vector<1x8xf32>
    %231 = tpu.matmul %229, %230, %cst_77 {dimension_numbers = #tpu.dot_dimension_numbers<[1], [0], [0], [1], [0, 0, 1, 1], [], []>} : vector<1x8xbf16>, vector<8x8xbf16>, vector<1x8xf32> -> vector<1x8xf32>
    %232 = vector.extract_strided_slice %185 {offsets = [8, 0], sizes = [8, 32], strides = [1, 1]} : vector<32x32xf32> to vector<8x32xf32>
    %233 = arith.truncf %231 : vector<1x8xf32> to vector<1x8xbf16>
    %234 = arith.truncf %232 : vector<8x32xf32> to vector<8x32xbf16>
    %cst_78 = arith.constant dense<0.000000e+00> : vector<1x32xf32>
    %235 = tpu.matmul %233, %234, %cst_78 {dimension_numbers = #tpu.dot_dimension_numbers<[1], [0], [0], [1], [0, 0, 1, 1], [], []>} : vector<1x8xbf16>, vector<8x32xbf16>, vector<1x32xf32> -> vector<1x32xf32>
    %236 = arith.addf %211, %235 : vector<1x32xf32>
    %237 = vector.extract_strided_slice %180 {offsets = [0, 16], sizes = [1, 8], strides = [1, 1]} : vector<1x32xf32> to vector<1x8xf32>
    %238 = vector.extract_strided_slice %182 {offsets = [0, 16], sizes = [8, 8], strides = [1, 1]} : vector<8x32xf32> to vector<8x8xf32>
    %239 = arith.truncf %237 : vector<1x8xf32> to vector<1x8xbf16>
    %240 = arith.truncf %238 : vector<8x8xf32> to vector<8x8xbf16>
    %cst_79 = arith.constant dense<0.000000e+00> : vector<1x8xf32>
    %241 = tpu.matmul %239, %240, %cst_79 {dimension_numbers = #tpu.dot_dimension_numbers<[1], [1], [0], [0], [0, 0, 1, 0], [], []>} : vector<1x8xbf16>, vector<8x8xbf16>, vector<1x8xf32> -> vector<1x8xf32>
    %242 = arith.addf %241, %4 : vector<1x8xf32>
    %cst_80 = arith.constant dense<0xFF800000> : vector<1xf32>
    %243 = vector.multi_reduction <maximumf>, %242, %cst_80 [1] : vector<1x8xf32> to vector<1xf32>
    %244 = vector.shape_cast %243 : vector<1xf32> to vector<1x1xf32>
    %245 = vector.broadcast %244 : vector<1x1xf32> to vector<1x8xf32>
    %246 = arith.subf %242, %245 : vector<1x8xf32>
    %247 = math.exp %246 : vector<1x8xf32>
    %cst_81 = arith.constant dense<0.000000e+00> : vector<1xf32>
    %248 = vector.multi_reduction <add>, %247, %cst_81 [1] : vector<1x8xf32> to vector<1xf32>
    %249 = vector.shape_cast %248 : vector<1xf32> to vector<1x1xf32>
    %250 = tpu.reciprocal %249 : vector<1x1xf32> -> vector<1x1xf32>
    %251 = vector.broadcast %250 : vector<1x1xf32> to vector<1x8xf32>
    %252 = arith.mulf %247, %251 : vector<1x8xf32>
    %253 = vector.extract_strided_slice %184 {offsets = [0, 16], sizes = [8, 8], strides = [1, 1]} : vector<8x32xf32> to vector<8x8xf32>
    %254 = arith.truncf %252 : vector<1x8xf32> to vector<1x8xbf16>
    %255 = arith.truncf %253 : vector<8x8xf32> to vector<8x8xbf16>
    %cst_82 = arith.constant dense<0.000000e+00> : vector<1x8xf32>
    %256 = tpu.matmul %254, %255, %cst_82 {dimension_numbers = #tpu.dot_dimension_numbers<[1], [0], [0], [1], [0, 0, 1, 1], [], []>} : vector<1x8xbf16>, vector<8x8xbf16>, vector<1x8xf32> -> vector<1x8xf32>
    %257 = vector.extract_strided_slice %185 {offsets = [16, 0], sizes = [8, 32], strides = [1, 1]} : vector<32x32xf32> to vector<8x32xf32>
    %258 = arith.truncf %256 : vector<1x8xf32> to vector<1x8xbf16>
    %259 = arith.truncf %257 : vector<8x32xf32> to vector<8x32xbf16>
    %cst_83 = arith.constant dense<0.000000e+00> : vector<1x32xf32>
    %260 = tpu.matmul %258, %259, %cst_83 {dimension_numbers = #tpu.dot_dimension_numbers<[1], [0], [0], [1], [0, 0, 1, 1], [], []>} : vector<1x8xbf16>, vector<8x32xbf16>, vector<1x32xf32> -> vector<1x32xf32>
    %261 = arith.addf %236, %260 : vector<1x32xf32>
    %262 = vector.extract_strided_slice %180 {offsets = [0, 24], sizes = [1, 8], strides = [1, 1]} : vector<1x32xf32> to vector<1x8xf32>
    %263 = vector.extract_strided_slice %182 {offsets = [0, 24], sizes = [8, 8], strides = [1, 1]} : vector<8x32xf32> to vector<8x8xf32>
    %264 = arith.truncf %262 : vector<1x8xf32> to vector<1x8xbf16>
    %265 = arith.truncf %263 : vector<8x8xf32> to vector<8x8xbf16>
    %cst_84 = arith.constant dense<0.000000e+00> : vector<1x8xf32>
    %266 = tpu.matmul %264, %265, %cst_84 {dimension_numbers = #tpu.dot_dimension_numbers<[1], [1], [0], [0], [0, 0, 1, 0], [], []>} : vector<1x8xbf16>, vector<8x8xbf16>, vector<1x8xf32> -> vector<1x8xf32>
    %267 = arith.addf %266, %4 : vector<1x8xf32>
    %cst_85 = arith.constant dense<0xFF800000> : vector<1xf32>
    %268 = vector.multi_reduction <maximumf>, %267, %cst_85 [1] : vector<1x8xf32> to vector<1xf32>
    %269 = vector.shape_cast %268 : vector<1xf32> to vector<1x1xf32>
    %270 = vector.broadcast %269 : vector<1x1xf32> to vector<1x8xf32>
    %271 = arith.subf %267, %270 : vector<1x8xf32>
    %272 = math.exp %271 : vector<1x8xf32>
    %cst_86 = arith.constant dense<0.000000e+00> : vector<1xf32>
    %273 = vector.multi_reduction <add>, %272, %cst_86 [1] : vector<1x8xf32> to vector<1xf32>
    %274 = vector.shape_cast %273 : vector<1xf32> to vector<1x1xf32>
    %275 = tpu.reciprocal %274 : vector<1x1xf32> -> vector<1x1xf32>
    %276 = vector.broadcast %275 : vector<1x1xf32> to vector<1x8xf32>
    %277 = arith.mulf %272, %276 : vector<1x8xf32>
    %278 = vector.extract_strided_slice %184 {offsets = [0, 24], sizes = [8, 8], strides = [1, 1]} : vector<8x32xf32> to vector<8x8xf32>
    %279 = arith.truncf %277 : vector<1x8xf32> to vector<1x8xbf16>
    %280 = arith.truncf %278 : vector<8x8xf32> to vector<8x8xbf16>
    %cst_87 = arith.constant dense<0.000000e+00> : vector<1x8xf32>
    %281 = tpu.matmul %279, %280, %cst_87 {dimension_numbers = #tpu.dot_dimension_numbers<[1], [0], [0], [1], [0, 0, 1, 1], [], []>} : vector<1x8xbf16>, vector<8x8xbf16>, vector<1x8xf32> -> vector<1x8xf32>
    %282 = vector.extract_strided_slice %185 {offsets = [24, 0], sizes = [8, 32], strides = [1, 1]} : vector<32x32xf32> to vector<8x32xf32>
    %283 = arith.truncf %281 : vector<1x8xf32> to vector<1x8xbf16>
    %284 = arith.truncf %282 : vector<8x32xf32> to vector<8x32xbf16>
    %cst_88 = arith.constant dense<0.000000e+00> : vector<1x32xf32>
    %285 = tpu.matmul %283, %284, %cst_88 {dimension_numbers = #tpu.dot_dimension_numbers<[1], [0], [0], [1], [0, 0, 1, 1], [], []>} : vector<1x8xbf16>, vector<8x32xbf16>, vector<1x32xf32> -> vector<1x32xf32>
    %286 = arith.addf %261, %285 : vector<1x32xf32>
    %287 = arith.addf %164, %286 : vector<1x32xf32>
    %c0_89 = arith.constant 0 : index
    %c0_90 = arith.constant 0 : index
    %288 = vector.load %arg15[%c0_89, %c0_90] : memref<1x32xf32, #tpu.memory_space<vmem>>, vector<1x32xf32>
    %289 = arith.mulf %287, %287 : vector<1x32xf32>
    %cst_91 = arith.constant dense<0.000000e+00> : vector<1xf32>
    %290 = vector.multi_reduction <add>, %289, %cst_91 [1] : vector<1x32xf32> to vector<1xf32>
    %291 = vector.shape_cast %290 : vector<1xf32> to vector<1x1xf32>
    %cst_92 = arith.constant 3.200000e+01 : f32
    %292 = vector.broadcast %cst_92 : f32 to vector<1x1xf32>
    %293 = arith.divf %291, %292 : vector<1x1xf32>
    %cst_93 = arith.constant 9.99999997E-7 : f32
    %294 = vector.broadcast %cst_93 : f32 to vector<1x1xf32>
    %295 = arith.addf %293, %294 : vector<1x1xf32>
    %296 = math.rsqrt %295 : vector<1x1xf32>
    %297 = vector.broadcast %296 : vector<1x1xf32> to vector<1x32xf32>
    %298 = arith.mulf %287, %297 : vector<1x32xf32>
    %299 = arith.mulf %298, %288 : vector<1x32xf32>
    %c0_94 = arith.constant 0 : index
    %c0_95 = arith.constant 0 : index
    %300 = vector.load %arg16[%c0_94, %c0_95] : memref<32x64xf32, #tpu.memory_space<vmem>>, vector<32x64xf32>
    %301 = arith.truncf %299 : vector<1x32xf32> to vector<1x32xbf16>
    %302 = arith.truncf %300 : vector<32x64xf32> to vector<32x64xbf16>
    %cst_96 = arith.constant dense<0.000000e+00> : vector<1x64xf32>
    %303 = tpu.matmul %301, %302, %cst_96 {dimension_numbers = #tpu.dot_dimension_numbers<[1], [0], [0], [1], [0, 0, 1, 1], [], []>} : vector<1x32xbf16>, vector<32x64xbf16>, vector<1x64xf32> -> vector<1x64xf32>
    %cst_97 = arith.constant 0.000000e+00 : f32
    %304 = vector.broadcast %cst_97 : f32 to vector<1x64xf32>
    %305 = arith.maximumf %303, %304 : vector<1x64xf32>
    %c0_98 = arith.constant 0 : index
    %c0_99 = arith.constant 0 : index
    %306 = vector.load %arg17[%c0_98, %c0_99] : memref<64x32xf32, #tpu.memory_space<vmem>>, vector<64x32xf32>
    %307 = arith.truncf %305 : vector<1x64xf32> to vector<1x64xbf16>
    %308 = arith.truncf %306 : vector<64x32xf32> to vector<64x32xbf16>
    %cst_100 = arith.constant dense<0.000000e+00> : vector<1x32xf32>
    %309 = tpu.matmul %307, %308, %cst_100 {dimension_numbers = #tpu.dot_dimension_numbers<[1], [0], [0], [1], [0, 0, 1, 1], [], []>} : vector<1x64xbf16>, vector<64x32xbf16>, vector<1x32xf32> -> vector<1x32xf32>
    %310 = arith.addf %287, %309 : vector<1x32xf32>
    %c0_101 = arith.constant 0 : index
    %c0_102 = arith.constant 0 : index
    %311 = vector.load %arg18[%c0_101, %c0_102] : memref<1x32xf32, #tpu.memory_space<vmem>>, vector<1x32xf32>
    %312 = arith.mulf %310, %310 : vector<1x32xf32>
    %cst_103 = arith.constant dense<0.000000e+00> : vector<1xf32>
    %313 = vector.multi_reduction <add>, %312, %cst_103 [1] : vector<1x32xf32> to vector<1xf32>
    %314 = vector.shape_cast %313 : vector<1xf32> to vector<1x1xf32>
    %cst_104 = arith.constant 3.200000e+01 : f32
    %315 = vector.broadcast %cst_104 : f32 to vector<1x1xf32>
    %316 = arith.divf %314, %315 : vector<1x1xf32>
    %cst_105 = arith.constant 9.99999997E-7 : f32
    %317 = vector.broadcast %cst_105 : f32 to vector<1x1xf32>
    %318 = arith.addf %316, %317 : vector<1x1xf32>
    %319 = math.rsqrt %318 : vector<1x1xf32>
    %320 = vector.broadcast %319 : vector<1x1xf32> to vector<1x32xf32>
    %321 = arith.mulf %310, %320 : vector<1x32xf32>
    %322 = arith.mulf %321, %311 : vector<1x32xf32>
    %c0_106 = arith.constant 0 : index
    %c0_107 = arith.constant 0 : index
    %323 = vector.load %arg19[%c0_106, %c0_107] : memref<32x128xf32, #tpu.memory_space<vmem>>, vector<32x128xf32>
    %324 = arith.truncf %322 : vector<1x32xf32> to vector<1x32xbf16>
    %325 = arith.truncf %323 : vector<32x128xf32> to vector<32x128xbf16>
    %cst_108 = arith.constant dense<0.000000e+00> : vector<1x128xf32>
    %326 = tpu.matmul %324, %325, %cst_108 {dimension_numbers = #tpu.dot_dimension_numbers<[1], [0], [0], [1], [0, 0, 1, 1], [], []>} : vector<1x32xbf16>, vector<32x128xbf16>, vector<1x128xf32> -> vector<1x128xf32>
    %c0_109 = arith.constant 0 : index
    %c0_110 = arith.constant 0 : index
    %c0_111 = arith.constant 0 : index
    %327 = vector.load %arg20[%c0_109, %c0_110, %c0_111] : memref<1x1x128xf32, #tpu.memory_space<vmem>>, vector<1x1x128xf32>
    %328 = vector.shape_cast %327 : vector<1x1x128xf32> to vector<1x128xf32>
    %329 = vector.shape_cast %326 : vector<1x128xf32> to vector<1x1x128xf32>
    tpu.vector_store %arg20[%c0_109, %c0_110, %c0_111], %329 {strides = array<i32>} : memref<1x1x128xf32, #tpu.memory_space<vmem>>, vector<1x1x128xf32>,
    return
  }
  func.func @transform_0(%arg0: i32, %arg1: memref<1xi32, #tpu.memory_space<smem>>) -> (i32, i32, i32) {
    %c0_i32 = arith.constant 0 : i32
    %c0_i32_0 = arith.constant 0 : i32
    %c0_i32_1 = arith.constant 0 : i32
    return %arg0, %c0_i32, %c0_i32_0 : i32, i32, i32
  }
  func.func @transform_1(%arg0: i32, %arg1: memref<1xi32, #tpu.memory_space<smem>>) -> (i32, i32) {
    %c0_i32 = arith.constant 0 : i32
    %c0_i32_0 = arith.constant 0 : i32
    %c0_i32_1 = arith.constant 0 : i32
    return %c0_i32, %c0_i32_0 : i32, i32
  }
  func.func @transform_2(%arg0: i32, %arg1: memref<1xi32, #tpu.memory_space<smem>>) -> (i32, i32, i32) {
    %c0_i32 = arith.constant 0 : i32
    %c0_i32_0 = arith.constant 0 : i32
    %c0_i32_1 = arith.constant 0 : i32
    return %arg0, %c0_i32, %c0_i32_0 : i32, i32, i32
  }
  func.func @transform_3(%arg0: i32, %arg1: memref<1xi32, #tpu.memory_space<smem>>) -> (i32, i32, i32) {
    %c0_i32 = arith.constant 0 : i32
    %c0_i32_0 = arith.constant 0 : i32
    %c0_i32_1 = arith.constant 0 : i32
    return %arg0, %c0_i32, %c0_i32_0 : i32, i32, i32
  }
  func.func @transform_4(%arg0: i32, %arg1: memref<1xi32, #tpu.memory_space<smem>>) -> (i32, i32, i32) {
    %c0_i32 = arith.constant 0 : i32
    %c0_i32_0 = arith.constant 0 : i32
    %c0_i32_1 = arith.constant 0 : i32
    return %arg0, %c0_i32, %c0_i32_0 : i32, i32, i32
  }
  func.func @transform_5(%arg0: i32, %arg1: memref<1xi32, #tpu.memory_space<smem>>) -> (i32, i32, i32) {
    %c0_i32 = arith.constant 0 : i32
    %c0_i32_0 = arith.constant 0 : i32
    %c0_i32_1 = arith.constant 0 : i32
    return %arg0, %c0_i32, %c0_i32_0 : i32, i32, i32
  }
  func.func @transform_6(%arg0: i32, %arg1: memref<1xi32, #tpu.memory_space<smem>>) -> (i32, i32, i32) {
    %c0_i32 = arith.constant 0 : i32
    %c0_i32_0 = arith.constant 0 : i32
    %c0_i32_1 = arith.constant 0 : i32
    return %arg0, %c0_i32, %c0_i32_0 : i32, i32, i32
  }
  func.func @transform_7(%arg0: i32, %arg1: memref<1xi32, #tpu.memory_space<smem>>) -> (i32, i32) {
    %c0_i32 = arith.constant 0 : i32
    %c0_i32_0 = arith.constant 0 : i32
    %c0_i32_1 = arith.constant 0 : i32
    return %c0_i32, %c0_i32_0 : i32, i32
  }
  func.func @transform_8(%arg0: i32, %arg1: memref<1xi32, #tpu.memory_space<smem>>) -> (i32, i32) {
    %c0_i32 = arith.constant 0 : i32
    %c0_i32_0 = arith.constant 0 : i32
    %c0_i32_1 = arith.constant 0 : i32
    return %c0_i32, %c0_i32_0 : i32, i32
  }
  func.func @transform_9(%arg0: i32, %arg1: memref<1xi32, #tpu.memory_space<smem>>) -> (i32, i32) {
    %c0_i32 = arith.constant 0 : i32
    %c0_i32_0 = arith.constant 0 : i32
    %c0_i32_1 = arith.constant 0 : i32
    return %c0_i32, %c0_i32_0 : i32, i32
  }
  func.func @transform_10(%arg0: i32, %arg1: memref<1xi32, #tpu.memory_space<smem>>) -> (i32, i32) {
    %c0_i32 = arith.constant 0 : i32
    %c0_i32_0 = arith.constant 0 : i32
    %c0_i32_1 = arith.constant 0 : i32
    return %c0_i32, %c0_i32_0 : i32, i32
  }
  func.func @transform_11(%arg0: i32, %arg1: memref<1xi32, #tpu.memory_space<smem>>) -> (i32, i32) {
    %c0_i32 = arith.constant 0 : i32
    %c0_i32_0 = arith.constant 0 : i32
    %c0_i32_1 = arith.constant 0 : i32
    return %c0_i32, %c0_i32_0 : i32, i32
  }
  func.func @transform_12(%arg0: i32, %arg1: memref<1xi32, #tpu.memory_space<smem>>) -> (i32, i32) {
    %c0_i32 = arith.constant 0 : i32
    %c0_i32_0 = arith.constant 0 : i32
    %c0_i32_1 = arith.constant 0 : i32
    return %c0_i32, %c0_i32_0 : i32, i32
  }
  func.func @transform_13(%arg0: i32, %arg1: memref<1xi32, #tpu.memory_space<smem>>) -> (i32, i32) {
    %c0_i32 = arith.constant 0 : i32
    %c0_i32_0 = arith.constant 0 : i32
    %c0_i32_1 = arith.constant 0 : i32
    return %c0_i32, %c0_i32_0 : i32, i32
  }
  func.func @transform_14(%arg0: i32, %arg1: memref<1xi32, #tpu.memory_space<smem>>) -> (i32, i32) {
    %c0_i32 = arith.constant 0 : i32
    %c0_i32_0 = arith.constant 0 : i32
    %c0_i32_1 = arith.constant 0 : i32
    return %c0_i32, %c0_i32_0 : i32, i32
  }
  func.func @transform_15(%arg0: i32, %arg1: memref<1xi32, #tpu.memory_space<smem>>) -> (i32, i32) {
    %c0_i32 = arith.constant 0 : i32
    %c0_i32_0 = arith.constant 0 : i32
    %c0_i32_1 = arith.constant 0 : i32
    return %c0_i32, %c0_i32_0 : i32, i32
  }
  func.func @transform_16(%arg0: i32, %arg1: memref<1xi32, #tpu.memory_space<smem>>) -> (i32, i32) {
    %c0_i32 = arith.constant 0 : i32
    %c0_i32_0 = arith.constant 0 : i32
    %c0_i32_1 = arith.constant 0 : i32
    return %c0_i32, %c0_i32_0 : i32, i32
  }
  func.func @transform_17(%arg0: i32, %arg1: memref<1xi32, #tpu.memory_space<smem>>) -> (i32, i32) {
    %c0_i32 = arith.constant 0 : i32
    %c0_i32_0 = arith.constant 0 : i32
    %c0_i32_1 = arith.constant 0 : i32
    return %c0_i32, %c0_i32_0 : i32, i32
  }
  func.func @transform_18(%arg0: i32, %arg1: memref<1xi32, #tpu.memory_space<smem>>) -> (i32, i32, i32) {
    %c0_i32 = arith.constant 0 : i32
    %c0_i32_0 = arith.constant 0 : i32
    %c0_i32_1 = arith.constant 0 : i32
    return %arg0, %c0_i32, %c0_i32_0 : i32, i32, i32
  }
  func.func @transform_19(%arg0: i32, %arg1: memref<1xi32, #tpu.memory_space<smem>>) -> (i32, i32, i32) {
    %c0_i32 = arith.constant 0 : i32
    %c0_i32_0 = arith.constant 0 : i32
    %c0_i32_1 = arith.constant 0 : i32
    return %arg0, %c0_i32, %c0_i32_0 : i32, i32, i32
  }
  func.func @transform_20(%arg0: i32, %arg1: memref<1xi32, #tpu.memory_space<smem>>) -> (i32, i32, i32) {
    %c0_i32 = arith.constant 0 : i32
    %c0_i32_0 = arith.constant 0 : i32
    %c0_i32_1 = arith.constant 0 : i32
    return %arg0, %c0_i32, %c0_i32_0 : i32, i32, i32
  }
}

</mosaic_0001>

<llo_original>
// kernel: custom-call.2
$region0: #{custom-call.2}
  %s0 = inlined_call_operand.vmem [shape: pred[4], index: 0, kind: output, shape index: {}]

// kernel: _generate.1
$region0: #{_generate.1}
  #allocation0 [shape = 'u32[]', space=smem, size = 0x4, offset = 0x4, fixed_abs, tag = 'smem constant byte address 0x4 - core index']
  #allocation1 [shape = 'u32[144,128]{1,0:T(1,128)}', space=vmem, size = 0x12000, scoped, tag = 'internal scratch']
  %s0 = inlined_call_operand.vmem [shape: f32[4,8,32], index: 0, kind: input, shape index: {}]
  %s1 = inlined_call_operand.vmem [shape: f32[4,8,8], index: 1, kind: input, shape index: {}]
  %s2 = inlined_call_operand.vmem [shape: f32[4,1,8], index: 2, kind: input, shape index: {}]
  %s3 = inlined_call_operand.vmem [shape: f32[1,32], index: 3, kind: input, shape index: {}]
  %s4 = inlined_call_operand.vmem [shape: f32[32,96], index: 4, kind: input, shape index: {}]
  %s5 = inlined_call_operand.vmem [shape: f32[32,32], index: 5, kind: input, shape index: {}]
  %s6 = inlined_call_operand.vmem [shape: f32[1,32], index: 6, kind: input, shape index: {}]
  %s7 = inlined_call_operand.vmem [shape: f32[32,64], index: 7, kind: input, shape index: {}]
  %s8 = inlined_call_operand.vmem [shape: f32[64,32], index: 8, kind: input, shape index: {}]
  %s9 = inlined_call_operand.vmem [shape: f32[1,32], index: 9, kind: input, shape index: {}]
  %s10 = inlined_call_operand.vmem [shape: f32[32,64], index: 10, kind: input, shape index: {}]
  %s11 = inlined_call_operand.vmem [shape: f32[4,8,32], index: 11, kind: output, shape index: {0}]
  %s12 = inlined_call_operand.vmem [shape: f32[4,8,32], index: 12, kind: output, shape index: {1}]
  %13 = xla_tuple %s11, %s12
  %s14 = sld [smem:[#allocation0]]
  $region85: #{_generate.1} parent=0
    _
  %s16 = ssub.s32 1, %s14
  %s17 = scalar_select 0, %s16, %s14
  loop: start=0, step=1, limit=6
  $region2: #{_generate.1} parent=0 // loop_pre_header
    _
  $region3: #{_generate.1} parent=0 // loop_header
    %s19 = sphi 0, %s23
    %p20 = scmp.ge.s32.totalorder %s19, 6
    %s29 = sphi 0, %s31
    %s32 = sphi 0, %s29
    %s33 = sphi 0, %s32
    %s49 = sphi 0, %s33
    %s53 = sphi 0, %s53
    %s55 = sphi 0, %s53
    %s56 = sphi 0, %s55
    %s70 = sphi 0, %s56
    %s76 = sphi 0, %s78
    %s79 = sphi 0, %s76
    %s80 = sphi 0, %s79
    %s96 = sphi 0, %s80
    %s100 = sphi 0, %s100
    %s102 = sphi 0, %s100
    %s103 = sphi 0, %s102
    %s117 = sphi 0, %s103
    %s121 = sphi 0, %s121
    %s123 = sphi 0, %s121
    %s124 = sphi 0, %s123
    %s138 = sphi 0, %s124
    %s142 = sphi 0, %s142
    %s144 = sphi 0, %s142
    %s145 = sphi 0, %s144
    %s159 = sphi 0, %s145
    %s163 = sphi 0, %s163
    %s165 = sphi 0, %s163
    %s166 = sphi 0, %s165
    %s180 = sphi 0, %s166
    %s184 = sphi 0, %s184
    %s186 = sphi 0, %s184
    %s187 = sphi 0, %s186
    %s201 = sphi 0, %s187
    %s205 = sphi 0, %s205
    %s207 = sphi 0, %s205
    %s208 = sphi 0, %s207
    %s222 = sphi 0, %s208
    %s226 = sphi 0, %s226
    %s228 = sphi 0, %s226
    %s229 = sphi 0, %s228
    %s243 = sphi 0, %s229
    %s247 = sphi 0, %s247
    %s249 = sphi 0, %s247
    %s250 = sphi 0, %s249
    %s264 = sphi 0, %s250
    %s270 = sphi 0, %s272
    %s273 = sphi 0, %s270
    %s274 = sphi 0, %s273
    %s290 = sphi 0, %s274
    %s296 = sphi 0, %s298
    %s299 = sphi 0, %s296
    %s300 = sphi 0, %s299
    %s316 = sphi 0, %s300
  $region4: #{_generate.1} parent=0 // loop_header_branch
    %22 = sbr.rel (%p20) target = $region8
  $region5: #{_generate.1} parent=0 // loop_body
    %s24 = ssub.s32 %s19, 1
    %s25 = ssub.s32 %s19, 2
    %s26 = sadd.s32 %s19, 1
    %s27 = ssub.s32 %s19, %s26
    %p28 = scmp.eq.s32.totalorder %s27, 0
    %s30 = sadd.s32 %s29, 1
    %s31 = scalar_select %p28, %s29, %s30
    %p34 = pneg %p28
    %p35 = scmp.eq.s32.totalorder %s19, 3
    %p36 = por %p34, %p35
    %p37 = scmp.ne.s32.totalorder %s29, %s32
    %p38 = scmp.eq.s32.totalorder %s19, 0
    %p39 = por %p37, %p38
    %p40 = scmp.ne.s32.totalorder %s29, %s32
    %p41 = scmp.eq.s32.totalorder %s24, 3
    %p42 = por %p40, %p41
    %p43 = scmp.ne.s32.totalorder %s32, %s33
    %p44 = scmp.eq.s32.totalorder %s24, 0
    %p45 = por %p43, %p44
    %p46 = scmp.ne.s32.totalorder %s32, %s33
    %p47 = scmp.eq.s32.totalorder %s25, 3
    %p48 = por %p46, %p47
    %p50 = scmp.ne.s32.totalorder %s33, %s49
    %p51 = scmp.eq.s32.totalorder %s25, 0
    %p52 = por %p50, %p51
    %s54 = sadd.s32 %s53, 1
    %p57 = scmp.eq.s32.totalorder %s19, 3
    %p58 = scmp.ne.s32.totalorder %s53, %s55
    %p59 = scmp.eq.s32.totalorder %s19, 0
    %p60 = por %p58, %p59
    %p61 = scmp.ne.s32.totalorder %s53, %s55
    %p62 = scmp.eq.s32.totalorder %s24, 3
    %p63 = por %p61, %p62
    %p64 = scmp.ne.s32.totalorder %s55, %s56
    %p65 = scmp.eq.s32.totalorder %s24, 0
    %p66 = por %p64, %p65
    %p67 = scmp.ne.s32.totalorder %s55, %s56
    %p68 = scmp.eq.s32.totalorder %s25, 3
    %p69 = por %p67, %p68
    %p71 = scmp.ne.s32.totalorder %s56, %s70
    %p72 = scmp.eq.s32.totalorder %s25, 0
    %p73 = por %p71, %p72
    %s74 = ssub.s32 %s19, %s26
    %p75 = scmp.eq.s32.totalorder %s74, 0
    %s77 = sadd.s32 %s76, 1
    %s78 = scalar_select %p75, %s76, %s77
    %p81 = pneg %p75
    %p82 = scmp.eq.s32.totalorder %s19, 3
    %p83 = por %p81, %p82
    %p84 = scmp.ne.s32.totalorder %s76, %s79
    %p85 = scmp.eq.s32.totalorder %s19, 0
    %p86 = por %p84, %p85
    %p87 = scmp.ne.s32.totalorder %s76, %s79
    %p88 = scmp.eq.s32.totalorder %s24, 3
    %p89 = por %p87, %p88
    %p90 = scmp.ne.s32.totalorder %s79, %s80
    %p91 = scmp.eq.s32.totalorder %s24, 0
    %p92 = por %p90, %p91
    %p93 = scmp.ne.s32.totalorder %s79, %s80
    %p94 = scmp.eq.s32.totalorder %s25, 3
    %p95 = por %p93, %p94
    %p97 = scmp.ne.s32.totalorder %s80, %s96
    %p98 = scmp.eq.s32.totalorder %s25, 0
    %p99 = por %p97, %p98
    %s101 = sadd.s32 %s100, 1
    %p104 = scmp.eq.s32.totalorder %s19, 3
    %p105 = scmp.ne.s32.totalorder %s100, %s102
    %p106 = scmp.eq.s32.totalorder %s19, 0
    %p107 = por %p105, %p106
    %p108 = scmp.ne.s32.totalorder %s100, %s102
    %p109 = scmp.eq.s32.totalorder %s24, 3
    %p110 = por %p108, %p109
    %p111 = scmp.ne.s32.totalorder %s102, %s103
    %p112 = scmp.eq.s32.totalorder %s24, 0
    %p113 = por %p111, %p112
    %p114 = scmp.ne.s32.totalorder %s102, %s103
    %p115 = scmp.eq.s32.totalorder %s25, 3
    %p116 = por %p114, %p115
    %p118 = scmp.ne.s32.totalorder %s103, %s117
    %p119 = scmp.eq.s32.totalorder %s25, 0
    %p120 = por %p118, %p119
    %s122 = sadd.s32 %s121, 1
    %p125 = scmp.eq.s32.totalorder %s19, 3
    %p126 = scmp.ne.s32.totalorder %s121, %s123
    %p127 = scmp.eq.s32.totalorder %s19, 0
    %p128 = por %p126, %p127
    %p129 = scmp.ne.s32.totalorder %s121, %s123
    %p130 = scmp.eq.s32.totalorder %s24, 3
    %p131 = por %p129, %p130
    %p132 = scmp.ne.s32.totalorder %s123, %s124
    %p133 = scmp.eq.s32.totalorder %s24, 0
    %p134 = por %p132, %p133
    %p135 = scmp.ne.s32.totalorder %s123, %s124
    %p136 = scmp.eq.s32.totalorder %s25, 3
    %p137 = por %p135, %p136
    %p139 = scmp.ne.s32.totalorder %s124, %s138
    %p140 = scmp.eq.s32.totalorder %s25, 0
    %p141 = por %p139, %p140
    %s143 = sadd.s32 %s142, 1
    %p146 = scmp.eq.s32.totalorder %s19, 3
    %p147 = scmp.ne.s32.totalorder %s142, %s144
    %p148 = scmp.eq.s32.totalorder %s19, 0
    %p149 = por %p147, %p148
    %p150 = scmp.ne.s32.totalorder %s142, %s144
    %p151 = scmp.eq.s32.totalorder %s24, 3
    %p152 = por %p150, %p151
    %p153 = scmp.ne.s32.totalorder %s144, %s145
    %p154 = scmp.eq.s32.totalorder %s24, 0
    %p155 = por %p153, %p154
    %p156 = scmp.ne.s32.totalorder %s144, %s145
    %p157 = scmp.eq.s32.totalorder %s25, 3
    %p158 = por %p156, %p157
    %p160 = scmp.ne.s32.totalorder %s145, %s159
    %p161 = scmp.eq.s32.totalorder %s25, 0
    %p162 = por %p160, %p161
    %s164 = sadd.s32 %s163, 1
    %p167 = scmp.eq.s32.totalorder %s19, 3
    %p168 = scmp.ne.s32.totalorder %s163, %s165
    %p169 = scmp.eq.s32.totalorder %s19, 0
    %p170 = por %p168, %p169
    %p171 = scmp.ne.s32.totalorder %s163, %s165
    %p172 = scmp.eq.s32.totalorder %s24, 3
    %p173 = por %p171, %p172
    %p174 = scmp.ne.s32.totalorder %s165, %s166
    %p175 = scmp.eq.s32.totalorder %s24, 0
    %p176 = por %p174, %p175
    %p177 = scmp.ne.s32.totalorder %s165, %s166
    %p178 = scmp.eq.s32.totalorder %s25, 3
    %p179 = por %p177, %p178
    %p181 = scmp.ne.s32.totalorder %s166, %s180
    %p182 = scmp.eq.s32.totalorder %s25, 0
    %p183 = por %p181, %p182
    %s185 = sadd.s32 %s184, 1
    %p188 = scmp.eq.s32.totalorder %s19, 3
    %p189 = scmp.ne.s32.totalorder %s184, %s186
    %p190 = scmp.eq.s32.totalorder %s19, 0
    %p191 = por %p189, %p190
    %p192 = scmp.ne.s32.totalorder %s184, %s186
    %p193 = scmp.eq.s32.totalorder %s24, 3
    %p194 = por %p192, %p193
    %p195 = scmp.ne.s32.totalorder %s186, %s187
    %p196 = scmp.eq.s32.totalorder %s24, 0
    %p197 = por %p195, %p196
    %p198 = scmp.ne.s32.totalorder %s186, %s187
    %p199 = scmp.eq.s32.totalorder %s25, 3
    %p200 = por %p198, %p199
    %p202 = scmp.ne.s32.totalorder %s187, %s201
    %p203 = scmp.eq.s32.totalorder %s25, 0
    %p204 = por %p202, %p203
    %s206 = sadd.s32 %s205, 1
    %p209 = scmp.eq.s32.totalorder %s19, 3
    %p210 = scmp.ne.s32.totalorder %s205, %s207
    %p211 = scmp.eq.s32.totalorder %s19, 0
    %p212 = por %p210, %p211
    %p213 = scmp.ne.s32.totalorder %s205, %s207
    %p214 = scmp.eq.s32.totalorder %s24, 3
    %p215 = por %p213, %p214
    %p216 = scmp.ne.s32.totalorder %s207, %s208
    %p217 = scmp.eq.s32.totalorder %s24, 0
    %p218 = por %p216, %p217
    %p219 = scmp.ne.s32.totalorder %s207, %s208
    %p220 = scmp.eq.s32.totalorder %s25, 3
    %p221 = por %p219, %p220
    %p223 = scmp.ne.s32.totalorder %s208, %s222
    %p224 = scmp.eq.s32.totalorder %s25, 0
    %p225 = por %p223, %p224
    %s227 = sadd.s32 %s226, 1
    %p230 = scmp.eq.s32.totalorder %s19, 3
    %p231 = scmp.ne.s32.totalorder %s226, %s228
    %p232 = scmp.eq.s32.totalorder %s19, 0
    %p233 = por %p231, %p232
    %p234 = scmp.ne.s32.totalorder %s226, %s228
    %p235 = scmp.eq.s32.totalorder %s24, 3
    %p236 = por %p234, %p235
    %p237 = scmp.ne.s32.totalorder %s228, %s229
    %p238 = scmp.eq.s32.totalorder %s24, 0
    %p239 = por %p237, %p238
    %p240 = scmp.ne.s32.totalorder %s228, %s229
    %p241 = scmp.eq.s32.totalorder %s25, 3
    %p242 = por %p240, %p241
    %p244 = scmp.ne.s32.totalorder %s229, %s243
    %p245 = scmp.eq.s32.totalorder %s25, 0
    %p246 = por %p244, %p245
    %s248 = sadd.s32 %s247, 1
    %p251 = scmp.eq.s32.totalorder %s19, 3
    %p252 = scmp.ne.s32.totalorder %s247, %s249
    %p253 = scmp.eq.s32.totalorder %s19, 0
    %p254 = por %p252, %p253
    %p255 = scmp.ne.s32.totalorder %s247, %s249
    %p256 = scmp.eq.s32.totalorder %s24, 3
    %p257 = por %p255, %p256
    %p258 = scmp.ne.s32.totalorder %s249, %s250
    %p259 = scmp.eq.s32.totalorder %s24, 0
    %p260 = por %p258, %p259
    %p261 = scmp.ne.s32.totalorder %s249, %s250
    %p262 = scmp.eq.s32.totalorder %s25, 3
    %p263 = por %p261, %p262
    %p265 = scmp.ne.s32.totalorder %s250, %s264
    %p266 = scmp.eq.s32.totalorder %s25, 0
    %p267 = por %p265, %p266
    %s268 = ssub.s32 %s19, %s26
    %p269 = scmp.eq.s32.totalorder %s268, 0
    %s271 = sadd.s32 %s270, 1
    %s272 = scalar_select %p269, %s270, %s271
    %p275 = pneg %p269
    %p276 = scmp.eq.s32.totalorder %s19, 3
    %p277 = por %p275, %p276
    %p278 = scmp.ne.s32.totalorder %s270, %s273
    %p279 = scmp.eq.s32.totalorder %s19, 0
    %p280 = por %p278, %p279
    %p281 = scmp.ne.s32.totalorder %s270, %s273
    %p282 = scmp.eq.s32.totalorder %s24, 3
    %p283 = por %p281, %p282
    %p284 = scmp.ne.s32.totalorder %s273, %s274
    %p285 = scmp.eq.s32.totalorder %s24, 0
    %p286 = por %p284, %p285
    %p287 = scmp.ne.s32.totalorder %s273, %s274
    %p288 = scmp.eq.s32.totalorder %s25, 3
    %p289 = por %p287, %p288
    %p291 = scmp.ne.s32.totalorder %s274, %s290
    %p292 = scmp.eq.s32.totalorder %s25, 0
    %p293 = por %p291, %p292
    %s294 = ssub.s32 %s19, %s26
    %p295 = scmp.eq.s32.totalorder %s294, 0
    %s297 = sadd.s32 %s296, 1
    %s298 = scalar_select %p295, %s296, %s297
    %p301 = pneg %p295
    %p302 = scmp.eq.s32.totalorder %s19, 3
    %p303 = por %p301, %p302
    %p304 = scmp.ne.s32.totalorder %s296, %s299
    %p305 = scmp.eq.s32.totalorder %s19, 0
    %p306 = por %p304, %p305
    %p307 = scmp.ne.s32.totalorder %s296, %s299
    %p308 = scmp.eq.s32.totalorder %s24, 3
    %p309 = por %p307, %p308
    %p310 = scmp.ne.s32.totalorder %s299, %s300
    %p311 = scmp.eq.s32.totalorder %s24, 0
    %p312 = por %p310, %p311
    %p313 = scmp.ne.s32.totalorder %s299, %s300
    %p314 = scmp.eq.s32.totalorder %s25, 3
    %p315 = por %p313, %p314
    %p317 = scmp.ne.s32.totalorder %s300, %s316
    %p318 = scmp.eq.s32.totalorder %s25, 0
    %p319 = por %p317, %p318
    %p320 = scmp.le.s32.totalorder 1, %s19
    %p321 = scmp.lt.s32.totalorder %s19, 5
    %p322 = pnand %p320, %p321
    %p323 = pneg %p322
    // Predicated region
    $region9: #{_generate.1} parent=5 // pred_check
      _
    $region10: #{_generate.1} parent=5 // pred_check_branch
      %325 = sbr.rel (%p322) target = $region12
    $region11: #{_generate.1} parent=5 // pred_region
      %s326 = ssub.s32 %s19, 1
      // Predicated region
      $region13: #{_generate.1} parent=11 // pred_check
        %p327 = pneg %p66
      $region14: #{_generate.1} parent=11 // pred_check_branch
        %329 = sbr.rel (%p327) target = $region16
      $region15: #{_generate.1} parent=11 // pred_region
        _
      $region16: #{_generate.1} parent=11 // pred_fallthru
        _
      // Predicated region
      $region17: #{_generate.1} parent=11 // pred_check
        %p330 = pneg %p113
      $region18: #{_generate.1} parent=11 // pred_check_branch
        %332 = sbr.rel (%p330) target = $region20
      $region19: #{_generate.1} parent=11 // pred_region
        _
      $region20: #{_generate.1} parent=11 // pred_fallthru
        _
      // Predicated region
      $region21: #{_generate.1} parent=11 // pred_check
        %p333 = pneg %p134
      $region22: #{_generate.1} parent=11 // pred_check_branch
        %335 = sbr.rel (%p333) target = $region24
      $region23: #{_generate.1} parent=11 // pred_region
        _
      $region24: #{_generate.1} parent=11 // pred_fallthru
        _
      // Predicated region
      $region25: #{_generate.1} parent=11 // pred_check
        %p336 = pneg %p155
      $region26: #{_generate.1} parent=11 // pred_check_branch
        %338 = sbr.rel (%p336) target = $region28
      $region27: #{_generate.1} parent=11 // pred_region
        _
      $region28: #{_generate.1} parent=11 // pred_fallthru
        _
      // Predicated region
      $region29: #{_generate.1} parent=11 // pred_check
        %p339 = pneg %p176
      $region30: #{_generate.1} parent=11 // pred_check_branch
        %341 = sbr.rel (%p339) target = $region32
      $region31: #{_generate.1} parent=11 // pred_region
        _
      $region32: #{_generate.1} parent=11 // pred_fallthru
        _
      // Predicated region
      $region33: #{_generate.1} parent=11 // pred_check
        %p342 = pneg %p197
      $region34: #{_generate.1} parent=11 // pred_check_branch
        %344 = sbr.rel (%p342) target = $region36
      $region35: #{_generate.1} parent=11 // pred_region
        _
      $region36: #{_generate.1} parent=11 // pred_fallthru
        _
      // Predicated region
      $region37: #{_generate.1} parent=11 // pred_check
        %p345 = pneg %p218
      $region38: #{_generate.1} parent=11 // pred_check_branch
        %347 = sbr.rel (%p345) target = $region40
      $region39: #{_generate.1} parent=11 // pred_region
        _
      $region40: #{_generate.1} parent=11 // pred_fallthru
        _
      // Predicated region
      $region41: #{_generate.1} parent=11 // pred_check
        %p348 = pneg %p239
      $region42: #{_generate.1} parent=11 // pred_check_branch
        %350 = sbr.rel (%p348) target = $region44
      $region43: #{_generate.1} parent=11 // pred_region
        _
      $region44: #{_generate.1} parent=11 // pred_fallthru
        _
      // Predicated region
      $region45: #{_generate.1} parent=11 // pred_check
        %p351 = pneg %p260
      $region46: #{_generate.1} parent=11 // pred_check_branch
        %353 = sbr.rel (%p351) target = $region48
      $region47: #{_generate.1} parent=11 // pred_region
        _
      $region48: #{_generate.1} parent=11 // pred_fallthru
        _
    $region12: #{_generate.1} parent=5 // pred_fallthru
      _
    %p354 = scmp.lt.s32.totalorder %s19, 4
    // Predicated region
    $region49: #{_generate.1} parent=5 // pred_check
      %p355 = pneg %p354
    $region50: #{_generate.1} parent=5 // pred_check_branch
      %357 = sbr.rel (%p355) target = $region52
    $region51: #{_generate.1} parent=5 // pred_region
      // Predicated region
      $region53: #{_generate.1} parent=51 // pred_check
        %p358 = pneg %p39
      $region54: #{_generate.1} parent=51 // pred_check_branch
        %360 = sbr.rel (%p358) target = $region56
      $region55: #{_generate.1} parent=51 // pred_region
        %p361 = scmp.lt.s32.totalorder %s19, 3
        %s362 = scalar_select %p361, %s19, 3
        %s363 = smul.addr %s362, 8
        %s364 = scalar_lea.vmem %s0, %s363
      $region56: #{_generate.1} parent=51 // pred_fallthru
        _
      // Predicated region
      $region57: #{_generate.1} parent=51 // pred_check
        %p365 = pneg %p86
      $region58: #{_generate.1} parent=51 // pred_check_branch
        %367 = sbr.rel (%p365) target = $region60
      $region59: #{_generate.1} parent=51 // pred_region
        %p368 = scmp.lt.s32.totalorder %s19, 3
        %s369 = scalar_select %p368, %s19, 3
        %s370 = scalar_lea.vmem %s2, %s369
      $region60: #{_generate.1} parent=51 // pred_fallthru
        _
    $region52: #{_generate.1} parent=5 // pred_fallthru
      _
    %p371 = scmp.le.s32.totalorder 1, %s19
    %p372 = scmp.lt.s32.totalorder %s19, 5
    %p373 = pnand %p371, %p372
    %p374 = pneg %p373
    // Predicated region
    $region61: #{_generate.1} parent=5 // pred_check
      _
    $region62: #{_generate.1} parent=5 // pred_check_branch
      %376 = sbr.rel (%p373) target = $region64
    $region63: #{_generate.1} parent=5 // pred_region
      %s377 = ssub.s32 %s19, 1
      %p378 = scmp.lt.s32.totalorder %s24, 3
      %s379 = scalar_select %p378, %s24, 3
      %s380 = smul.addr %s379, 8
      %s381 = scalar_lea.vmem %s0, %s380
      %p382 = pneg %p45
      %p383 = pneg %p42
      %p384 = pneg %p66
      %p385 = pneg %p63
      %p386 = scmp.lt.s32.totalorder %s24, 3
      %s387 = scalar_select %p386, %s24, 3
      %s388 = scalar_lea.vmem %s2, %s387
      %p389 = pneg %p92
      %p390 = pneg %p89
      %p391 = pneg %p113
      %p392 = pneg %p110
      %p393 = pneg %p134
      %p394 = pneg %p131
      %p395 = pneg %p155
      %p396 = pneg %p152
      %p397 = pneg %p176
      %p398 = pneg %p173
      %p399 = pneg %p197
      %p400 = pneg %p194
      %p401 = pneg %p218
      %p402 = pneg %p215
      %p403 = pneg %p239
      %p404 = pneg %p236
      %p405 = pneg %p260
      %p406 = pneg %p257
      %p407 = pneg %p286
      %p408 = pneg %p283
      %p409 = scmp.lt.s32.totalorder %s24, 3
      %s410 = scalar_select %p409, %s24, 3
      %s411 = smul.addr %s410, 8
      %s412 = scalar_lea.vmem %s11, %s411
      %p413 = pneg %p312
      %p414 = pneg %p309
      %p415 = scmp.lt.s32.totalorder %s24, 3
      %s416 = scalar_select %p415, %s24, 3
      %s417 = smul.addr %s416, 8
      %s418 = scalar_lea.vmem %s12, %s417
      %p419 = scmp.lt.s32.totalorder %s24, 3
      %s420 = scalar_select %p419, %s24, 3
      %s421 = smul.addr %s420, 8
      %s422 = scalar_lea.vmem %s0, %s421
      %p423 = scmp.lt.s32.totalorder %s24, 3
      %s424 = scalar_select %p423, %s24, 3
      %s425 = scalar_lea.vmem %s2, %s424
      %p426 = scmp.lt.s32.totalorder %s24, 3
      %s427 = scalar_select %p426, %s24, 3
      %s428 = smul.addr %s427, 8
      %s429 = scalar_lea.vmem %s11, %s428
      %p430 = scmp.lt.s32.totalorder %s24, 3
      %s431 = scalar_select %p430, %s24, 3
      %s432 = smul.addr %s431, 8
      %s433 = scalar_lea.vmem %s12, %s432
      %v435 = vld [vmem:[%s422] sm:$0xff]
      %v436 = vld [vmem:[%s425] sm:$0x1]
      %v437 = vld [vmem:[%s1] sm:$0xff]
      %v438 = vld [vmem:[%s1 + $0x8] sm:$0xff]
      %v439 = vld [vmem:[%s1 + $0x10] sm:$0xff]
      %v440 = vld [vmem:[%s1 + $0x18] sm:$0xff]
      %v441 = vld [vmem:[%s3] sm:$0x1]
      %v442 = vmul.f32 %v435, %v435
      %vm443 = vcmask 261120
      %v444 = vsel %vm443, %v442, 0.0
      %445 = vadd.xlane.f32.xlu0 %v444
      %v446 = vpop.xlane.xlu0 %445
      %v447 = vrcp.pop 32.0
      %v448 = vmul.f32 %v446, %v447
      %v449 = vadd.f32 %v448, 1e-06
      %v450 = vrsqrt.pop %v449
      %v451 = vmul.f32 %v435, %v450
      %v453 = vlaneseq
      %v454 = vshrl.u32 %v453, 7
      %v455 = vsub.s32 0, %v454
      %v456 = vrot.slane %v441, %v455
      %v458 = vmul.f32 %v451, %v456
      %v459 = vld [vmem:[%s4] sm:$0xff]
      %v460 = vld [vmem:[%s4 + $0x8] sm:$0xff]
      %v461 = vld [vmem:[%s4 + $0x10] sm:$0xff]
      %v462 = vld [vmem:[%s4 + $0x18] sm:$0xff]
      %v463 = vpack.c.bf16 %v458, %v458
      %v464 = vpack.c.bf16 %v460, %v459
      %v465 = vpack.c.bf16 %v462, %v461
      %v467 = vsel %vm443, %v463, 0
      %469 = vmatprep.subr.bf16.mxu0 0
      %470 = vmatpush1.bf16.msra.mxu0 %v464
      %471 = vmatprep.subr.bf16.mxu0 0
      %472 = vmatpush1.bf16.msra.mxu0 %v465
      %473 = vmatprep.subr.bf16.mxu0 0
      %474 = vmatpush1.bf16.msra.mxu0 0
      %475 = vmatprep.subr.bf16.mxu0 0
      %476 = vmatpush1.bf16.msra.mxu0 0
      %477 = vmatprep.subr.bf16.mxu0 0
      %478 = vmatpush1.bf16.msra.mxu0 0
      %479 = vmatprep.subr.bf16.mxu0 0
      %480 = vmatpush1.bf16.msra.mxu0 0
      %481 = vmatprep.subr.bf16.mxu0 0
      %482 = vmatpush1.bf16.msra.mxu0 0
      %483 = vmatprep.subr.bf16.mxu0 0
      %484 = vmatpush1.bf16.msra.mxu0 0
      %485 = vmatprep.subr.bf16.mxu0 0
      %486 = vmatpush1.bf16.msra.mxu0 0
      %487 = vmatprep.subr.bf16.mxu0 0
      %488 = vmatpush1.bf16.msra.mxu0 0
      %489 = vmatprep.subr.bf16.mxu0 0
      %490 = vmatpush1.bf16.msra.mxu0 0
      %491 = vmatprep.subr.bf16.mxu0 0
      %492 = vmatpush1.bf16.msra.mxu0 0
      %493 = vmatprep.subr.bf16.mxu0 0
      %494 = vmatpush1.bf16.msra.mxu0 0
      %495 = vmatprep.subr.bf16.mxu0 0
      %496 = vmatpush1.bf16.msra.mxu0 0
      %497 = vmatprep.subr.bf16.mxu0 0
      %498 = vmatpush1.bf16.msra.mxu0 0
      %499 = vmatprep.subr.bf16.mxu0 0
      %500 = vmatpush1.bf16.msra.mxu0 0
      %501 = vmatprep.mubr.bf16.mxu0 0
      %502 = vmatmul.mubr.bf16.gmra.mrb[0].mxu0 %v467
      %v503 = vpop.f32.mrb[0].mxu0
      %v504 = vadd.f32 0.0, %v503
      %v505 = vpop.f32.mrb[0].mxu0
      %v506 = vpop.f32.mrb[0].mxu0
      %v507 = vpop.f32.mrb[0].mxu0
      %508 = vdwg.mxu0
      %v509 = vld [vmem:[%s5] sm:$0xff]
      %v510 = vld [vmem:[%s5 + $0x8] sm:$0xff]
      %v511 = vld [vmem:[%s5 + $0x10] sm:$0xff]
      %v512 = vld [vmem:[%s5 + $0x18] sm:$0xff]
      %v513 = vpack.c.bf16 %v504, %v504
      %515 = vrot.lane.b32.xlu0 %v513, 96
      %v516 = vpop.permute.xlu0 %515
      %vm517 = vcmask 64512
      %v519 = vsel %vm517, %v513, 0
      %v522 = vsel %vm517, %v516, 0
      %524 = vmatprep.subr.bf16.mxu0 0
      %525 = vmatpush1.bf16.xpose.msra.mxu0 %v522
      %526 = vmatprep.subr.bf16.mxu0 0
      %527 = vmatpush1.bf16.xpose.msra.mxu0 0
      %528 = vmatprep.subr.bf16.mxu0 0
      %529 = vmatpush1.bf16.xpose.msra.mxu0 0
      %530 = vmatprep.subr.bf16.mxu0 0
      %531 = vmatpush1.bf16.xpose.msra.mxu0 0
      %532 = vmatprep.subr.bf16.mxu0 0
      %533 = vmatpush1.bf16.xpose.msra.mxu0 0
      %534 = vmatprep.subr.bf16.mxu0 0
      %535 = vmatpush1.bf16.xpose.msra.mxu0 0
      %536 = vmatprep.subr.bf16.mxu0 0
      %537 = vmatpush1.bf16.xpose.msra.mxu0 0
      %538 = vmatprep.subr.bf16.mxu0 0
      %539 = vmatpush1.bf16.xpose.msra.mxu0 0
      %540 = vmatprep.subr.bf16.mxu0 0
      %541 = vmatpush1.bf16.xpose.msra.mxu0 0
      %542 = vmatprep.subr.bf16.mxu0 0
      %543 = vmatpush1.bf16.xpose.msra.mxu0 0
      %544 = vmatprep.subr.bf16.mxu0 0
      %545 = vmatpush1.bf16.xpose.msra.mxu0 0
      %546 = vmatprep.subr.bf16.mxu0 0
      %547 = vmatpush1.bf16.xpose.msra.mxu0 0
      %548 = vmatprep.subr.bf16.mxu0 0
      %549 = vmatpush1.bf16.xpose.msra.mxu0 0
      %550 = vmatprep.subr.bf16.mxu0 0
      %551 = vmatpush1.bf16.xpose.msra.mxu0 0
      %552 = vmatprep.subr.bf16.mxu0 0
      %553 = vmatpush1.bf16.xpose.msra.mxu0 0
      %554 = vmatprep.subr.bf16.mxu0 0
      %555 = vmatpush1.bf16.xpose.msra.mxu0 0
      %556 = vmatprep.mubr.bf16.mxu0 0
      %557 = vmatmul.mubr.bf16.gmra.mrb[0].mxu0 %v519
      %v558 = vpop.f32.mrb[0].mxu0
      %v559 = vadd.f32 %v437, %v558
      %v560 = vpop.f32.mrb[0].mxu0
      %v561 = vpop.f32.mrb[0].mxu0
      %v562 = vpop.f32.mrb[0].mxu0
      %563 = vdwg.mxu0
      %v565 = vlaneseq
      %v566 = vshrl.u32 %v565, 7
      %v567 = vsub.s32 0, %v566
      %v568 = vrot.slane %v436, %v567
      %v570 = vadd.f32 %v559, %v568
      %v571 = vsel %vm517, %v570, -inf
      %572 = vmax.xlane.f32.xlu0 %v571
      %v573 = vpop.xlane.xlu0 %572
      %v574 = vsub.f32 %v570, %v573
      %v575 = vmul.f32 %v574, 1.442695
      %v576 = vpow.pop %v575
      %v577 = vsel %vm517, %v576, 0.0
      %578 = vadd.xlane.f32.xlu0 %v577
      %v579 = vpop.xlane.xlu0 %578
      %v580 = vrcp.pop %v579
      %v581 = vmul.f32 %v576, %v580
      %v582 = vpack.c.bf16 %v581, %v581
      %583 = vrot.lane.b32.xlu0 %v513, 64
      %v584 = vpop.permute.xlu0 %583
      %v586 = vsel %vm517, %v582, 0
      %vm588 = vcmask 1043456
      %v590 = vsel %vm588, %v584, 0
      %592 = vmatprep.subr.bf16.mxu0 0
      %593 = vmatpush1.bf16.msra.mxu0 %v590
      %594 = vmatprep.subr.bf16.mxu0 0
      %595 = vmatpush1.bf16.msra.mxu0 0
      %596 = vmatprep.subr.bf16.mxu0 0
      %597 = vmatpush1.bf16.msra.mxu0 0
      %598 = vmatprep.subr.bf16.mxu0 0
      %599 = vmatpush1.bf16.msra.mxu0 0
      %600 = vmatprep.subr.bf16.mxu0 0
      %601 = vmatpush1.bf16.msra.mxu0 0
      %602 = vmatprep.subr.bf16.mxu0 0
      %603 = vmatpush1.bf16.msra.mxu0 0
      %604 = vmatprep.subr.bf16.mxu0 0
      %605 = vmatpush1.bf16.msra.mxu0 0
      %606 = vmatprep.subr.bf16.mxu0 0
      %607 = vmatpush1.bf16.msra.mxu0 0
      %608 = vmatprep.subr.bf16.mxu0 0
      %609 = vmatpush1.bf16.msra.mxu0 0
      %610 = vmatprep.subr.bf16.mxu0 0
      %611 = vmatpush1.bf16.msra.mxu0 0
      %612 = vmatprep.subr.bf16.mxu0 0
      %613 = vmatpush1.bf16.msra.mxu0 0
      %614 = vmatprep.subr.bf16.mxu0 0
      %615 = vmatpush1.bf16.msra.mxu0 0
      %616 = vmatprep.subr.bf16.mxu0 0
      %617 = vmatpush1.bf16.msra.mxu0 0
      %618 = vmatprep.subr.bf16.mxu0 0
      %619 = vmatpush1.bf16.msra.mxu0 0
      %620 = vmatprep.subr.bf16.mxu0 0
      %621 = vmatpush1.bf16.msra.mxu0 0
      %622 = vmatprep.subr.bf16.mxu0 0
      %623 = vmatpush1.bf16.msra.mxu0 0
      %624 = vmatprep.mubr.bf16.mxu0 0
      %625 = vmatmul.mubr.bf16.gmra.mrb[0].mxu0 %v586
      %v626 = vpop.f32.mrb[0].mxu0
      %v627 = vadd.f32 0.0, %v626
      %v628 = vpop.f32.mrb[0].mxu0
      %v629 = vpop.f32.mrb[0].mxu0
      %v630 = vpop.f32.mrb[0].mxu0
      %631 = vdwg.mxu0
      %v632 = vpack.c.bf16 %v627, %v627
      %v633 = vpack.c.bf16 %v509, %v509
      %634 = vrot.lane.b32.xlu0 %v513, 120
      %v635 = vpop.permute.xlu0 %634
      %636 = vrot.lane.b32.xlu0 %v513, 88
      %v637 = vpop.permute.xlu0 %636
      %v639 = vsel %vm517, %v635, 0
      %v642 = vsel %vm517, %v637, 0
      %644 = vmatprep.subr.bf16.mxu0 0
      %645 = vmatpush1.bf16.xpose.msra.mxu0 %v642
      %646 = vmatprep.subr.bf16.mxu0 0
      %647 = vmatpush1.bf16.xpose.msra.mxu0 0
      %648 = vmatprep.subr.bf16.mxu0 0
      %649 = vmatpush1.bf16.xpose.msra.mxu0 0
      %650 = vmatprep.subr.bf16.mxu0 0
      %651 = vmatpush1.bf16.xpose.msra.mxu0 0
      %652 = vmatprep.subr.bf16.mxu0 0
      %653 = vmatpush1.bf16.xpose.msra.mxu0 0
      %654 = vmatprep.subr.bf16.mxu0 0
      %655 = vmatpush1.bf16.xpose.msra.mxu0 0
      %656 = vmatprep.subr.bf16.mxu0 0
      %657 = vmatpush1.bf16.xpose.msra.mxu0 0
      %658 = vmatprep.subr.bf16.mxu0 0
      %659 = vmatpush1.bf16.xpose.msra.mxu0 0
      %660 = vmatprep.subr.bf16.mxu0 0
      %661 = vmatpush1.bf16.xpose.msra.mxu0 0
      %662 = vmatprep.subr.bf16.mxu0 0
      %663 = vmatpush1.bf16.xpose.msra.mxu0 0
      %664 = vmatprep.subr.bf16.mxu0 0
      %665 = vmatpush1.bf16.xpose.msra.mxu0 0
      %666 = vmatprep.subr.bf16.mxu0 0
      %667 = vmatpush1.bf16.xpose.msra.mxu0 0
      %668 = vmatprep.subr.bf16.mxu0 0
      %669 = vmatpush1.bf16.xpose.msra.mxu0 0
      %670 = vmatprep.subr.bf16.mxu0 0
      %671 = vmatpush1.bf16.xpose.msra.mxu0 0
      %672 = vmatprep.subr.bf16.mxu0 0
      %673 = vmatpush1.bf16.xpose.msra.mxu0 0
      %674 = vmatprep.subr.bf16.mxu0 0
      %675 = vmatpush1.bf16.xpose.msra.mxu0 0
      %676 = vmatprep.mubr.bf16.mxu0 0
      %677 = vmatmul.mubr.bf16.gmra.mrb[0].mxu0 %v639
      %v678 = vpop.f32.mrb[0].mxu0
      %v679 = vadd.f32 %v438, %v678
      %v680 = vpop.f32.mrb[0].mxu0
      %v681 = vpop.f32.mrb[0].mxu0
      %v682 = vpop.f32.mrb[0].mxu0
      %683 = vdwg.mxu0
      %v684 = vadd.f32 %v679, %v568
      %v685 = vsel %vm517, %v684, -inf
      %686 = vmax.xlane.f32.xlu0 %v685
      %v687 = vpop.xlane.xlu0 %686
      %v688 = vsub.f32 %v684, %v687
      %v689 = vmul.f32 %v688, 1.442695
      %v690 = vpow.pop %v689
      %v691 = vsel %vm517, %v690, 0.0
      %692 = vadd.xlane.f32.xlu0 %v691
      %v693 = vpop.xlane.xlu0 %692
      %v694 = vrcp.pop %v693
      %v695 = vmul.f32 %v690, %v694
      %v696 = vpack.c.bf16 %v695, %v695
      %697 = vrot.lane.b32.xlu0 %v513, 56
      %v698 = vpop.permute.xlu0 %697
      %v700 = vsel %vm517, %v696, 0
      %v703 = vsel %vm588, %v698, 0
      %705 = vmatprep.subr.bf16.mxu0 0
      %706 = vmatpush1.bf16.msra.mxu0 %v703
      %707 = vmatprep.subr.bf16.mxu0 0
      %708 = vmatpush1.bf16.msra.mxu0 0
      %709 = vmatprep.subr.bf16.mxu0 0
      %710 = vmatpush1.bf16.msra.mxu0 0
      %711 = vmatprep.subr.bf16.mxu0 0
      %712 = vmatpush1.bf16.msra.mxu0 0
      %713 = vmatprep.subr.bf16.mxu0 0
      %714 = vmatpush1.bf16.msra.mxu0 0
      %715 = vmatprep.subr.bf16.mxu0 0
      %716 = vmatpush1.bf16.msra.mxu0 0
      %717 = vmatprep.subr.bf16.mxu0 0
      %718 = vmatpush1.bf16.msra.mxu0 0
      %719 = vmatprep.subr.bf16.mxu0 0
      %720 = vmatpush1.bf16.msra.mxu0 0
      %721 = vmatprep.subr.bf16.mxu0 0
      %722 = vmatpush1.bf16.msra.mxu0 0
      %723 = vmatprep.subr.bf16.mxu0 0
      %724 = vmatpush1.bf16.msra.mxu0 0
      %725 = vmatprep.subr.bf16.mxu0 0
      %726 = vmatpush1.bf16.msra.mxu0 0
      %727 = vmatprep.subr.bf16.mxu0 0
      %728 = vmatpush1.bf16.msra.mxu0 0
      %729 = vmatprep.subr.bf16.mxu0 0
      %730 = vmatpush1.bf16.msra.mxu0 0
      %731 = vmatprep.subr.bf16.mxu0 0
      %732 = vmatpush1.bf16.msra.mxu0 0
      %733 = vmatprep.subr.bf16.mxu0 0
      %734 = vmatpush1.bf16.msra.mxu0 0
      %735 = vmatprep.subr.bf16.mxu0 0
      %736 = vmatpush1.bf16.msra.mxu0 0
      %737 = vmatprep.mubr.bf16.mxu0 0
      %738 = vmatmul.mubr.bf16.gmra.mrb[0].mxu0 %v700
      %v739 = vpop.f32.mrb[0].mxu0
      %v740 = vadd.f32 0.0, %v739
      %v741 = vpop.f32.mrb[0].mxu0
      %v742 = vpop.f32.mrb[0].mxu0
      %v743 = vpop.f32.mrb[0].mxu0
      %744 = vdwg.mxu0
      %v745 = vpack.c.bf16 %v740, %v740
      %v746 = vpack.c.bf16 %v510, %v510
      %v748 = vsel %vm517, %v745, 0
      %v751 = vsel %vm588, %v746, 0
      %753 = vmatprep.subr.bf16.mxu0 0
      %754 = vmatpush1.bf16.msra.mxu0 %v751
      %755 = vmatprep.subr.bf16.mxu0 0
      %756 = vmatpush1.bf16.msra.mxu0 0
      %757 = vmatprep.subr.bf16.mxu0 0
      %758 = vmatpush1.bf16.msra.mxu0 0
      %759 = vmatprep.subr.bf16.mxu0 0
      %760 = vmatpush1.bf16.msra.mxu0 0
      %761 = vmatprep.subr.bf16.mxu0 0
      %762 = vmatpush1.bf16.msra.mxu0 0
      %763 = vmatprep.subr.bf16.mxu0 0
      %764 = vmatpush1.bf16.msra.mxu0 0
      %765 = vmatprep.subr.bf16.mxu0 0
      %766 = vmatpush1.bf16.msra.mxu0 0
      %767 = vmatprep.subr.bf16.mxu0 0
      %768 = vmatpush1.bf16.msra.mxu0 0
      %769 = vmatprep.subr.bf16.mxu0 0
      %770 = vmatpush1.bf16.msra.mxu0 0
      %771 = vmatprep.subr.bf16.mxu0 0
      %772 = vmatpush1.bf16.msra.mxu0 0
      %773 = vmatprep.subr.bf16.mxu0 0
      %774 = vmatpush1.bf16.msra.mxu0 0
      %775 = vmatprep.subr.bf16.mxu0 0
      %776 = vmatpush1.bf16.msra.mxu0 0
      %777 = vmatprep.subr.bf16.mxu0 0
      %778 = vmatpush1.bf16.msra.mxu0 0
      %779 = vmatprep.subr.bf16.mxu0 0
      %780 = vmatpush1.bf16.msra.mxu0 0
      %781 = vmatprep.subr.bf16.mxu0 0
      %782 = vmatpush1.bf16.msra.mxu0 0
      %783 = vmatprep.subr.bf16.mxu0 0
      %784 = vmatpush1.bf16.msra.mxu0 0
      %785 = vmatprep.mubr.bf16.mxu0 0
      %786 = vmatmul.mubr.bf16.gmra.mrb[0].mxu0 %v748
      %v787 = vpop.f32.mrb[0].mxu0
      %v788 = vadd.f32 0.0, %v787
      %v789 = vpop.f32.mrb[0].mxu0
      %v790 = vpop.f32.mrb[0].mxu0
      %v791 = vpop.f32.mrb[0].mxu0
      %792 = vdwg.mxu0
      %v794 = vsel %vm517, %v632, 0
      %v797 = vsel %vm588, %v633, 0
      %799 = vmatprep.subr.bf16.mxu0 0
      %800 = vmatpush1.bf16.msra.mxu0 %v797
      %801 = vmatprep.subr.bf16.mxu0 0
      %802 = vmatpush1.bf16.msra.mxu0 0
      %803 = vmatprep.subr.bf16.mxu0 0
      %804 = vmatpush1.bf16.msra.mxu0 0
      %805 = vmatprep.subr.bf16.mxu0 0
      %806 = vmatpush1.bf16.msra.mxu0 0
      %807 = vmatprep.subr.bf16.mxu0 0
      %808 = vmatpush1.bf16.msra.mxu0 0
      %809 = vmatprep.subr.bf16.mxu0 0
      %810 = vmatpush1.bf16.msra.mxu0 0
      %811 = vmatprep.subr.bf16.mxu0 0
      %812 = vmatpush1.bf16.msra.mxu0 0
      %813 = vmatprep.subr.bf16.mxu0 0
      %814 = vmatpush1.bf16.msra.mxu0 0
      %815 = vmatprep.subr.bf16.mxu0 0
      %816 = vmatpush1.bf16.msra.mxu0 0
      %817 = vmatprep.subr.bf16.mxu0 0
      %818 = vmatpush1.bf16.msra.mxu0 0
      %819 = vmatprep.subr.bf16.mxu0 0
      %820 = vmatpush1.bf16.msra.mxu0 0
      %821 = vmatprep.subr.bf16.mxu0 0
      %822 = vmatpush1.bf16.msra.mxu0 0
      %823 = vmatprep.subr.bf16.mxu0 0
      %824 = vmatpush1.bf16.msra.mxu0 0
      %825 = vmatprep.subr.bf16.mxu0 0
      %826 = vmatpush1.bf16.msra.mxu0 0
      %827 = vmatprep.subr.bf16.mxu0 0
      %828 = vmatpush1.bf16.msra.mxu0 0
      %829 = vmatprep.subr.bf16.mxu0 0
      %830 = vmatpush1.bf16.msra.mxu0 0
      %831 = vmatprep.mubr.bf16.mxu0 0
      %832 = vmatmul.mubr.bf16.gmra.mrb[0].mxu0 %v794
      %v833 = vpop.f32.mrb[0].mxu0
      %v834 = vadd.f32 %v788, %v833
      %v835 = vpop.f32.mrb[0].mxu0
      %v836 = vpop.f32.mrb[0].mxu0
      %v837 = vpop.f32.mrb[0].mxu0
      %838 = vdwg.mxu0
      %839 = vrot.lane.b32.xlu0 %v513, 112
      %v840 = vpop.permute.xlu0 %839
      %841 = vrot.lane.b32.xlu0 %v513, 80
      %v842 = vpop.permute.xlu0 %841
      %v844 = vsel %vm517, %v840, 0
      %v847 = vsel %vm517, %v842, 0
      %849 = vmatprep.subr.bf16.mxu0 0
      %850 = vmatpush1.bf16.xpose.msra.mxu0 %v847
      %851 = vmatprep.subr.bf16.mxu0 0
      %852 = vmatpush1.bf16.xpose.msra.mxu0 0
      %853 = vmatprep.subr.bf16.mxu0 0
      %854 = vmatpush1.bf16.xpose.msra.mxu0 0
      %855 = vmatprep.subr.bf16.mxu0 0
      %856 = vmatpush1.bf16.xpose.msra.mxu0 0
      %857 = vmatprep.subr.bf16.mxu0 0
      %858 = vmatpush1.bf16.xpose.msra.mxu0 0
      %859 = vmatprep.subr.bf16.mxu0 0
      %860 = vmatpush1.bf16.xpose.msra.mxu0 0
      %861 = vmatprep.subr.bf16.mxu0 0
      %862 = vmatpush1.bf16.xpose.msra.mxu0 0
      %863 = vmatprep.subr.bf16.mxu0 0
      %864 = vmatpush1.bf16.xpose.msra.mxu0 0
      %865 = vmatprep.subr.bf16.mxu0 0
      %866 = vmatpush1.bf16.xpose.msra.mxu0 0
      %867 = vmatprep.subr.bf16.mxu0 0
      %868 = vmatpush1.bf16.xpose.msra.mxu0 0
      %869 = vmatprep.subr.bf16.mxu0 0
      %870 = vmatpush1.bf16.xpose.msra.mxu0 0
      %871 = vmatprep.subr.bf16.mxu0 0
      %872 = vmatpush1.bf16.xpose.msra.mxu0 0
      %873 = vmatprep.subr.bf16.mxu0 0
      %874 = vmatpush1.bf16.xpose.msra.mxu0 0
      %875 = vmatprep.subr.bf16.mxu0 0
      %876 = vmatpush1.bf16.xpose.msra.mxu0 0
      %877 = vmatprep.subr.bf16.mxu0 0
      %878 = vmatpush1.bf16.xpose.msra.mxu0 0
      %879 = vmatprep.subr.bf16.mxu0 0
      %880 = vmatpush1.bf16.xpose.msra.mxu0 0
      %881 = vmatprep.mubr.bf16.mxu0 0
      %882 = vmatmul.mubr.bf16.gmra.mrb[0].mxu0 %v844
      %v883 = vpop.f32.mrb[0].mxu0
      %v884 = vadd.f32 %v439, %v883
      %v885 = vpop.f32.mrb[0].mxu0
      %v886 = vpop.f32.mrb[0].mxu0
      %v887 = vpop.f32.mrb[0].mxu0
      %888 = vdwg.mxu0
      %v889 = vadd.f32 %v884, %v568
      %v890 = vsel %vm517, %v889, -inf
      %891 = vmax.xlane.f32.xlu0 %v890
      %v892 = vpop.xlane.xlu0 %891
      %v893 = vsub.f32 %v889, %v892
      %v894 = vmul.f32 %v893, 1.442695
      %v895 = vpow.pop %v894
      %v896 = vsel %vm517, %v895, 0.0
      %897 = vadd.xlane.f32.xlu0 %v896
      %v898 = vpop.xlane.xlu0 %897
      %v899 = vrcp.pop %v898
      %v900 = vmul.f32 %v895, %v899
      %v901 = vpack.c.bf16 %v900, %v900
      %902 = vrot.lane.b32.xlu0 %v513, 48
      %v903 = vpop.permute.xlu0 %902
      %v905 = vsel %vm517, %v901, 0
      %v908 = vsel %vm588, %v903, 0
      %910 = vmatprep.subr.bf16.mxu0 0
      %911 = vmatpush1.bf16.msra.mxu0 %v908
      %912 = vmatprep.subr.bf16.mxu0 0
      %913 = vmatpush1.bf16.msra.mxu0 0
      %914 = vmatprep.subr.bf16.mxu0 0
      %915 = vmatpush1.bf16.msra.mxu0 0
      %916 = vmatprep.subr.bf16.mxu0 0
      %917 = vmatpush1.bf16.msra.mxu0 0
      %918 = vmatprep.subr.bf16.mxu0 0
      %919 = vmatpush1.bf16.msra.mxu0 0
      %920 = vmatprep.subr.bf16.mxu0 0
      %921 = vmatpush1.bf16.msra.mxu0 0
      %922 = vmatprep.subr.bf16.mxu0 0
      %923 = vmatpush1.bf16.msra.mxu0 0
      %924 = vmatprep.subr.bf16.mxu0 0
      %925 = vmatpush1.bf16.msra.mxu0 0
      %926 = vmatprep.subr.bf16.mxu0 0
      %927 = vmatpush1.bf16.msra.mxu0 0
      %928 = vmatprep.subr.bf16.mxu0 0
      %929 = vmatpush1.bf16.msra.mxu0 0
      %930 = vmatprep.subr.bf16.mxu0 0
      %931 = vmatpush1.bf16.msra.mxu0 0
      %932 = vmatprep.subr.bf16.mxu0 0
      %933 = vmatpush1.bf16.msra.mxu0 0
      %934 = vmatprep.subr.bf16.mxu0 0
      %935 = vmatpush1.bf16.msra.mxu0 0
      %936 = vmatprep.subr.bf16.mxu0 0
      %937 = vmatpush1.bf16.msra.mxu0 0
      %938 = vmatprep.subr.bf16.mxu0 0
      %939 = vmatpush1.bf16.msra.mxu0 0
      %940 = vmatprep.subr.bf16.mxu0 0
      %941 = vmatpush1.bf16.msra.mxu0 0
      %942 = vmatprep.mubr.bf16.mxu0 0
      %943 = vmatmul.mubr.bf16.gmra.mrb[0].mxu0 %v905
      %v944 = vpop.f32.mrb[0].mxu0
      %v945 = vadd.f32 0.0, %v944
      %v946 = vpop.f32.mrb[0].mxu0
      %v947 = vpop.f32.mrb[0].mxu0
      %v948 = vpop.f32.mrb[0].mxu0
      %949 = vdwg.mxu0
      %v950 = vpack.c.bf16 %v945, %v945
      %v951 = vpack.c.bf16 %v511, %v511
      %v953 = vsel %vm517, %v950, 0
      %v956 = vsel %vm588, %v951, 0
      %958 = vmatprep.subr.bf16.mxu0 0
      %959 = vmatpush1.bf16.msra.mxu0 %v956
      %960 = vmatprep.subr.bf16.mxu0 0
      %961 = vmatpush1.bf16.msra.mxu0 0
      %962 = vmatprep.subr.bf16.mxu0 0
      %963 = vmatpush1.bf16.msra.mxu0 0
      %964 = vmatprep.subr.bf16.mxu0 0
      %965 = vmatpush1.bf16.msra.mxu0 0
      %966 = vmatprep.subr.bf16.mxu0 0
      %967 = vmatpush1.bf16.msra.mxu0 0
      %968 = vmatprep.subr.bf16.mxu0 0
      %969 = vmatpush1.bf16.msra.mxu0 0
      %970 = vmatprep.subr.bf16.mxu0 0
      %971 = vmatpush1.bf16.msra.mxu0 0
      %972 = vmatprep.subr.bf16.mxu0 0
      %973 = vmatpush1.bf16.msra.mxu0 0
      %974 = vmatprep.subr.bf16.mxu0 0
      %975 = vmatpush1.bf16.msra.mxu0 0
      %976 = vmatprep.subr.bf16.mxu0 0
      %977 = vmatpush1.bf16.msra.mxu0 0
      %978 = vmatprep.subr.bf16.mxu0 0
      %979 = vmatpush1.bf16.msra.mxu0 0
      %980 = vmatprep.subr.bf16.mxu0 0
      %981 = vmatpush1.bf16.msra.mxu0 0
      %982 = vmatprep.subr.bf16.mxu0 0
      %983 = vmatpush1.bf16.msra.mxu0 0
      %984 = vmatprep.subr.bf16.mxu0 0
      %985 = vmatpush1.bf16.msra.mxu0 0
      %986 = vmatprep.subr.bf16.mxu0 0
      %987 = vmatpush1.bf16.msra.mxu0 0
      %988 = vmatprep.subr.bf16.mxu0 0
      %989 = vmatpush1.bf16.msra.mxu0 0
      %990 = vmatprep.mubr.bf16.mxu0 0
      %991 = vmatmul.mubr.bf16.gmra.mrb[0].mxu0 %v953
      %v992 = vpop.f32.mrb[0].mxu0
      %v993 = vadd.f32 0.0, %v992
      %v994 = vpop.f32.mrb[0].mxu0
      %v995 = vpop.f32.mrb[0].mxu0
      %v996 = vpop.f32.mrb[0].mxu0
      %997 = vdwg.mxu0
      %v998 = vadd.f32 %v834, %v993
      %999 = vrot.lane.b32.xlu0 %v513, 104
      %v1000 = vpop.permute.xlu0 %999
      %1001 = vrot.lane.b32.xlu0 %v513, 72
      %v1002 = vpop.permute.xlu0 %1001
      %v1004 = vsel %vm517, %v1000, 0
      %v1007 = vsel %vm517, %v1002, 0
      %1009 = vmatprep.subr.bf16.mxu0 0
      %1010 = vmatpush1.bf16.xpose.msra.mxu0 %v1007
      %1011 = vmatprep.subr.bf16.mxu0 0
      %1012 = vmatpush1.bf16.xpose.msra.mxu0 0
      %1013 = vmatprep.subr.bf16.mxu0 0
      %1014 = vmatpush1.bf16.xpose.msra.mxu0 0
      %1015 = vmatprep.subr.bf16.mxu0 0
      %1016 = vmatpush1.bf16.xpose.msra.mxu0 0
      %1017 = vmatprep.subr.bf16.mxu0 0
      %1018 = vmatpush1.bf16.xpose.msra.mxu0 0
      %1019 = vmatprep.subr.bf16.mxu0 0
      %1020 = vmatpush1.bf16.xpose.msra.mxu0 0
      %1021 = vmatprep.subr.bf16.mxu0 0
      %1022 = vmatpush1.bf16.xpose.msra.mxu0 0
      %1023 = vmatprep.subr.bf16.mxu0 0
      %1024 = vmatpush1.bf16.xpose.msra.mxu0 0
      %1025 = vmatprep.subr.bf16.mxu0 0
      %1026 = vmatpush1.bf16.xpose.msra.mxu0 0
      %1027 = vmatprep.subr.bf16.mxu0 0
      %1028 = vmatpush1.bf16.xpose.msra.mxu0 0
      %1029 = vmatprep.subr.bf16.mxu0 0
      %1030 = vmatpush1.bf16.xpose.msra.mxu0 0
      %1031 = vmatprep.subr.bf16.mxu0 0
      %1032 = vmatpush1.bf16.xpose.msra.mxu0 0
      %1033 = vmatprep.subr.bf16.mxu0 0
      %1034 = vmatpush1.bf16.xpose.msra.mxu0 0
      %1035 = vmatprep.subr.bf16.mxu0 0
      %1036 = vmatpush1.bf16.xpose.msra.mxu0 0
      %1037 = vmatprep.subr.bf16.mxu0 0
      %1038 = vmatpush1.bf16.xpose.msra.mxu0 0
      %1039 = vmatprep.subr.bf16.mxu0 0
      %1040 = vmatpush1.bf16.xpose.msra.mxu0 0
      %1041 = vmatprep.mubr.bf16.mxu0 0
      %1042 = vmatmul.mubr.bf16.gmra.mrb[0].mxu0 %v1004
      %v1043 = vpop.f32.mrb[0].mxu0
      %v1044 = vadd.f32 %v440, %v1043
      %v1045 = vpop.f32.mrb[0].mxu0
      %v1046 = vpop.f32.mrb[0].mxu0
      %v1047 = vpop.f32.mrb[0].mxu0
      %1048 = vdwg.mxu0
      %v1049 = vadd.f32 %v1044, %v568
      %v1050 = vsel %vm517, %v1049, -inf
      %1051 = vmax.xlane.f32.xlu0 %v1050
      %v1052 = vpop.xlane.xlu0 %1051
      %v1053 = vsub.f32 %v1049, %v1052
      %v1054 = vmul.f32 %v1053, 1.442695
      %v1055 = vpow.pop %v1054
      %v1056 = vsel %vm517, %v1055, 0.0
      %1057 = vadd.xlane.f32.xlu0 %v1056
      %v1058 = vpop.xlane.xlu0 %1057
      %v1059 = vrcp.pop %v1058
      %v1060 = vmul.f32 %v1055, %v1059
      %v1061 = vpack.c.bf16 %v1060, %v1060
      %1062 = vrot.lane.b32.xlu0 %v513, 40
      %v1063 = vpop.permute.xlu0 %1062
      %v1065 = vsel %vm517, %v1061, 0
      %v1068 = vsel %vm588, %v1063, 0
      %1070 = vmatprep.subr.bf16.mxu0 0
      %1071 = vmatpush1.bf16.msra.mxu0 %v1068
      %1072 = vmatprep.subr.bf16.mxu0 0
      %1073 = vmatpush1.bf16.msra.mxu0 0
      %1074 = vmatprep.subr.bf16.mxu0 0
      %1075 = vmatpush1.bf16.msra.mxu0 0
      %1076 = vmatprep.subr.bf16.mxu0 0
      %1077 = vmatpush1.bf16.msra.mxu0 0
      %1078 = vmatprep.subr.bf16.mxu0 0
      %1079 = vmatpush1.bf16.msra.mxu0 0
      %1080 = vmatprep.subr.bf16.mxu0 0
      %1081 = vmatpush1.bf16.msra.mxu0 0
      %1082 = vmatprep.subr.bf16.mxu0 0
      %1083 = vmatpush1.bf16.msra.mxu0 0
      %1084 = vmatprep.subr.bf16.mxu0 0
      %1085 = vmatpush1.bf16.msra.mxu0 0
      %1086 = vmatprep.subr.bf16.mxu0 0
      %1087 = vmatpush1.bf16.msra.mxu0 0
      %1088 = vmatprep.subr.bf16.mxu0 0
      %1089 = vmatpush1.bf16.msra.mxu0 0
      %1090 = vmatprep.subr.bf16.mxu0 0
      %1091 = vmatpush1.bf16.msra.mxu0 0
      %1092 = vmatprep.subr.bf16.mxu0 0
      %1093 = vmatpush1.bf16.msra.mxu0 0
      %1094 = vmatprep.subr.bf16.mxu0 0
      %1095 = vmatpush1.bf16.msra.mxu0 0
      %1096 = vmatprep.subr.bf16.mxu0 0
      %1097 = vmatpush1.bf16.msra.mxu0 0
      %1098 = vmatprep.subr.bf16.mxu0 0
      %1099 = vmatpush1.bf16.msra.mxu0 0
      %1100 = vmatprep.subr.bf16.mxu0 0
      %1101 = vmatpush1.bf16.msra.mxu0 0
      %1102 = vmatprep.mubr.bf16.mxu0 0
      %1103 = vmatmul.mubr.bf16.gmra.mrb[0].mxu0 %v1065
      %v1104 = vpop.f32.mrb[0].mxu0
      %v1105 = vadd.f32 0.0, %v1104
      %v1106 = vpop.f32.mrb[0].mxu0
      %v1107 = vpop.f32.mrb[0].mxu0
      %v1108 = vpop.f32.mrb[0].mxu0
      %1109 = vdwg.mxu0
      %v1110 = vpack.c.bf16 %v1105, %v1105
      %v1111 = vpack.c.bf16 %v512, %v512
      %v1113 = vsel %vm517, %v1110, 0
      %v1116 = vsel %vm588, %v1111, 0
      %1118 = vmatprep.subr.bf16.mxu0 0
      %1119 = vmatpush1.bf16.msra.mxu0 %v1116
      %1120 = vmatprep.subr.bf16.mxu0 0
      %1121 = vmatpush1.bf16.msra.mxu0 0
      %1122 = vmatprep.subr.bf16.mxu0 0
      %1123 = vmatpush1.bf16.msra.mxu0 0
      %1124 = vmatprep.subr.bf16.mxu0 0
      %1125 = vmatpush1.bf16.msra.mxu0 0
      %1126 = vmatprep.subr.bf16.mxu0 0
      %1127 = vmatpush1.bf16.msra.mxu0 0
      %1128 = vmatprep.subr.bf16.mxu0 0
      %1129 = vmatpush1.bf16.msra.mxu0 0
      %1130 = vmatprep.subr.bf16.mxu0 0
      %1131 = vmatpush1.bf16.msra.mxu0 0
      %1132 = vmatprep.subr.bf16.mxu0 0
      %1133 = vmatpush1.bf16.msra.mxu0 0
      %1134 = vmatprep.subr.bf16.mxu0 0
      %1135 = vmatpush1.bf16.msra.mxu0 0
      %1136 = vmatprep.subr.bf16.mxu0 0
      %1137 = vmatpush1.bf16.msra.mxu0 0
      %1138 = vmatprep.subr.bf16.mxu0 0
      %1139 = vmatpush1.bf16.msra.mxu0 0
      %1140 = vmatprep.subr.bf16.mxu0 0
      %1141 = vmatpush1.bf16.msra.mxu0 0
      %1142 = vmatprep.subr.bf16.mxu0 0
      %1143 = vmatpush1.bf16.msra.mxu0 0
      %1144 = vmatprep.subr.bf16.mxu0 0
      %1145 = vmatpush1.bf16.msra.mxu0 0
      %1146 = vmatprep.subr.bf16.mxu0 0
      %1147 = vmatpush1.bf16.msra.mxu0 0
      %1148 = vmatprep.subr.bf16.mxu0 0
      %1149 = vmatpush1.bf16.msra.mxu0 0
      %1150 = vmatprep.mubr.bf16.mxu0 0
      %1151 = vmatmul.mubr.bf16.gmra.mrb[0].mxu0 %v1113
      %v1152 = vpop.f32.mrb[0].mxu0
      %v1153 = vadd.f32 0.0, %v1152
      %v1154 = vpop.f32.mrb[0].mxu0
      %v1155 = vpop.f32.mrb[0].mxu0
      %v1156 = vpop.f32.mrb[0].mxu0
      %1157 = vdwg.mxu0
      %v1158 = vadd.f32 %v998, %v1153
      %v1159 = vadd.f32 %v435, %v1158
      %v1160 = vld [vmem:[%s6] sm:$0x1]
      %v1161 = vmul.f32 %v1159, %v1159
      %v1162 = vsel %vm443, %v1161, 0.0
      %1163 = vadd.xlane.f32.xlu0 %v1162
      %v1164 = vpop.xlane.xlu0 %1163
      %v1165 = vmul.f32 %v1164, %v447
      %v1166 = vadd.f32 %v1165, 1e-06
      %v1167 = vrsqrt.pop %v1166
      %v1168 = vmul.f32 %v1159, %v1167
      %v1170 = vlaneseq
      %v1171 = vshrl.u32 %v1170, 7
      %v1172 = vsub.s32 0, %v1171
      %v1173 = vrot.slane %v1160, %v1172
      %v1175 = vmul.f32 %v1168, %v1173
      %v1176 = vld [vmem:[%s7] sm:$0xff]
      %v1177 = vld [vmem:[%s7 + $0x8] sm:$0xff]
      %v1178 = vld [vmem:[%s7 + $0x10] sm:$0xff]
      %v1179 = vld [vmem:[%s7 + $0x18] sm:$0xff]
      %v1180 = vpack.c.bf16 %v1175, %v1175
      %v1181 = vpack.c.bf16 %v1177, %v1176
      %v1182 = vpack.c.bf16 %v1179, %v1178
      %v1184 = vsel %vm443, %v1180, 0
      %1186 = vmatprep.subr.bf16.mxu0 0
      %1187 = vmatpush1.bf16.msra.mxu0 %v1181
      %1188 = vmatprep.subr.bf16.mxu0 0
      %1189 = vmatpush1.bf16.msra.mxu0 %v1182
      %1190 = vmatprep.subr.bf16.mxu0 0
      %1191 = vmatpush1.bf16.msra.mxu0 0
      %1192 = vmatprep.subr.bf16.mxu0 0
      %1193 = vmatpush1.bf16.msra.mxu0 0
      %1194 = vmatprep.subr.bf16.mxu0 0
      %1195 = vmatpush1.bf16.msra.mxu0 0
      %1196 = vmatprep.subr.bf16.mxu0 0
      %1197 = vmatpush1.bf16.msra.mxu0 0
      %1198 = vmatprep.subr.bf16.mxu0 0
      %1199 = vmatpush1.bf16.msra.mxu0 0
      %1200 = vmatprep.subr.bf16.mxu0 0
      %1201 = vmatpush1.bf16.msra.mxu0 0
      %1202 = vmatprep.subr.bf16.mxu0 0
      %1203 = vmatpush1.bf16.msra.mxu0 0
      %1204 = vmatprep.subr.bf16.mxu0 0
      %1205 = vmatpush1.bf16.msra.mxu0 0
      %1206 = vmatprep.subr.bf16.mxu0 0
      %1207 = vmatpush1.bf16.msra.mxu0 0
      %1208 = vmatprep.subr.bf16.mxu0 0
      %1209 = vmatpush1.bf16.msra.mxu0 0
      %1210 = vmatprep.subr.bf16.mxu0 0
      %1211 = vmatpush1.bf16.msra.mxu0 0
      %1212 = vmatprep.subr.bf16.mxu0 0
      %1213 = vmatpush1.bf16.msra.mxu0 0
      %1214 = vmatprep.subr.bf16.mxu0 0
      %1215 = vmatpush1.bf16.msra.mxu0 0
      %1216 = vmatprep.subr.bf16.mxu0 0
      %1217 = vmatpush1.bf16.msra.mxu0 0
      %1218 = vmatprep.mubr.bf16.mxu0 0
      %1219 = vmatmul.mubr.bf16.gmra.mrb[0].mxu0 %v1184
      %v1220 = vpop.f32.mrb[0].mxu0
      %v1221 = vadd.f32 0.0, %v1220
      %v1222 = vpop.f32.mrb[0].mxu0
      %v1223 = vpop.f32.mrb[0].mxu0
      %v1224 = vpop.f32.mrb[0].mxu0
      %1225 = vdwg.mxu0
      %v1226 = vmax.f32 %v1221, 0.0
      %v1227 = vld [vmem:[%s8] sm:$0xff]
      %v1228 = vld [vmem:[%s8 + $0x8] sm:$0xff]
      %v1229 = vld [vmem:[%s8 + $0x10] sm:$0xff]
      %v1230 = vld [vmem:[%s8 + $0x18] sm:$0xff]
      %v1231 = vld [vmem:[%s8 + $0x20] sm:$0xff]
      %v1232 = vld [vmem:[%s8 + $0x28] sm:$0xff]
      %v1233 = vld [vmem:[%s8 + $0x30] sm:$0xff]
      %v1234 = vld [vmem:[%s8 + $0x38] sm:$0xff]
      %v1235 = vpack.c.bf16 %v1226, %v1226
      %v1236 = vpack.c.bf16 %v1228, %v1227
      %v1237 = vpack.c.bf16 %v1230, %v1229
      %v1238 = vpack.c.bf16 %v1232, %v1231
      %v1239 = vpack.c.bf16 %v1234, %v1233
      %vm1240 = vcmask 523264
      %v1242 = vsel %vm1240, %v1235, 0
      %1244 = vmatprep.subr.bf16.mxu0 0
      %1245 = vmatpush1.bf16.msra.mxu0 %v1236
      %1246 = vmatprep.subr.bf16.mxu0 0
      %1247 = vmatpush1.bf16.msra.mxu0 %v1237
      %1248 = vmatprep.subr.bf16.mxu0 0
      %1249 = vmatpush1.bf16.msra.mxu0 %v1238
      %1250 = vmatprep.subr.bf16.mxu0 0
      %1251 = vmatpush1.bf16.msra.mxu0 %v1239
      %1252 = vmatprep.subr.bf16.mxu0 0
      %1253 = vmatpush1.bf16.msra.mxu0 0
      %1254 = vmatprep.subr.bf16.mxu0 0
      %1255 = vmatpush1.bf16.msra.mxu0 0
      %1256 = vmatprep.subr.bf16.mxu0 0
      %1257 = vmatpush1.bf16.msra.mxu0 0
      %1258 = vmatprep.subr.bf16.mxu0 0
      %1259 = vmatpush1.bf16.msra.mxu0 0
      %1260 = vmatprep.subr.bf16.mxu0 0
      %1261 = vmatpush1.bf16.msra.mxu0 0
      %1262 = vmatprep.subr.bf16.mxu0 0
      %1263 = vmatpush1.bf16.msra.mxu0 0
      %1264 = vmatprep.subr.bf16.mxu0 0
      %1265 = vmatpush1.bf16.msra.mxu0 0
      %1266 = vmatprep.subr.bf16.mxu0 0
      %1267 = vmatpush1.bf16.msra.mxu0 0
      %1268 = vmatprep.subr.bf16.mxu0 0
      %1269 = vmatpush1.bf16.msra.mxu0 0
      %1270 = vmatprep.subr.bf16.mxu0 0
      %1271 = vmatpush1.bf16.msra.mxu0 0
      %1272 = vmatprep.subr.bf16.mxu0 0
      %1273 = vmatpush1.bf16.msra.mxu0 0
      %1274 = vmatprep.subr.bf16.mxu0 0
      %1275 = vmatpush1.bf16.msra.mxu0 0
      %1276 = vmatprep.mubr.bf16.mxu0 0
      %1277 = vmatmul.mubr.bf16.gmra.mrb[0].mxu0 %v1242
      %v1278 = vpop.f32.mrb[0].mxu0
      %v1279 = vadd.f32 0.0, %v1278
      %v1280 = vpop.f32.mrb[0].mxu0
      %v1281 = vpop.f32.mrb[0].mxu0
      %v1282 = vpop.f32.mrb[0].mxu0
      %1283 = vdwg.mxu0
      %v1284 = vadd.f32 %v1159, %v1279
      %v1285 = vld [vmem:[%s9] sm:$0x1]
      %v1286 = vmul.f32 %v1284, %v1284
      %v1287 = vsel %vm443, %v1286, 0.0
      %1288 = vadd.xlane.f32.xlu0 %v1287
      %v1289 = vpop.xlane.xlu0 %1288
      %v1290 = vmul.f32 %v1289, %v447
      %v1291 = vadd.f32 %v1290, 1e-06
      %v1292 = vrsqrt.pop %v1291
      %v1293 = vmul.f32 %v1284, %v1292
      %v1295 = vlaneseq
      %v1296 = vshrl.u32 %v1295, 7
      %v1297 = vsub.s32 0, %v1296
      %v1298 = vrot.slane %v1285, %v1297
      %v1300 = vmul.f32 %v1293, %v1298
      %v1301 = vld [vmem:[%s10] sm:$0xff]
      %v1302 = vld [vmem:[%s10 + $0x8] sm:$0xff]
      %v1303 = vld [vmem:[%s10 + $0x10] sm:$0xff]
      %v1304 = vld [vmem:[%s10 + $0x18] sm:$0xff]
      %v1305 = vpack.c.bf16 %v1300, %v1300
      %v1306 = vpack.c.bf16 %v1302, %v1301
      %v1307 = vpack.c.bf16 %v1304, %v1303
      %v1309 = vsel %vm443, %v1305, 0
      %1311 = vmatprep.subr.bf16.mxu0 0
      %1312 = vmatpush1.bf16.msra.mxu0 %v1306
      %1313 = vmatprep.subr.bf16.mxu0 0
      %1314 = vmatpush1.bf16.msra.mxu0 %v1307
      %1315 = vmatprep.subr.bf16.mxu0 0
      %1316 = vmatpush1.bf16.msra.mxu0 0
      %1317 = vmatprep.subr.bf16.mxu0 0
      %1318 = vmatpush1.bf16.msra.mxu0 0
      %1319 = vmatprep.subr.bf16.mxu0 0
      %1320 = vmatpush1.bf16.msra.mxu0 0
      %1321 = vmatprep.subr.bf16.mxu0 0
      %1322 = vmatpush1.bf16.msra.mxu0 0
      %1323 = vmatprep.subr.bf16.mxu0 0
      %1324 = vmatpush1.bf16.msra.mxu0 0
      %1325 = vmatprep.subr.bf16.mxu0 0
      %1326 = vmatpush1.bf16.msra.mxu0 0
      %1327 = vmatprep.subr.bf16.mxu0 0
      %1328 = vmatpush1.bf16.msra.mxu0 0
      %1329 = vmatprep.subr.bf16.mxu0 0
      %1330 = vmatpush1.bf16.msra.mxu0 0
      %1331 = vmatprep.subr.bf16.mxu0 0
      %1332 = vmatpush1.bf16.msra.mxu0 0
      %1333 = vmatprep.subr.bf16.mxu0 0
      %1334 = vmatpush1.bf16.msra.mxu0 0
      %1335 = vmatprep.subr.bf16.mxu0 0
      %1336 = vmatpush1.bf16.msra.mxu0 0
      %1337 = vmatprep.subr.bf16.mxu0 0
      %1338 = vmatpush1.bf16.msra.mxu0 0
      %1339 = vmatprep.subr.bf16.mxu0 0
      %1340 = vmatpush1.bf16.msra.mxu0 0
      %1341 = vmatprep.subr.bf16.mxu0 0
      %1342 = vmatpush1.bf16.msra.mxu0 0
      %1343 = vmatprep.mubr.bf16.mxu0 0
      %1344 = vmatmul.mubr.bf16.gmra.mrb[0].mxu0 %v1309
      %v1345 = vpop.f32.mrb[0].mxu0
      %v1346 = vadd.f32 0.0, %v1345
      %v1347 = vpop.f32.mrb[0].mxu0
      %v1348 = vpop.f32.mrb[0].mxu0
      %v1349 = vpop.f32.mrb[0].mxu0
      %1350 = vdwg.mxu0
      %1351 = vst.msk [vmem:[%s429] sm:$0xff] %vm443, %v1346
      %1353 = vrot.lane.b32.xlu0 %v1346, 96
      %v1354 = vpop.permute.xlu0 %1353
      %1356 = vst.msk [vmem:[%s433] sm:$0xff] %vm443, %v1354
      %p1357 = scmp.lt.s32.totalorder %s24, 3
      %s1358 = scalar_select %p1357, %s24, 3
      %s1359 = smul.addr %s1358, 8
      %s1360 = scalar_lea.vmem %s11, %s1359
      %p1361 = scmp.lt.s32.totalorder %s24, 3
      %s1362 = scalar_select %p1361, %s24, 3
      %s1363 = smul.addr %s1362, 8
      %s1364 = scalar_lea.vmem %s12, %s1363
      // Predicated region
      $region65: #{_generate.1} parent=63 // pred_check
        %p1365 = pneg %p283
      $region66: #{_generate.1} parent=63 // pred_check_branch
        %1367 = sbr.rel (%p1365) target = $region68
      $region67: #{_generate.1} parent=63 // pred_region
        _
      $region68: #{_generate.1} parent=63 // pred_fallthru
        _
      // Predicated region
      $region69: #{_generate.1} parent=63 // pred_check
        %p1368 = pneg %p309
      $region70: #{_generate.1} parent=63 // pred_check_branch
        %1370 = sbr.rel (%p1368) target = $region72
      $region71: #{_generate.1} parent=63 // pred_region
        _
      $region72: #{_generate.1} parent=63 // pred_fallthru
        _
    $region64: #{_generate.1} parent=5 // pred_fallthru
      _
    %p1371 = scmp.le.s32.totalorder 2, %s19
    // Predicated region
    $region73: #{_generate.1} parent=5 // pred_check
      %p1372 = pneg %p1371
    $region74: #{_generate.1} parent=5 // pred_check_branch
      %1374 = sbr.rel (%p1372) target = $region76
    $region75: #{_generate.1} parent=5 // pred_region
      %s1375 = ssub.s32 %s19, 2
      // Predicated region
      $region77: #{_generate.1} parent=75 // pred_check
        %p1376 = pneg %p289
      $region78: #{_generate.1} parent=75 // pred_check_branch
        %1378 = sbr.rel (%p1376) target = $region80
      $region79: #{_generate.1} parent=75 // pred_region
        %p1379 = scmp.lt.s32.totalorder %s25, 3
        %s1380 = scalar_select %p1379, %s25, 3
        %s1381 = smul.addr %s1380, 8
        %s1382 = scalar_lea.vmem %s11, %s1381
      $region80: #{_generate.1} parent=75 // pred_fallthru
        _
      // Predicated region
      $region81: #{_generate.1} parent=75 // pred_check
        %p1383 = pneg %p315
      $region82: #{_generate.1} parent=75 // pred_check_branch
        %1385 = sbr.rel (%p1383) target = $region84
      $region83: #{_generate.1} parent=75 // pred_region
        %p1386 = scmp.lt.s32.totalorder %s25, 3
        %s1387 = scalar_select %p1386, %s25, 3
        %s1388 = smul.addr %s1387, 8
        %s1389 = scalar_lea.vmem %s12, %s1388
      $region84: #{_generate.1} parent=75 // pred_fallthru
        _
    $region76: #{_generate.1} parent=5 // pred_fallthru
      _
  $region6: #{_generate.1} parent=0 // loop_footer
    %s23 = sadd.s32 1, %s19
  $region7: #{_generate.1} parent=0 // loop_footer_branch
    %18 = sbr.rel target = $region3
  $region8: #{_generate.1} parent=0 // loop_exit
    _

// kernel: closed_call.25
$region0: #{closed_call.25}
  #allocation0 [shape = 'u32[]', space=smem, size = 0x4, offset = 0x4, fixed_abs, tag = 'smem constant byte address 0x4 - core index']
  #allocation1 [shape = 'u32[144,128]{1,0:T(1,128)}', space=vmem, size = 0x12000, scoped, tag = 'internal scratch']
  #allocation2 [shape = 's32[1]{0}', space=sflag, size = 0x4, scoped, tag = 'scoped memory for closed_call.25']
  #allocation3 [shape = 's32[1]{0:T(128)S(6)}', space=smem, size = 0x200, scoped, tag = 'prefetched SMEM operand 0']
  %s0 = inlined_call_operand.<no memory space> [shape: s32[1], index: 0, kind: input, shape index: {}]
  %s1 = inlined_call_operand.vmem [shape: f32[4,1,32], index: 1, kind: input, shape index: {}]
  %s2 = inlined_call_operand.vmem [shape: f32[4,8], index: 2, kind: input, shape index: {}]
  %s3 = inlined_call_operand.vmem [shape: f32[4,1,8], index: 3, kind: input, shape index: {}]
  %s4 = inlined_call_operand.vmem [shape: f32[4,8,32], index: 4, kind: input, shape index: {}]
  %s5 = inlined_call_operand.vmem [shape: f32[4,8,32], index: 5, kind: input, shape index: {}]
  %s6 = inlined_call_operand.vmem [shape: f32[4,8,32], index: 6, kind: input, shape index: {}]
  %s7 = inlined_call_operand.vmem [shape: f32[4,8,32], index: 7, kind: input, shape index: {}]
  %s8 = inlined_call_operand.vmem [shape: f32[1,32], index: 8, kind: input, shape index: {}]
  %s9 = inlined_call_operand.vmem [shape: f32[32,96], index: 9, kind: input, shape index: {}]
  %s10 = inlined_call_operand.vmem [shape: f32[32,32], index: 10, kind: input, shape index: {}]
  %s11 = inlined_call_operand.vmem [shape: f32[1,32], index: 11, kind: input, shape index: {}]
  %s12 = inlined_call_operand.vmem [shape: f32[32,32], index: 12, kind: input, shape index: {}]
  %s13 = inlined_call_operand.vmem [shape: f32[32,32], index: 13, kind: input, shape index: {}]
  %s14 = inlined_call_operand.vmem [shape: f32[1,32], index: 14, kind: input, shape index: {}]
  %s15 = inlined_call_operand.vmem [shape: f32[32,64], index: 15, kind: input, shape index: {}]
  %s16 = inlined_call_operand.vmem [shape: f32[64,32], index: 16, kind: input, shape index: {}]
  %s17 = inlined_call_operand.vmem [shape: f32[1,32], index: 17, kind: input, shape index: {}]
  %s18 = inlined_call_operand.vmem [shape: f32[32,128], index: 18, kind: input, shape index: {}]
  %s19 = inlined_call_operand.vmem [shape: f32[4,1,128], index: 19, kind: output, shape index: {0}]
  %s20 = inlined_call_operand.vmem [shape: f32[4,8,32], index: 20, kind: output, shape index: {1}]
  %s21 = inlined_call_operand.vmem [shape: f32[4,8,32], index: 21, kind: output, shape index: {2}]
  %22 = xla_tuple %s19, %s20, %s21
  %s23 = sld [smem:[#allocation0]]
  $region121: #{closed_call.25} parent=0
    _
  %s25 = ssub.s32 1, %s23
  %s26 = scalar_select 0, %s25, %s23
  %27 = sst [smem:[#allocation3]] %s0
  loop: start=0, step=1, limit=6
  $region2: #{closed_call.25} parent=0 // loop_pre_header
    _
  $region3: #{closed_call.25} parent=0 // loop_header
    %s29 = sphi 0, %s33
    %p30 = scmp.ge.s32.totalorder %s29, 6
    %s39 = sphi 0, %s41
    %s42 = sphi 0, %s39
    %s43 = sphi 0, %s42
    %s59 = sphi 0, %s43
    %s63 = sphi 0, %s63
    %s65 = sphi 0, %s63
    %s66 = sphi 0, %s65
    %s80 = sphi 0, %s66
    %s86 = sphi 0, %s88
    %s89 = sphi 0, %s86
    %s90 = sphi 0, %s89
    %s106 = sphi 0, %s90
    %s112 = sphi 0, %s114
    %s115 = sphi 0, %s112
    %s116 = sphi 0, %s115
    %s132 = sphi 0, %s116
    %s138 = sphi 0, %s140
    %s141 = sphi 0, %s138
    %s142 = sphi 0, %s141
    %s158 = sphi 0, %s142
    %s164 = sphi 0, %s166
    %s167 = sphi 0, %s164
    %s168 = sphi 0, %s167
    %s184 = sphi 0, %s168
    %s190 = sphi 0, %s192
    %s193 = sphi 0, %s190
    %s194 = sphi 0, %s193
    %s210 = sphi 0, %s194
    %s214 = sphi 0, %s214
    %s216 = sphi 0, %s214
    %s217 = sphi 0, %s216
    %s231 = sphi 0, %s217
    %s235 = sphi 0, %s235
    %s237 = sphi 0, %s235
    %s238 = sphi 0, %s237
    %s252 = sphi 0, %s238
    %s256 = sphi 0, %s256
    %s258 = sphi 0, %s256
    %s259 = sphi 0, %s258
    %s273 = sphi 0, %s259
    %s277 = sphi 0, %s277
    %s279 = sphi 0, %s277
    %s280 = sphi 0, %s279
    %s294 = sphi 0, %s280
    %s298 = sphi 0, %s298
    %s300 = sphi 0, %s298
    %s301 = sphi 0, %s300
    %s315 = sphi 0, %s301
    %s319 = sphi 0, %s319
    %s321 = sphi 0, %s319
    %s322 = sphi 0, %s321
    %s336 = sphi 0, %s322
    %s340 = sphi 0, %s340
    %s342 = sphi 0, %s340
    %s343 = sphi 0, %s342
    %s357 = sphi 0, %s343
    %s361 = sphi 0, %s361
    %s363 = sphi 0, %s361
    %s364 = sphi 0, %s363
    %s378 = sphi 0, %s364
    %s382 = sphi 0, %s382
    %s384 = sphi 0, %s382
    %s385 = sphi 0, %s384
    %s399 = sphi 0, %s385
    %s403 = sphi 0, %s403
    %s405 = sphi 0, %s403
    %s406 = sphi 0, %s405
    %s420 = sphi 0, %s406
    %s424 = sphi 0, %s424
    %s426 = sphi 0, %s424
    %s427 = sphi 0, %s426
    %s441 = sphi 0, %s427
    %s447 = sphi 0, %s449
    %s450 = sphi 0, %s447
    %s451 = sphi 0, %s450
    %s467 = sphi 0, %s451
    %s473 = sphi 0, %s475
    %s476 = sphi 0, %s473
    %s477 = sphi 0, %s476
    %s493 = sphi 0, %s477
    %s499 = sphi 0, %s501
    %s502 = sphi 0, %s499
    %s503 = sphi 0, %s502
    %s519 = sphi 0, %s503
  $region4: #{closed_call.25} parent=0 // loop_header_branch
    %32 = sbr.rel (%p30) target = $region8
  $region5: #{closed_call.25} parent=0 // loop_body
    %s34 = ssub.s32 %s29, 1
    %s35 = ssub.s32 %s29, 2
    %s36 = sadd.s32 %s29, 1
    %s37 = ssub.s32 %s29, %s36
    %p38 = scmp.eq.s32.totalorder %s37, 0
    %s40 = sadd.s32 %s39, 1
    %s41 = scalar_select %p38, %s39, %s40
    %p44 = pneg %p38
    %p45 = scmp.eq.s32.totalorder %s29, 3
    %p46 = por %p44, %p45
    %p47 = scmp.ne.s32.totalorder %s39, %s42
    %p48 = scmp.eq.s32.totalorder %s29, 0
    %p49 = por %p47, %p48
    %p50 = scmp.ne.s32.totalorder %s39, %s42
    %p51 = scmp.eq.s32.totalorder %s34, 3
    %p52 = por %p50, %p51
    %p53 = scmp.ne.s32.totalorder %s42, %s43
    %p54 = scmp.eq.s32.totalorder %s34, 0
    %p55 = por %p53, %p54
    %p56 = scmp.ne.s32.totalorder %s42, %s43
    %p57 = scmp.eq.s32.totalorder %s35, 3
    %p58 = por %p56, %p57
    %p60 = scmp.ne.s32.totalorder %s43, %s59
    %p61 = scmp.eq.s32.totalorder %s35, 0
    %p62 = por %p60, %p61
    %s64 = sadd.s32 %s63, 1
    %p67 = scmp.eq.s32.totalorder %s29, 3
    %p68 = scmp.ne.s32.totalorder %s63, %s65
    %p69 = scmp.eq.s32.totalorder %s29, 0
    %p70 = por %p68, %p69
    %p71 = scmp.ne.s32.totalorder %s63, %s65
    %p72 = scmp.eq.s32.totalorder %s34, 3
    %p73 = por %p71, %p72
    %p74 = scmp.ne.s32.totalorder %s65, %s66
    %p75 = scmp.eq.s32.totalorder %s34, 0
    %p76 = por %p74, %p75
    %p77 = scmp.ne.s32.totalorder %s65, %s66
    %p78 = scmp.eq.s32.totalorder %s35, 3
    %p79 = por %p77, %p78
    %p81 = scmp.ne.s32.totalorder %s66, %s80
    %p82 = scmp.eq.s32.totalorder %s35, 0
    %p83 = por %p81, %p82
    %s84 = ssub.s32 %s29, %s36
    %p85 = scmp.eq.s32.totalorder %s84, 0
    %s87 = sadd.s32 %s86, 1
    %s88 = scalar_select %p85, %s86, %s87
    %p91 = pneg %p85
    %p92 = scmp.eq.s32.totalorder %s29, 3
    %p93 = por %p91, %p92
    %p94 = scmp.ne.s32.totalorder %s86, %s89
    %p95 = scmp.eq.s32.totalorder %s29, 0
    %p96 = por %p94, %p95
    %p97 = scmp.ne.s32.totalorder %s86, %s89
    %p98 = scmp.eq.s32.totalorder %s34, 3
    %p99 = por %p97, %p98
    %p100 = scmp.ne.s32.totalorder %s89, %s90
    %p101 = scmp.eq.s32.totalorder %s34, 0
    %p102 = por %p100, %p101
    %p103 = scmp.ne.s32.totalorder %s89, %s90
    %p104 = scmp.eq.s32.totalorder %s35, 3
    %p105 = por %p103, %p104
    %p107 = scmp.ne.s32.totalorder %s90, %s106
    %p108 = scmp.eq.s32.totalorder %s35, 0
    %p109 = por %p107, %p108
    %s110 = ssub.s32 %s29, %s36
    %p111 = scmp.eq.s32.totalorder %s110, 0
    %s113 = sadd.s32 %s112, 1
    %s114 = scalar_select %p111, %s112, %s113
    %p117 = pneg %p111
    %p118 = scmp.eq.s32.totalorder %s29, 3
    %p119 = por %p117, %p118
    %p120 = scmp.ne.s32.totalorder %s112, %s115
    %p121 = scmp.eq.s32.totalorder %s29, 0
    %p122 = por %p120, %p121
    %p123 = scmp.ne.s32.totalorder %s112, %s115
    %p124 = scmp.eq.s32.totalorder %s34, 3
    %p125 = por %p123, %p124
    %p126 = scmp.ne.s32.totalorder %s115, %s116
    %p127 = scmp.eq.s32.totalorder %s34, 0
    %p128 = por %p126, %p127
    %p129 = scmp.ne.s32.totalorder %s115, %s116
    %p130 = scmp.eq.s32.totalorder %s35, 3
    %p131 = por %p129, %p130
    %p133 = scmp.ne.s32.totalorder %s116, %s132
    %p134 = scmp.eq.s32.totalorder %s35, 0
    %p135 = por %p133, %p134
    %s136 = ssub.s32 %s29, %s36
    %p137 = scmp.eq.s32.totalorder %s136, 0
    %s139 = sadd.s32 %s138, 1
    %s140 = scalar_select %p137, %s138, %s139
    %p143 = pneg %p137
    %p144 = scmp.eq.s32.totalorder %s29, 3
    %p145 = por %p143, %p144
    %p146 = scmp.ne.s32.totalorder %s138, %s141
    %p147 = scmp.eq.s32.totalorder %s29, 0
    %p148 = por %p146, %p147
    %p149 = scmp.ne.s32.totalorder %s138, %s141
    %p150 = scmp.eq.s32.totalorder %s34, 3
    %p151 = por %p149, %p150
    %p152 = scmp.ne.s32.totalorder %s141, %s142
    %p153 = scmp.eq.s32.totalorder %s34, 0
    %p154 = por %p152, %p153
    %p155 = scmp.ne.s32.totalorder %s141, %s142
    %p156 = scmp.eq.s32.totalorder %s35, 3
    %p157 = por %p155, %p156
    %p159 = scmp.ne.s32.totalorder %s142, %s158
    %p160 = scmp.eq.s32.totalorder %s35, 0
    %p161 = por %p159, %p160
    %s162 = ssub.s32 %s29, %s36
    %p163 = scmp.eq.s32.totalorder %s162, 0
    %s165 = sadd.s32 %s164, 1
    %s166 = scalar_select %p163, %s164, %s165
    %p169 = pneg %p163
    %p170 = scmp.eq.s32.totalorder %s29, 3
    %p171 = por %p169, %p170
    %p172 = scmp.ne.s32.totalorder %s164, %s167
    %p173 = scmp.eq.s32.totalorder %s29, 0
    %p174 = por %p172, %p173
    %p175 = scmp.ne.s32.totalorder %s164, %s167
    %p176 = scmp.eq.s32.totalorder %s34, 3
    %p177 = por %p175, %p176
    %p178 = scmp.ne.s32.totalorder %s167, %s168
    %p179 = scmp.eq.s32.totalorder %s34, 0
    %p180 = por %p178, %p179
    %p181 = scmp.ne.s32.totalorder %s167, %s168
    %p182 = scmp.eq.s32.totalorder %s35, 3
    %p183 = por %p181, %p182
    %p185 = scmp.ne.s32.totalorder %s168, %s184
    %p186 = scmp.eq.s32.totalorder %s35, 0
    %p187 = por %p185, %p186
    %s188 = ssub.s32 %s29, %s36
    %p189 = scmp.eq.s32.totalorder %s188, 0
    %s191 = sadd.s32 %s190, 1
    %s192 = scalar_select %p189, %s190, %s191
    %p195 = pneg %p189
    %p196 = scmp.eq.s32.totalorder %s29, 3
    %p197 = por %p195, %p196
    %p198 = scmp.ne.s32.totalorder %s190, %s193
    %p199 = scmp.eq.s32.totalorder %s29, 0
    %p200 = por %p198, %p199
    %p201 = scmp.ne.s32.totalorder %s190, %s193
    %p202 = scmp.eq.s32.totalorder %s34, 3
    %p203 = por %p201, %p202
    %p204 = scmp.ne.s32.totalorder %s193, %s194
    %p205 = scmp.eq.s32.totalorder %s34, 0
    %p206 = por %p204, %p205
    %p207 = scmp.ne.s32.totalorder %s193, %s194
    %p208 = scmp.eq.s32.totalorder %s35, 3
    %p209 = por %p207, %p208
    %p211 = scmp.ne.s32.totalorder %s194, %s210
    %p212 = scmp.eq.s32.totalorder %s35, 0
    %p213 = por %p211, %p212
    %s215 = sadd.s32 %s214, 1
    %p218 = scmp.eq.s32.totalorder %s29, 3
    %p219 = scmp.ne.s32.totalorder %s214, %s216
    %p220 = scmp.eq.s32.totalorder %s29, 0
    %p221 = por %p219, %p220
    %p222 = scmp.ne.s32.totalorder %s214, %s216
    %p223 = scmp.eq.s32.totalorder %s34, 3
    %p224 = por %p222, %p223
    %p225 = scmp.ne.s32.totalorder %s216, %s217
    %p226 = scmp.eq.s32.totalorder %s34, 0
    %p227 = por %p225, %p226
    %p228 = scmp.ne.s32.totalorder %s216, %s217
    %p229 = scmp.eq.s32.totalorder %s35, 3
    %p230 = por %p228, %p229
    %p232 = scmp.ne.s32.totalorder %s217, %s231
    %p233 = scmp.eq.s32.totalorder %s35, 0
    %p234 = por %p232, %p233
    %s236 = sadd.s32 %s235, 1
    %p239 = scmp.eq.s32.totalorder %s29, 3
    %p240 = scmp.ne.s32.totalorder %s235, %s237
    %p241 = scmp.eq.s32.totalorder %s29, 0
    %p242 = por %p240, %p241
    %p243 = scmp.ne.s32.totalorder %s235, %s237
    %p244 = scmp.eq.s32.totalorder %s34, 3
    %p245 = por %p243, %p244
    %p246 = scmp.ne.s32.totalorder %s237, %s238
    %p247 = scmp.eq.s32.totalorder %s34, 0
    %p248 = por %p246, %p247
    %p249 = scmp.ne.s32.totalorder %s237, %s238
    %p250 = scmp.eq.s32.totalorder %s35, 3
    %p251 = por %p249, %p250
    %p253 = scmp.ne.s32.totalorder %s238, %s252
    %p254 = scmp.eq.s32.totalorder %s35, 0
    %p255 = por %p253, %p254
    %s257 = sadd.s32 %s256, 1
    %p260 = scmp.eq.s32.totalorder %s29, 3
    %p261 = scmp.ne.s32.totalorder %s256, %s258
    %p262 = scmp.eq.s32.totalorder %s29, 0
    %p263 = por %p261, %p262
    %p264 = scmp.ne.s32.totalorder %s256, %s258
    %p265 = scmp.eq.s32.totalorder %s34, 3
    %p266 = por %p264, %p265
    %p267 = scmp.ne.s32.totalorder %s258, %s259
    %p268 = scmp.eq.s32.totalorder %s34, 0
    %p269 = por %p267, %p268
    %p270 = scmp.ne.s32.totalorder %s258, %s259
    %p271 = scmp.eq.s32.totalorder %s35, 3
    %p272 = por %p270, %p271
    %p274 = scmp.ne.s32.totalorder %s259, %s273
    %p275 = scmp.eq.s32.totalorder %s35, 0
    %p276 = por %p274, %p275
    %s278 = sadd.s32 %s277, 1
    %p281 = scmp.eq.s32.totalorder %s29, 3
    %p282 = scmp.ne.s32.totalorder %s277, %s279
    %p283 = scmp.eq.s32.totalorder %s29, 0
    %p284 = por %p282, %p283
    %p285 = scmp.ne.s32.totalorder %s277, %s279
    %p286 = scmp.eq.s32.totalorder %s34, 3
    %p287 = por %p285, %p286
    %p288 = scmp.ne.s32.totalorder %s279, %s280
    %p289 = scmp.eq.s32.totalorder %s34, 0
    %p290 = por %p288, %p289
    %p291 = scmp.ne.s32.totalorder %s279, %s280
    %p292 = scmp.eq.s32.totalorder %s35, 3
    %p293 = por %p291, %p292
    %p295 = scmp.ne.s32.totalorder %s280, %s294
    %p296 = scmp.eq.s32.totalorder %s35, 0
    %p297 = por %p295, %p296
    %s299 = sadd.s32 %s298, 1
    %p302 = scmp.eq.s32.totalorder %s29, 3
    %p303 = scmp.ne.s32.totalorder %s298, %s300
    %p304 = scmp.eq.s32.totalorder %s29, 0
    %p305 = por %p303, %p304
    %p306 = scmp.ne.s32.totalorder %s298, %s300
    %p307 = scmp.eq.s32.totalorder %s34, 3
    %p308 = por %p306, %p307
    %p309 = scmp.ne.s32.totalorder %s300, %s301
    %p310 = scmp.eq.s32.totalorder %s34, 0
    %p311 = por %p309, %p310
    %p312 = scmp.ne.s32.totalorder %s300, %s301
    %p313 = scmp.eq.s32.totalorder %s35, 3
    %p314 = por %p312, %p313
    %p316 = scmp.ne.s32.totalorder %s301, %s315
    %p317 = scmp.eq.s32.totalorder %s35, 0
    %p318 = por %p316, %p317
    %s320 = sadd.s32 %s319, 1
    %p323 = scmp.eq.s32.totalorder %s29, 3
    %p324 = scmp.ne.s32.totalorder %s319, %s321
    %p325 = scmp.eq.s32.totalorder %s29, 0
    %p326 = por %p324, %p325
    %p327 = scmp.ne.s32.totalorder %s319, %s321
    %p328 = scmp.eq.s32.totalorder %s34, 3
    %p329 = por %p327, %p328
    %p330 = scmp.ne.s32.totalorder %s321, %s322
    %p331 = scmp.eq.s32.totalorder %s34, 0
    %p332 = por %p330, %p331
    %p333 = scmp.ne.s32.totalorder %s321, %s322
    %p334 = scmp.eq.s32.totalorder %s35, 3
    %p335 = por %p333, %p334
    %p337 = scmp.ne.s32.totalorder %s322, %s336
    %p338 = scmp.eq.s32.totalorder %s35, 0
    %p339 = por %p337, %p338
    %s341 = sadd.s32 %s340, 1
    %p344 = scmp.eq.s32.totalorder %s29, 3
    %p345 = scmp.ne.s32.totalorder %s340, %s342
    %p346 = scmp.eq.s32.totalorder %s29, 0
    %p347 = por %p345, %p346
    %p348 = scmp.ne.s32.totalorder %s340, %s342
    %p349 = scmp.eq.s32.totalorder %s34, 3
    %p350 = por %p348, %p349
    %p351 = scmp.ne.s32.totalorder %s342, %s343
    %p352 = scmp.eq.s32.totalorder %s34, 0
    %p353 = por %p351, %p352
    %p354 = scmp.ne.s32.totalorder %s342, %s343
    %p355 = scmp.eq.s32.totalorder %s35, 3
    %p356 = por %p354, %p355
    %p358 = scmp.ne.s32.totalorder %s343, %s357
    %p359 = scmp.eq.s32.totalorder %s35, 0
    %p360 = por %p358, %p359
    %s362 = sadd.s32 %s361, 1
    %p365 = scmp.eq.s32.totalorder %s29, 3
    %p366 = scmp.ne.s32.totalorder %s361, %s363
    %p367 = scmp.eq.s32.totalorder %s29, 0
    %p368 = por %p366, %p367
    %p369 = scmp.ne.s32.totalorder %s361, %s363
    %p370 = scmp.eq.s32.totalorder %s34, 3
    %p371 = por %p369, %p370
    %p372 = scmp.ne.s32.totalorder %s363, %s364
    %p373 = scmp.eq.s32.totalorder %s34, 0
    %p374 = por %p372, %p373
    %p375 = scmp.ne.s32.totalorder %s363, %s364
    %p376 = scmp.eq.s32.totalorder %s35, 3
    %p377 = por %p375, %p376
    %p379 = scmp.ne.s32.totalorder %s364, %s378
    %p380 = scmp.eq.s32.totalorder %s35, 0
    %p381 = por %p379, %p380
    %s383 = sadd.s32 %s382, 1
    %p386 = scmp.eq.s32.totalorder %s29, 3
    %p387 = scmp.ne.s32.totalorder %s382, %s384
    %p388 = scmp.eq.s32.totalorder %s29, 0
    %p389 = por %p387, %p388
    %p390 = scmp.ne.s32.totalorder %s382, %s384
    %p391 = scmp.eq.s32.totalorder %s34, 3
    %p392 = por %p390, %p391
    %p393 = scmp.ne.s32.totalorder %s384, %s385
    %p394 = scmp.eq.s32.totalorder %s34, 0
    %p395 = por %p393, %p394
    %p396 = scmp.ne.s32.totalorder %s384, %s385
    %p397 = scmp.eq.s32.totalorder %s35, 3
    %p398 = por %p396, %p397
    %p400 = scmp.ne.s32.totalorder %s385, %s399
    %p401 = scmp.eq.s32.totalorder %s35, 0
    %p402 = por %p400, %p401
    %s404 = sadd.s32 %s403, 1
    %p407 = scmp.eq.s32.totalorder %s29, 3
    %p408 = scmp.ne.s32.totalorder %s403, %s405
    %p409 = scmp.eq.s32.totalorder %s29, 0
    %p410 = por %p408, %p409
    %p411 = scmp.ne.s32.totalorder %s403, %s405
    %p412 = scmp.eq.s32.totalorder %s34, 3
    %p413 = por %p411, %p412
    %p414 = scmp.ne.s32.totalorder %s405, %s406
    %p415 = scmp.eq.s32.totalorder %s34, 0
    %p416 = por %p414, %p415
    %p417 = scmp.ne.s32.totalorder %s405, %s406
    %p418 = scmp.eq.s32.totalorder %s35, 3
    %p419 = por %p417, %p418
    %p421 = scmp.ne.s32.totalorder %s406, %s420
    %p422 = scmp.eq.s32.totalorder %s35, 0
    %p423 = por %p421, %p422
    %s425 = sadd.s32 %s424, 1
    %p428 = scmp.eq.s32.totalorder %s29, 3
    %p429 = scmp.ne.s32.totalorder %s424, %s426
    %p430 = scmp.eq.s32.totalorder %s29, 0
    %p431 = por %p429, %p430
    %p432 = scmp.ne.s32.totalorder %s424, %s426
    %p433 = scmp.eq.s32.totalorder %s34, 3
    %p434 = por %p432, %p433
    %p435 = scmp.ne.s32.totalorder %s426, %s427
    %p436 = scmp.eq.s32.totalorder %s34, 0
    %p437 = por %p435, %p436
    %p438 = scmp.ne.s32.totalorder %s426, %s427
    %p439 = scmp.eq.s32.totalorder %s35, 3
    %p440 = por %p438, %p439
    %p442 = scmp.ne.s32.totalorder %s427, %s441
    %p443 = scmp.eq.s32.totalorder %s35, 0
    %p444 = por %p442, %p443
    %s445 = ssub.s32 %s29, %s36
    %p446 = scmp.eq.s32.totalorder %s445, 0
    %s448 = sadd.s32 %s447, 1
    %s449 = scalar_select %p446, %s447, %s448
    %p452 = pneg %p446
    %p453 = scmp.eq.s32.totalorder %s29, 3
    %p454 = por %p452, %p453
    %p455 = scmp.ne.s32.totalorder %s447, %s450
    %p456 = scmp.eq.s32.totalorder %s29, 0
    %p457 = por %p455, %p456
    %p458 = scmp.ne.s32.totalorder %s447, %s450
    %p459 = scmp.eq.s32.totalorder %s34, 3
    %p460 = por %p458, %p459
    %p461 = scmp.ne.s32.totalorder %s450, %s451
    %p462 = scmp.eq.s32.totalorder %s34, 0
    %p463 = por %p461, %p462
    %p464 = scmp.ne.s32.totalorder %s450, %s451
    %p465 = scmp.eq.s32.totalorder %s35, 3
    %p466 = por %p464, %p465
    %p468 = scmp.ne.s32.totalorder %s451, %s467
    %p469 = scmp.eq.s32.totalorder %s35, 0
    %p470 = por %p468, %p469
    %s471 = ssub.s32 %s29, %s36
    %p472 = scmp.eq.s32.totalorder %s471, 0
    %s474 = sadd.s32 %s473, 1
    %s475 = scalar_select %p472, %s473, %s474
    %p478 = pneg %p472
    %p479 = scmp.eq.s32.totalorder %s29, 3
    %p480 = por %p478, %p479
    %p481 = scmp.ne.s32.totalorder %s473, %s476
    %p482 = scmp.eq.s32.totalorder %s29, 0
    %p483 = por %p481, %p482
    %p484 = scmp.ne.s32.totalorder %s473, %s476
    %p485 = scmp.eq.s32.totalorder %s34, 3
    %p486 = por %p484, %p485
    %p487 = scmp.ne.s32.totalorder %s476, %s477
    %p488 = scmp.eq.s32.totalorder %s34, 0
    %p489 = por %p487, %p488
    %p490 = scmp.ne.s32.totalorder %s476, %s477
    %p491 = scmp.eq.s32.totalorder %s35, 3
    %p492 = por %p490, %p491
    %p494 = scmp.ne.s32.totalorder %s477, %s493
    %p495 = scmp.eq.s32.totalorder %s35, 0
    %p496 = por %p494, %p495
    %s497 = ssub.s32 %s29, %s36
    %p498 = scmp.eq.s32.totalorder %s497, 0
    %s500 = sadd.s32 %s499, 1
    %s501 = scalar_select %p498, %s499, %s500
    %p504 = pneg %p498
    %p505 = scmp.eq.s32.totalorder %s29, 3
    %p506 = por %p504, %p505
    %p507 = scmp.ne.s32.totalorder %s499, %s502
    %p508 = scmp.eq.s32.totalorder %s29, 0
    %p509 = por %p507, %p508
    %p510 = scmp.ne.s32.totalorder %s499, %s502
    %p511 = scmp.eq.s32.totalorder %s34, 3
    %p512 = por %p510, %p511
    %p513 = scmp.ne.s32.totalorder %s502, %s503
    %p514 = scmp.eq.s32.totalorder %s34, 0
    %p515 = por %p513, %p514
    %p516 = scmp.ne.s32.totalorder %s502, %s503
    %p517 = scmp.eq.s32.totalorder %s35, 3
    %p518 = por %p516, %p517
    %p520 = scmp.ne.s32.totalorder %s503, %s519
    %p521 = scmp.eq.s32.totalorder %s35, 0
    %p522 = por %p520, %p521
    %p523 = scmp.le.s32.totalorder 1, %s29
    %p524 = scmp.lt.s32.totalorder %s29, 5
    %p525 = pnand %p523, %p524
    %p526 = pneg %p525
    // Predicated region
    $region9: #{closed_call.25} parent=5 // pred_check
      _
    $region10: #{closed_call.25} parent=5 // pred_check_branch
      %528 = sbr.rel (%p525) target = $region12
    $region11: #{closed_call.25} parent=5 // pred_region
      %s529 = ssub.s32 %s29, 1
      // Predicated region
      $region13: #{closed_call.25} parent=11 // pred_check
        %p530 = pneg %p76
      $region14: #{closed_call.25} parent=11 // pred_check_branch
        %532 = sbr.rel (%p530) target = $region16
      $region15: #{closed_call.25} parent=11 // pred_region
        _
      $region16: #{closed_call.25} parent=11 // pred_fallthru
        _
      // Predicated region
      $region17: #{closed_call.25} parent=11 // pred_check
        %p533 = pneg %p227
      $region18: #{closed_call.25} parent=11 // pred_check_branch
        %535 = sbr.rel (%p533) target = $region20
      $region19: #{closed_call.25} parent=11 // pred_region
        _
      $region20: #{closed_call.25} parent=11 // pred_fallthru
        _
      // Predicated region
      $region21: #{closed_call.25} parent=11 // pred_check
        %p536 = pneg %p248
      $region22: #{closed_call.25} parent=11 // pred_check_branch
        %538 = sbr.rel (%p536) target = $region24
      $region23: #{closed_call.25} parent=11 // pred_region
        _
      $region24: #{closed_call.25} parent=11 // pred_fallthru
        _
      // Predicated region
      $region25: #{closed_call.25} parent=11 // pred_check
        %p539 = pneg %p269
      $region26: #{closed_call.25} parent=11 // pred_check_branch
        %541 = sbr.rel (%p539) target = $region28
      $region27: #{closed_call.25} parent=11 // pred_region
        _
      $region28: #{closed_call.25} parent=11 // pred_fallthru
        _
      // Predicated region
      $region29: #{closed_call.25} parent=11 // pred_check
        %p542 = pneg %p290
      $region30: #{closed_call.25} parent=11 // pred_check_branch
        %544 = sbr.rel (%p542) target = $region32
      $region31: #{closed_call.25} parent=11 // pred_region
        _
      $region32: #{closed_call.25} parent=11 // pred_fallthru
        _
      // Predicated region
      $region33: #{closed_call.25} parent=11 // pred_check
        %p545 = pneg %p311
      $region34: #{closed_call.25} parent=11 // pred_check_branch
        %547 = sbr.rel (%p545) target = $region36
      $region35: #{closed_call.25} parent=11 // pred_region
        _
      $region36: #{closed_call.25} parent=11 // pred_fallthru
        _
      // Predicated region
      $region37: #{closed_call.25} parent=11 // pred_check
        %p548 = pneg %p332
      $region38: #{closed_call.25} parent=11 // pred_check_branch
        %550 = sbr.rel (%p548) target = $region40
      $region39: #{closed_call.25} parent=11 // pred_region
        _
      $region40: #{closed_call.25} parent=11 // pred_fallthru
        _
      // Predicated region
      $region41: #{closed_call.25} parent=11 // pred_check
        %p551 = pneg %p353
      $region42: #{closed_call.25} parent=11 // pred_check_branch
        %553 = sbr.rel (%p551) target = $region44
      $region43: #{closed_call.25} parent=11 // pred_region
        _
      $region44: #{closed_call.25} parent=11 // pred_fallthru
        _
      // Predicated region
      $region45: #{closed_call.25} parent=11 // pred_check
        %p554 = pneg %p374
      $region46: #{closed_call.25} parent=11 // pred_check_branch
        %556 = sbr.rel (%p554) target = $region48
      $region47: #{closed_call.25} parent=11 // pred_region
        _
      $region48: #{closed_call.25} parent=11 // pred_fallthru
        _
      // Predicated region
      $region49: #{closed_call.25} parent=11 // pred_check
        %p557 = pneg %p395
      $region50: #{closed_call.25} parent=11 // pred_check_branch
        %559 = sbr.rel (%p557) target = $region52
      $region51: #{closed_call.25} parent=11 // pred_region
        _
      $region52: #{closed_call.25} parent=11 // pred_fallthru
        _
      // Predicated region
      $region53: #{closed_call.25} parent=11 // pred_check
        %p560 = pneg %p416
      $region54: #{closed_call.25} parent=11 // pred_check_branch
        %562 = sbr.rel (%p560) target = $region56
      $region55: #{closed_call.25} parent=11 // pred_region
        _
      $region56: #{closed_call.25} parent=11 // pred_fallthru
        _
      // Predicated region
      $region57: #{closed_call.25} parent=11 // pred_check
        %p563 = pneg %p437
      $region58: #{closed_call.25} parent=11 // pred_check_branch
        %565 = sbr.rel (%p563) target = $region60
      $region59: #{closed_call.25} parent=11 // pred_region
        _
      $region60: #{closed_call.25} parent=11 // pred_fallthru
        _
    $region12: #{closed_call.25} parent=5 // pred_fallthru
      _
    %p566 = scmp.lt.s32.totalorder %s29, 4
    // Predicated region
    $region61: #{closed_call.25} parent=5 // pred_check
      %p567 = pneg %p566
    $region62: #{closed_call.25} parent=5 // pred_check_branch
      %569 = sbr.rel (%p567) target = $region64
    $region63: #{closed_call.25} parent=5 // pred_region
      // Predicated region
      $region65: #{closed_call.25} parent=63 // pred_check
        %p570 = pneg %p49
      $region66: #{closed_call.25} parent=63 // pred_check_branch
        %572 = sbr.rel (%p570) target = $region68
      $region67: #{closed_call.25} parent=63 // pred_region
        %p573 = scmp.lt.s32.totalorder %s29, 3
        %s574 = scalar_select %p573, %s29, 3
        %s575 = scalar_lea.vmem %s1, %s574
      $region68: #{closed_call.25} parent=63 // pred_fallthru
        _
      // Predicated region
      $region69: #{closed_call.25} parent=63 // pred_check
        %p576 = pneg %p96
      $region70: #{closed_call.25} parent=63 // pred_check_branch
        %578 = sbr.rel (%p576) target = $region72
      $region71: #{closed_call.25} parent=63 // pred_region
        %p579 = scmp.lt.s32.totalorder %s29, 3
        %s580 = scalar_select %p579, %s29, 3
        %s581 = scalar_lea.vmem %s3, %s580
      $region72: #{closed_call.25} parent=63 // pred_fallthru
        _
      // Predicated region
      $region73: #{closed_call.25} parent=63 // pred_check
        %p582 = pneg %p122
      $region74: #{closed_call.25} parent=63 // pred_check_branch
        %584 = sbr.rel (%p582) target = $region76
      $region75: #{closed_call.25} parent=63 // pred_region
        %p585 = scmp.lt.s32.totalorder %s29, 3
        %s586 = scalar_select %p585, %s29, 3
        %s587 = smul.addr %s586, 8
        %s588 = scalar_lea.vmem %s4, %s587
      $region76: #{closed_call.25} parent=63 // pred_fallthru
        _
      // Predicated region
      $region77: #{closed_call.25} parent=63 // pred_check
        %p589 = pneg %p148
      $region78: #{closed_call.25} parent=63 // pred_check_branch
        %591 = sbr.rel (%p589) target = $region80
      $region79: #{closed_call.25} parent=63 // pred_region
        %p592 = scmp.lt.s32.totalorder %s29, 3
        %s593 = scalar_select %p592, %s29, 3
        %s594 = smul.addr %s593, 8
        %s595 = scalar_lea.vmem %s5, %s594
      $region80: #{closed_call.25} parent=63 // pred_fallthru
        _
      // Predicated region
      $region81: #{closed_call.25} parent=63 // pred_check
        %p596 = pneg %p174
      $region82: #{closed_call.25} parent=63 // pred_check_branch
        %598 = sbr.rel (%p596) target = $region84
      $region83: #{closed_call.25} parent=63 // pred_region
        %p599 = scmp.lt.s32.totalorder %s29, 3
        %s600 = scalar_select %p599, %s29, 3
        %s601 = smul.addr %s600, 8
        %s602 = scalar_lea.vmem %s6, %s601
      $region84: #{closed_call.25} parent=63 // pred_fallthru
        _
      // Predicated region
      $region85: #{closed_call.25} parent=63 // pred_check
        %p603 = pneg %p200
      $region86: #{closed_call.25} parent=63 // pred_check_branch
        %605 = sbr.rel (%p603) target = $region88
      $region87: #{closed_call.25} parent=63 // pred_region
        %p606 = scmp.lt.s32.totalorder %s29, 3
        %s607 = scalar_select %p606, %s29, 3
        %s608 = smul.addr %s607, 8
        %s609 = scalar_lea.vmem %s7, %s608
      $region88: #{closed_call.25} parent=63 // pred_fallthru
        _
    $region64: #{closed_call.25} parent=5 // pred_fallthru
      _
    %p610 = scmp.le.s32.totalorder 1, %s29
    %p611 = scmp.lt.s32.totalorder %s29, 5
    %p612 = pnand %p610, %p611
    %p613 = pneg %p612
    // Predicated region
    $region89: #{closed_call.25} parent=5 // pred_check
      _
    $region90: #{closed_call.25} parent=5 // pred_check_branch
      %615 = sbr.rel (%p612) target = $region92
    $region91: #{closed_call.25} parent=5 // pred_region
      %s616 = ssub.s32 %s29, 1
      %p617 = scmp.lt.s32.totalorder %s34, 3
      %s618 = scalar_select %p617, %s34, 3
      %s619 = scalar_lea.vmem %s1, %s618
      %p620 = pneg %p55
      %p621 = pneg %p52
      %p622 = pneg %p76
      %p623 = pneg %p73
      %p624 = scmp.lt.s32.totalorder %s34, 3
      %s625 = scalar_select %p624, %s34, 3
      %s626 = scalar_lea.vmem %s3, %s625
      %p627 = pneg %p102
      %p628 = pneg %p99
      %p629 = scmp.lt.s32.totalorder %s34, 3
      %s630 = scalar_select %p629, %s34, 3
      %s631 = smul.addr %s630, 8
      %s632 = scalar_lea.vmem %s4, %s631
      %p633 = pneg %p128
      %p634 = pneg %p125
      %p635 = scmp.lt.s32.totalorder %s34, 3
      %s636 = scalar_select %p635, %s34, 3
      %s637 = smul.addr %s636, 8
      %s638 = scalar_lea.vmem %s5, %s637
      %p639 = pneg %p154
      %p640 = pneg %p151
      %p641 = scmp.lt.s32.totalorder %s34, 3
      %s642 = scalar_select %p641, %s34, 3
      %s643 = smul.addr %s642, 8
      %s644 = scalar_lea.vmem %s6, %s643
      %p645 = pneg %p180
      %p646 = pneg %p177
      %p647 = scmp.lt.s32.totalorder %s34, 3
      %s648 = scalar_select %p647, %s34, 3
      %s649 = smul.addr %s648, 8
      %s650 = scalar_lea.vmem %s7, %s649
      %p651 = pneg %p206
      %p652 = pneg %p203
      %p653 = pneg %p227
      %p654 = pneg %p224
      %p655 = pneg %p248
      %p656 = pneg %p245
      %p657 = pneg %p269
      %p658 = pneg %p266
      %p659 = pneg %p290
      %p660 = pneg %p287
      %p661 = pneg %p311
      %p662 = pneg %p308
      %p663 = pneg %p332
      %p664 = pneg %p329
      %p665 = pneg %p353
      %p666 = pneg %p350
      %p667 = pneg %p374
      %p668 = pneg %p371
      %p669 = pneg %p395
      %p670 = pneg %p392
      %p671 = pneg %p416
      %p672 = pneg %p413
      %p673 = pneg %p437
      %p674 = pneg %p434
      %p675 = pneg %p463
      %p676 = pneg %p460
      %p677 = scmp.lt.s32.totalorder %s34, 3
      %s678 = scalar_select %p677, %s34, 3
      %s679 = scalar_lea.vmem %s19, %s678
      %p680 = pneg %p489
      %p681 = pneg %p486
      %p682 = scmp.lt.s32.totalorder %s34, 3
      %s683 = scalar_select %p682, %s34, 3
      %s684 = smul.addr %s683, 8
      %s685 = scalar_lea.vmem %s20, %s684
      %p686 = pneg %p515
      %p687 = pneg %p512
      %p688 = scmp.lt.s32.totalorder %s34, 3
      %s689 = scalar_select %p688, %s34, 3
      %s690 = smul.addr %s689, 8
      %s691 = scalar_lea.vmem %s21, %s690
      %p692 = scmp.lt.s32.totalorder %s34, 3
      %s693 = scalar_select %p692, %s34, 3
      %s694 = scalar_lea.vmem %s1, %s693
      %p695 = scmp.lt.s32.totalorder %s34, 3
      %s696 = scalar_select %p695, %s34, 3
      %s697 = scalar_lea.vmem %s3, %s696
      %p698 = scmp.lt.s32.totalorder %s34, 3
      %s699 = scalar_select %p698, %s34, 3
      %s700 = smul.addr %s699, 8
      %s701 = scalar_lea.vmem %s4, %s700
      %p702 = scmp.lt.s32.totalorder %s34, 3
      %s703 = scalar_select %p702, %s34, 3
      %s704 = smul.addr %s703, 8
      %s705 = scalar_lea.vmem %s5, %s704
      %p706 = scmp.lt.s32.totalorder %s34, 3
      %s707 = scalar_select %p706, %s34, 3
      %s708 = smul.addr %s707, 8
      %s709 = scalar_lea.vmem %s6, %s708
      %p710 = scmp.lt.s32.totalorder %s34, 3
      %s711 = scalar_select %p710, %s34, 3
      %s712 = smul.addr %s711, 8
      %s713 = scalar_lea.vmem %s7, %s712
      %p714 = scmp.lt.s32.totalorder %s34, 3
      %s715 = scalar_select %p714, %s34, 3
      %s716 = scalar_lea.vmem %s19, %s715
      %p717 = scmp.lt.s32.totalorder %s34, 3
      %s718 = scalar_select %p717, %s34, 3
      %s719 = smul.addr %s718, 8
      %s720 = scalar_lea.vmem %s20, %s719
      %p721 = scmp.lt.s32.totalorder %s34, 3
      %s722 = scalar_select %p721, %s34, 3
      %s723 = smul.addr %s722, 8
      %s724 = scalar_lea.vmem %s21, %s723
      %s726 = sld [smem:[#allocation3]]
      %v727 = vld [vmem:[%s694] sm:$0x1]
      %v728 = vld [vmem:[%s697] sm:$0x1]
      %v729 = vld [vmem:[%s2] sm:$0xf]
      %v730 = vld [vmem:[%s8] sm:$0x1]
      %v731 = vmul.f32 %v727, %v727
      %vm732 = vcmask 253952
      %v733 = vsel %vm732, %v731, 0.0
      %734 = vadd.xlane.f32.xlu0 %v733
      %v735 = vpop.xlane.xlu0 %734
      %v736 = vrcp.pop 32.0
      %v737 = vmul.f32 %v735, %v736
      %v738 = vadd.f32 %v737, 1e-06
      %v739 = vrsqrt.pop %v738
      %v740 = vmul.f32 %v727, %v739
      %v741 = vmul.f32 %v740, %v730
      %v742 = vld [vmem:[%s9] sm:$0xff]
      %v743 = vld [vmem:[%s9 + $0x8] sm:$0xff]
      %v744 = vld [vmem:[%s9 + $0x10] sm:$0xff]
      %v745 = vld [vmem:[%s9 + $0x18] sm:$0xff]
      %v746 = vpack.c.bf16 %v741, %v741
      %v747 = vpack.c.bf16 %v743, %v742
      %v748 = vpack.c.bf16 %v745, %v744
      %vm749 = vcmask 261120
      %v751 = vsel %vm749, %v746, 0
      %753 = vmatprep.subr.bf16.mxu0 0
      %754 = vmatpush1.bf16.msra.mxu0 %v747
      %755 = vmatprep.subr.bf16.mxu0 0
      %756 = vmatpush1.bf16.msra.mxu0 %v748
      %757 = vmatprep.subr.bf16.mxu0 0
      %758 = vmatpush1.bf16.msra.mxu0 0
      %759 = vmatprep.subr.bf16.mxu0 0
      %760 = vmatpush1.bf16.msra.mxu0 0
      %761 = vmatprep.subr.bf16.mxu0 0
      %762 = vmatpush1.bf16.msra.mxu0 0
      %763 = vmatprep.subr.bf16.mxu0 0
      %764 = vmatpush1.bf16.msra.mxu0 0
      %765 = vmatprep.subr.bf16.mxu0 0
      %766 = vmatpush1.bf16.msra.mxu0 0
      %767 = vmatprep.subr.bf16.mxu0 0
      %768 = vmatpush1.bf16.msra.mxu0 0
      %769 = vmatprep.subr.bf16.mxu0 0
      %770 = vmatpush1.bf16.msra.mxu0 0
      %771 = vmatprep.subr.bf16.mxu0 0
      %772 = vmatpush1.bf16.msra.mxu0 0
      %773 = vmatprep.subr.bf16.mxu0 0
      %774 = vmatpush1.bf16.msra.mxu0 0
      %775 = vmatprep.subr.bf16.mxu0 0
      %776 = vmatpush1.bf16.msra.mxu0 0
      %777 = vmatprep.subr.bf16.mxu0 0
      %778 = vmatpush1.bf16.msra.mxu0 0
      %779 = vmatprep.subr.bf16.mxu0 0
      %780 = vmatpush1.bf16.msra.mxu0 0
      %781 = vmatprep.subr.bf16.mxu0 0
      %782 = vmatpush1.bf16.msra.mxu0 0
      %783 = vmatprep.subr.bf16.mxu0 0
      %784 = vmatpush1.bf16.msra.mxu0 0
      %785 = vmatprep.mubr.bf16.mxu0 0
      %786 = vmatmul.mubr.bf16.gmra.mrb[0].mxu0 %v751
      %v787 = vpop.f32.mrb[0].mxu0
      %v788 = vadd.f32 0.0, %v787
      %v789 = vpop.f32.mrb[0].mxu0
      %v790 = vpop.f32.mrb[0].mxu0
      %v791 = vpop.f32.mrb[0].mxu0
      %792 = vdwg.mxu0
      %v793 = vld [vmem:[%s701] sm:$0xff]
      %v794 = vld [vmem:[%s705] sm:$0xff]
      %v795 = vlaneseq
      %v796 = vshrl.u32 %v795, 7
      %v797 = vstv %s726
      %vm798 = vcmp.eq.s32.totalorder %v796, %v797
      %v799 = vsel %vm798, 1, 0
      %vm800 = vcmp.eq.s32.totalorder %v799, 1
      %v801 = vlaneseq
      %v802 = vshrl.u32 %v801, 7
      %v803 = vsub.s32 0, %v802
      %v804 = vrot.slane %v788, %v803
      %806 = vrot.lane.b32.xlu0 %v793, 32
      %v807 = vpop.permute.xlu0 %806
      %v809 = vsel %vm800, %v804, %v807
      %811 = vrot.lane.b32.xlu0 %v794, 64
      %v812 = vpop.permute.xlu0 %811
      %v814 = vsel %vm800, %v804, %v812
      %816 = vrot.lane.b32.xlu0 %v809, 96
      %v817 = vpop.permute.xlu0 %816
      %819 = vst.msk [vmem:[%s720] sm:$0xff] %vm749, %v817
      %821 = vrot.lane.b32.xlu0 %v814, 64
      %v822 = vpop.permute.xlu0 %821
      %824 = vst.msk [vmem:[%s724] sm:$0xff] %vm749, %v822
      %v825 = vlaneseq
      %v826 = vand.u32 %v825, 127
      %vm827 = vcmp.le.s32.totalorder %v826, %v797
      %v828 = vsel %vm827, 0.0, -1e+09
      %v829 = vld [vmem:[%s10] sm:$0xff]
      %v830 = vld [vmem:[%s10 + $0x8] sm:$0xff]
      %v831 = vld [vmem:[%s10 + $0x10] sm:$0xff]
      %v832 = vld [vmem:[%s10 + $0x18] sm:$0xff]
      %v833 = vpack.c.bf16 %v788, %v788
      %v834 = vpack.c.bf16 %v809, %v809
      %836 = vrot.lane.b32.xlu0 %v834, 96
      %v837 = vpop.permute.xlu0 %836
      %vm838 = vcmask 64512
      %v840 = vsel %vm838, %v833, 0
      %v843 = vsel %vm838, %v837, 0
      %845 = vmatprep.subr.bf16.mxu0 0
      %846 = vmatpush1.bf16.xpose.msra.mxu0 %v843
      %847 = vmatprep.subr.bf16.mxu0 0
      %848 = vmatpush1.bf16.xpose.msra.mxu0 0
      %849 = vmatprep.subr.bf16.mxu0 0
      %850 = vmatpush1.bf16.xpose.msra.mxu0 0
      %851 = vmatprep.subr.bf16.mxu0 0
      %852 = vmatpush1.bf16.xpose.msra.mxu0 0
      %853 = vmatprep.subr.bf16.mxu0 0
      %854 = vmatpush1.bf16.xpose.msra.mxu0 0
      %855 = vmatprep.subr.bf16.mxu0 0
      %856 = vmatpush1.bf16.xpose.msra.mxu0 0
      %857 = vmatprep.subr.bf16.mxu0 0
      %858 = vmatpush1.bf16.xpose.msra.mxu0 0
      %859 = vmatprep.subr.bf16.mxu0 0
      %860 = vmatpush1.bf16.xpose.msra.mxu0 0
      %861 = vmatprep.subr.bf16.mxu0 0
      %862 = vmatpush1.bf16.xpose.msra.mxu0 0
      %863 = vmatprep.subr.bf16.mxu0 0
      %864 = vmatpush1.bf16.xpose.msra.mxu0 0
      %865 = vmatprep.subr.bf16.mxu0 0
      %866 = vmatpush1.bf16.xpose.msra.mxu0 0
      %867 = vmatprep.subr.bf16.mxu0 0
      %868 = vmatpush1.bf16.xpose.msra.mxu0 0
      %869 = vmatprep.subr.bf16.mxu0 0
      %870 = vmatpush1.bf16.xpose.msra.mxu0 0
      %871 = vmatprep.subr.bf16.mxu0 0
      %872 = vmatpush1.bf16.xpose.msra.mxu0 0
      %873 = vmatprep.subr.bf16.mxu0 0
      %874 = vmatpush1.bf16.xpose.msra.mxu0 0
      %875 = vmatprep.subr.bf16.mxu0 0
      %876 = vmatpush1.bf16.xpose.msra.mxu0 0
      %877 = vmatprep.mubr.bf16.mxu0 0
      %878 = vmatmul.mubr.bf16.gmra.mrb[0].mxu0 %v840
      %v879 = vpop.f32.mrb[0].mxu0
      %v880 = vadd.f32 %v729, %v879
      %v881 = vpop.f32.mrb[0].mxu0
      %v882 = vpop.f32.mrb[0].mxu0
      %v883 = vpop.f32.mrb[0].mxu0
      %884 = vdwg.mxu0
      %v885 = vadd.f32 %v880, %v828
      %vm886 = vcmask 57344
      %v887 = vsel %vm886, %v885, -inf
      %888 = vmax.xlane.f32.xlu0 %v887
      %v889 = vpop.xlane.xlu0 %888
      %v890 = vsub.f32 %v885, %v889
      %v891 = vmul.f32 %v890, 1.442695
      %v892 = vpow.pop %v891
      %v893 = vsel %vm886, %v892, 0.0
      %894 = vadd.xlane.f32.xlu0 %v893
      %v895 = vpop.xlane.xlu0 %894
      %v896 = vrcp.pop %v895
      %v897 = vmul.f32 %v892, %v896
      %v898 = vpack.c.bf16 %v897, %v897
      %v899 = vpack.c.bf16 %v814, %v814
      %901 = vrot.lane.b32.xlu0 %v899, 64
      %v902 = vpop.permute.xlu0 %901
      %v904 = vsel %vm838, %v898, 0
      %vm906 = vcmask 1043456
      %v908 = vsel %vm906, %v902, 0
      %910 = vmatprep.subr.bf16.mxu0 0
      %911 = vmatpush1.bf16.msra.mxu0 %v908
      %912 = vmatprep.subr.bf16.mxu0 0
      %913 = vmatpush1.bf16.msra.mxu0 0
      %914 = vmatprep.subr.bf16.mxu0 0
      %915 = vmatpush1.bf16.msra.mxu0 0
      %916 = vmatprep.subr.bf16.mxu0 0
      %917 = vmatpush1.bf16.msra.mxu0 0
      %918 = vmatprep.subr.bf16.mxu0 0
      %919 = vmatpush1.bf16.msra.mxu0 0
      %920 = vmatprep.subr.bf16.mxu0 0
      %921 = vmatpush1.bf16.msra.mxu0 0
      %922 = vmatprep.subr.bf16.mxu0 0
      %923 = vmatpush1.bf16.msra.mxu0 0
      %924 = vmatprep.subr.bf16.mxu0 0
      %925 = vmatpush1.bf16.msra.mxu0 0
      %926 = vmatprep.subr.bf16.mxu0 0
      %927 = vmatpush1.bf16.msra.mxu0 0
      %928 = vmatprep.subr.bf16.mxu0 0
      %929 = vmatpush1.bf16.msra.mxu0 0
      %930 = vmatprep.subr.bf16.mxu0 0
      %931 = vmatpush1.bf16.msra.mxu0 0
      %932 = vmatprep.subr.bf16.mxu0 0
      %933 = vmatpush1.bf16.msra.mxu0 0
      %934 = vmatprep.subr.bf16.mxu0 0
      %935 = vmatpush1.bf16.msra.mxu0 0
      %936 = vmatprep.subr.bf16.mxu0 0
      %937 = vmatpush1.bf16.msra.mxu0 0
      %938 = vmatprep.subr.bf16.mxu0 0
      %939 = vmatpush1.bf16.msra.mxu0 0
      %940 = vmatprep.subr.bf16.mxu0 0
      %941 = vmatpush1.bf16.msra.mxu0 0
      %942 = vmatprep.mubr.bf16.mxu0 0
      %943 = vmatmul.mubr.bf16.gmra.mrb[0].mxu0 %v904
      %v944 = vpop.f32.mrb[0].mxu0
      %v945 = vadd.f32 0.0, %v944
      %v946 = vpop.f32.mrb[0].mxu0
      %v947 = vpop.f32.mrb[0].mxu0
      %v948 = vpop.f32.mrb[0].mxu0
      %949 = vdwg.mxu0
      %v950 = vpack.c.bf16 %v945, %v945
      %v951 = vpack.c.bf16 %v829, %v829
      %953 = vrot.lane.b32.xlu0 %v833, 120
      %v954 = vpop.permute.xlu0 %953
      %955 = vrot.lane.b32.xlu0 %v834, 88
      %v956 = vpop.permute.xlu0 %955
      %v958 = vrot.slane %v729, 1
      %v961 = vsel %vm838, %v954, 0
      %v964 = vsel %vm838, %v956, 0
      %966 = vmatprep.subr.bf16.mxu0 0
      %967 = vmatpush1.bf16.xpose.msra.mxu0 %v964
      %968 = vmatprep.subr.bf16.mxu0 0
      %969 = vmatpush1.bf16.xpose.msra.mxu0 0
      %970 = vmatprep.subr.bf16.mxu0 0
      %971 = vmatpush1.bf16.xpose.msra.mxu0 0
      %972 = vmatprep.subr.bf16.mxu0 0
      %973 = vmatpush1.bf16.xpose.msra.mxu0 0
      %974 = vmatprep.subr.bf16.mxu0 0
      %975 = vmatpush1.bf16.xpose.msra.mxu0 0
      %976 = vmatprep.subr.bf16.mxu0 0
      %977 = vmatpush1.bf16.xpose.msra.mxu0 0
      %978 = vmatprep.subr.bf16.mxu0 0
      %979 = vmatpush1.bf16.xpose.msra.mxu0 0
      %980 = vmatprep.subr.bf16.mxu0 0
      %981 = vmatpush1.bf16.xpose.msra.mxu0 0
      %982 = vmatprep.subr.bf16.mxu0 0
      %983 = vmatpush1.bf16.xpose.msra.mxu0 0
      %984 = vmatprep.subr.bf16.mxu0 0
      %985 = vmatpush1.bf16.xpose.msra.mxu0 0
      %986 = vmatprep.subr.bf16.mxu0 0
      %987 = vmatpush1.bf16.xpose.msra.mxu0 0
      %988 = vmatprep.subr.bf16.mxu0 0
      %989 = vmatpush1.bf16.xpose.msra.mxu0 0
      %990 = vmatprep.subr.bf16.mxu0 0
      %991 = vmatpush1.bf16.xpose.msra.mxu0 0
      %992 = vmatprep.subr.bf16.mxu0 0
      %993 = vmatpush1.bf16.xpose.msra.mxu0 0
      %994 = vmatprep.subr.bf16.mxu0 0
      %995 = vmatpush1.bf16.xpose.msra.mxu0 0
      %996 = vmatprep.subr.bf16.mxu0 0
      %997 = vmatpush1.bf16.xpose.msra.mxu0 0
      %998 = vmatprep.mubr.bf16.mxu0 0
      %999 = vmatmul.mubr.bf16.gmra.mrb[0].mxu0 %v961
      %v1000 = vpop.f32.mrb[0].mxu0
      %v1001 = vadd.f32 %v958, %v1000
      %v1002 = vpop.f32.mrb[0].mxu0
      %v1003 = vpop.f32.mrb[0].mxu0
      %v1004 = vpop.f32.mrb[0].mxu0
      %1005 = vdwg.mxu0
      %v1006 = vadd.f32 %v1001, %v828
      %v1007 = vsel %vm886, %v1006, -inf
      %1008 = vmax.xlane.f32.xlu0 %v1007
      %v1009 = vpop.xlane.xlu0 %1008
      %v1010 = vsub.f32 %v1006, %v1009
      %v1011 = vmul.f32 %v1010, 1.442695
      %v1012 = vpow.pop %v1011
      %v1013 = vsel %vm886, %v1012, 0.0
      %1014 = vadd.xlane.f32.xlu0 %v1013
      %v1015 = vpop.xlane.xlu0 %1014
      %v1016 = vrcp.pop %v1015
      %v1017 = vmul.f32 %v1012, %v1016
      %v1018 = vpack.c.bf16 %v1017, %v1017
      %1019 = vrot.lane.b32.xlu0 %v899, 56
      %v1020 = vpop.permute.xlu0 %1019
      %v1022 = vsel %vm838, %v1018, 0
      %v1025 = vsel %vm906, %v1020, 0
      %1027 = vmatprep.subr.bf16.mxu0 0
      %1028 = vmatpush1.bf16.msra.mxu0 %v1025
      %1029 = vmatprep.subr.bf16.mxu0 0
      %1030 = vmatpush1.bf16.msra.mxu0 0
      %1031 = vmatprep.subr.bf16.mxu0 0
      %1032 = vmatpush1.bf16.msra.mxu0 0
      %1033 = vmatprep.subr.bf16.mxu0 0
      %1034 = vmatpush1.bf16.msra.mxu0 0
      %1035 = vmatprep.subr.bf16.mxu0 0
      %1036 = vmatpush1.bf16.msra.mxu0 0
      %1037 = vmatprep.subr.bf16.mxu0 0
      %1038 = vmatpush1.bf16.msra.mxu0 0
      %1039 = vmatprep.subr.bf16.mxu0 0
      %1040 = vmatpush1.bf16.msra.mxu0 0
      %1041 = vmatprep.subr.bf16.mxu0 0
      %1042 = vmatpush1.bf16.msra.mxu0 0
      %1043 = vmatprep.subr.bf16.mxu0 0
      %1044 = vmatpush1.bf16.msra.mxu0 0
      %1045 = vmatprep.subr.bf16.mxu0 0
      %1046 = vmatpush1.bf16.msra.mxu0 0
      %1047 = vmatprep.subr.bf16.mxu0 0
      %1048 = vmatpush1.bf16.msra.mxu0 0
      %1049 = vmatprep.subr.bf16.mxu0 0
      %1050 = vmatpush1.bf16.msra.mxu0 0
      %1051 = vmatprep.subr.bf16.mxu0 0
      %1052 = vmatpush1.bf16.msra.mxu0 0
      %1053 = vmatprep.subr.bf16.mxu0 0
      %1054 = vmatpush1.bf16.msra.mxu0 0
      %1055 = vmatprep.subr.bf16.mxu0 0
      %1056 = vmatpush1.bf16.msra.mxu0 0
      %1057 = vmatprep.subr.bf16.mxu0 0
      %1058 = vmatpush1.bf16.msra.mxu0 0
      %1059 = vmatprep.mubr.bf16.mxu0 0
      %1060 = vmatmul.mubr.bf16.gmra.mrb[0].mxu0 %v1022
      %v1061 = vpop.f32.mrb[0].mxu0
      %v1062 = vadd.f32 0.0, %v1061
      %v1063 = vpop.f32.mrb[0].mxu0
      %v1064 = vpop.f32.mrb[0].mxu0
      %v1065 = vpop.f32.mrb[0].mxu0
      %1066 = vdwg.mxu0
      %v1067 = vpack.c.bf16 %v1062, %v1062
      %v1068 = vpack.c.bf16 %v830, %v830
      %v1070 = vsel %vm838, %v1067, 0
      %v1073 = vsel %vm906, %v1068, 0
      %1075 = vmatprep.subr.bf16.mxu0 0
      %1076 = vmatpush1.bf16.msra.mxu0 %v1073
      %1077 = vmatprep.subr.bf16.mxu0 0
      %1078 = vmatpush1.bf16.msra.mxu0 0
      %1079 = vmatprep.subr.bf16.mxu0 0
      %1080 = vmatpush1.bf16.msra.mxu0 0
      %1081 = vmatprep.subr.bf16.mxu0 0
      %1082 = vmatpush1.bf16.msra.mxu0 0
      %1083 = vmatprep.subr.bf16.mxu0 0
      %1084 = vmatpush1.bf16.msra.mxu0 0
      %1085 = vmatprep.subr.bf16.mxu0 0
      %1086 = vmatpush1.bf16.msra.mxu0 0
      %1087 = vmatprep.subr.bf16.mxu0 0
      %1088 = vmatpush1.bf16.msra.mxu0 0
      %1089 = vmatprep.subr.bf16.mxu0 0
      %1090 = vmatpush1.bf16.msra.mxu0 0
      %1091 = vmatprep.subr.bf16.mxu0 0
      %1092 = vmatpush1.bf16.msra.mxu0 0
      %1093 = vmatprep.subr.bf16.mxu0 0
      %1094 = vmatpush1.bf16.msra.mxu0 0
      %1095 = vmatprep.subr.bf16.mxu0 0
      %1096 = vmatpush1.bf16.msra.mxu0 0
      %1097 = vmatprep.subr.bf16.mxu0 0
      %1098 = vmatpush1.bf16.msra.mxu0 0
      %1099 = vmatprep.subr.bf16.mxu0 0
      %1100 = vmatpush1.bf16.msra.mxu0 0
      %1101 = vmatprep.subr.bf16.mxu0 0
      %1102 = vmatpush1.bf16.msra.mxu0 0
      %1103 = vmatprep.subr.bf16.mxu0 0
      %1104 = vmatpush1.bf16.msra.mxu0 0
      %1105 = vmatprep.subr.bf16.mxu0 0
      %1106 = vmatpush1.bf16.msra.mxu0 0
      %1107 = vmatprep.mubr.bf16.mxu0 0
      %1108 = vmatmul.mubr.bf16.gmra.mrb[0].mxu0 %v1070
      %v1109 = vpop.f32.mrb[0].mxu0
      %v1110 = vadd.f32 0.0, %v1109
      %v1111 = vpop.f32.mrb[0].mxu0
      %v1112 = vpop.f32.mrb[0].mxu0
      %v1113 = vpop.f32.mrb[0].mxu0
      %1114 = vdwg.mxu0
      %v1116 = vsel %vm838, %v950, 0
      %v1119 = vsel %vm906, %v951, 0
      %1121 = vmatprep.subr.bf16.mxu0 0
      %1122 = vmatpush1.bf16.msra.mxu0 %v1119
      %1123 = vmatprep.subr.bf16.mxu0 0
      %1124 = vmatpush1.bf16.msra.mxu0 0
      %1125 = vmatprep.subr.bf16.mxu0 0
      %1126 = vmatpush1.bf16.msra.mxu0 0
      %1127 = vmatprep.subr.bf16.mxu0 0
      %1128 = vmatpush1.bf16.msra.mxu0 0
      %1129 = vmatprep.subr.bf16.mxu0 0
      %1130 = vmatpush1.bf16.msra.mxu0 0
      %1131 = vmatprep.subr.bf16.mxu0 0
      %1132 = vmatpush1.bf16.msra.mxu0 0
      %1133 = vmatprep.subr.bf16.mxu0 0
      %1134 = vmatpush1.bf16.msra.mxu0 0
      %1135 = vmatprep.subr.bf16.mxu0 0
      %1136 = vmatpush1.bf16.msra.mxu0 0
      %1137 = vmatprep.subr.bf16.mxu0 0
      %1138 = vmatpush1.bf16.msra.mxu0 0
      %1139 = vmatprep.subr.bf16.mxu0 0
      %1140 = vmatpush1.bf16.msra.mxu0 0
      %1141 = vmatprep.subr.bf16.mxu0 0
      %1142 = vmatpush1.bf16.msra.mxu0 0
      %1143 = vmatprep.subr.bf16.mxu0 0
      %1144 = vmatpush1.bf16.msra.mxu0 0
      %1145 = vmatprep.subr.bf16.mxu0 0
      %1146 = vmatpush1.bf16.msra.mxu0 0
      %1147 = vmatprep.subr.bf16.mxu0 0
      %1148 = vmatpush1.bf16.msra.mxu0 0
      %1149 = vmatprep.subr.bf16.mxu0 0
      %1150 = vmatpush1.bf16.msra.mxu0 0
      %1151 = vmatprep.subr.bf16.mxu0 0
      %1152 = vmatpush1.bf16.msra.mxu0 0
      %1153 = vmatprep.mubr.bf16.mxu0 0
      %1154 = vmatmul.mubr.bf16.gmra.mrb[0].mxu0 %v1116
      %v1155 = vpop.f32.mrb[0].mxu0
      %v1156 = vadd.f32 %v1110, %v1155
      %v1157 = vpop.f32.mrb[0].mxu0
      %v1158 = vpop.f32.mrb[0].mxu0
      %v1159 = vpop.f32.mrb[0].mxu0
      %1160 = vdwg.mxu0
      %1161 = vrot.lane.b32.xlu0 %v833, 112
      %v1162 = vpop.permute.xlu0 %1161
      %1163 = vrot.lane.b32.xlu0 %v834, 80
      %v1164 = vpop.permute.xlu0 %1163
      %v1165 = vrot.slane %v729, 2
      %v1168 = vsel %vm838, %v1162, 0
      %v1171 = vsel %vm838, %v1164, 0
      %1173 = vmatprep.subr.bf16.mxu0 0
      %1174 = vmatpush1.bf16.xpose.msra.mxu0 %v1171
      %1175 = vmatprep.subr.bf16.mxu0 0
      %1176 = vmatpush1.bf16.xpose.msra.mxu0 0
      %1177 = vmatprep.subr.bf16.mxu0 0
      %1178 = vmatpush1.bf16.xpose.msra.mxu0 0
      %1179 = vmatprep.subr.bf16.mxu0 0
      %1180 = vmatpush1.bf16.xpose.msra.mxu0 0
      %1181 = vmatprep.subr.bf16.mxu0 0
      %1182 = vmatpush1.bf16.xpose.msra.mxu0 0
      %1183 = vmatprep.subr.bf16.mxu0 0
      %1184 = vmatpush1.bf16.xpose.msra.mxu0 0
      %1185 = vmatprep.subr.bf16.mxu0 0
      %1186 = vmatpush1.bf16.xpose.msra.mxu0 0
      %1187 = vmatprep.subr.bf16.mxu0 0
      %1188 = vmatpush1.bf16.xpose.msra.mxu0 0
      %1189 = vmatprep.subr.bf16.mxu0 0
      %1190 = vmatpush1.bf16.xpose.msra.mxu0 0
      %1191 = vmatprep.subr.bf16.mxu0 0
      %1192 = vmatpush1.bf16.xpose.msra.mxu0 0
      %1193 = vmatprep.subr.bf16.mxu0 0
      %1194 = vmatpush1.bf16.xpose.msra.mxu0 0
      %1195 = vmatprep.subr.bf16.mxu0 0
      %1196 = vmatpush1.bf16.xpose.msra.mxu0 0
      %1197 = vmatprep.subr.bf16.mxu0 0
      %1198 = vmatpush1.bf16.xpose.msra.mxu0 0
      %1199 = vmatprep.subr.bf16.mxu0 0
      %1200 = vmatpush1.bf16.xpose.msra.mxu0 0
      %1201 = vmatprep.subr.bf16.mxu0 0
      %1202 = vmatpush1.bf16.xpose.msra.mxu0 0
      %1203 = vmatprep.subr.bf16.mxu0 0
      %1204 = vmatpush1.bf16.xpose.msra.mxu0 0
      %1205 = vmatprep.mubr.bf16.mxu0 0
      %1206 = vmatmul.mubr.bf16.gmra.mrb[0].mxu0 %v1168
      %v1207 = vpop.f32.mrb[0].mxu0
      %v1208 = vadd.f32 %v1165, %v1207
      %v1209 = vpop.f32.mrb[0].mxu0
      %v1210 = vpop.f32.mrb[0].mxu0
      %v1211 = vpop.f32.mrb[0].mxu0
      %1212 = vdwg.mxu0
      %v1213 = vadd.f32 %v1208, %v828
      %v1214 = vsel %vm886, %v1213, -inf
      %1215 = vmax.xlane.f32.xlu0 %v1214
      %v1216 = vpop.xlane.xlu0 %1215
      %v1217 = vsub.f32 %v1213, %v1216
      %v1218 = vmul.f32 %v1217, 1.442695
      %v1219 = vpow.pop %v1218
      %v1220 = vsel %vm886, %v1219, 0.0
      %1221 = vadd.xlane.f32.xlu0 %v1220
      %v1222 = vpop.xlane.xlu0 %1221
      %v1223 = vrcp.pop %v1222
      %v1224 = vmul.f32 %v1219, %v1223
      %v1225 = vpack.c.bf16 %v1224, %v1224
      %1226 = vrot.lane.b32.xlu0 %v899, 48
      %v1227 = vpop.permute.xlu0 %1226
      %v1229 = vsel %vm838, %v1225, 0
      %v1232 = vsel %vm906, %v1227, 0
      %1234 = vmatprep.subr.bf16.mxu0 0
      %1235 = vmatpush1.bf16.msra.mxu0 %v1232
      %1236 = vmatprep.subr.bf16.mxu0 0
      %1237 = vmatpush1.bf16.msra.mxu0 0
      %1238 = vmatprep.subr.bf16.mxu0 0
      %1239 = vmatpush1.bf16.msra.mxu0 0
      %1240 = vmatprep.subr.bf16.mxu0 0
      %1241 = vmatpush1.bf16.msra.mxu0 0
      %1242 = vmatprep.subr.bf16.mxu0 0
      %1243 = vmatpush1.bf16.msra.mxu0 0
      %1244 = vmatprep.subr.bf16.mxu0 0
      %1245 = vmatpush1.bf16.msra.mxu0 0
      %1246 = vmatprep.subr.bf16.mxu0 0
      %1247 = vmatpush1.bf16.msra.mxu0 0
      %1248 = vmatprep.subr.bf16.mxu0 0
      %1249 = vmatpush1.bf16.msra.mxu0 0
      %1250 = vmatprep.subr.bf16.mxu0 0
      %1251 = vmatpush1.bf16.msra.mxu0 0
      %1252 = vmatprep.subr.bf16.mxu0 0
      %1253 = vmatpush1.bf16.msra.mxu0 0
      %1254 = vmatprep.subr.bf16.mxu0 0
      %1255 = vmatpush1.bf16.msra.mxu0 0
      %1256 = vmatprep.subr.bf16.mxu0 0
      %1257 = vmatpush1.bf16.msra.mxu0 0
      %1258 = vmatprep.subr.bf16.mxu0 0
      %1259 = vmatpush1.bf16.msra.mxu0 0
      %1260 = vmatprep.subr.bf16.mxu0 0
      %1261 = vmatpush1.bf16.msra.mxu0 0
      %1262 = vmatprep.subr.bf16.mxu0 0
      %1263 = vmatpush1.bf16.msra.mxu0 0
      %1264 = vmatprep.subr.bf16.mxu0 0
      %1265 = vmatpush1.bf16.msra.mxu0 0
      %1266 = vmatprep.mubr.bf16.mxu0 0
      %1267 = vmatmul.mubr.bf16.gmra.mrb[0].mxu0 %v1229
      %v1268 = vpop.f32.mrb[0].mxu0
      %v1269 = vadd.f32 0.0, %v1268
      %v1270 = vpop.f32.mrb[0].mxu0
      %v1271 = vpop.f32.mrb[0].mxu0
      %v1272 = vpop.f32.mrb[0].mxu0
      %1273 = vdwg.mxu0
      %v1274 = vpack.c.bf16 %v1269, %v1269
      %v1275 = vpack.c.bf16 %v831, %v831
      %v1277 = vsel %vm838, %v1274, 0
      %v1280 = vsel %vm906, %v1275, 0
      %1282 = vmatprep.subr.bf16.mxu0 0
      %1283 = vmatpush1.bf16.msra.mxu0 %v1280
      %1284 = vmatprep.subr.bf16.mxu0 0
      %1285 = vmatpush1.bf16.msra.mxu0 0
      %1286 = vmatprep.subr.bf16.mxu0 0
      %1287 = vmatpush1.bf16.msra.mxu0 0
      %1288 = vmatprep.subr.bf16.mxu0 0
      %1289 = vmatpush1.bf16.msra.mxu0 0
      %1290 = vmatprep.subr.bf16.mxu0 0
      %1291 = vmatpush1.bf16.msra.mxu0 0
      %1292 = vmatprep.subr.bf16.mxu0 0
      %1293 = vmatpush1.bf16.msra.mxu0 0
      %1294 = vmatprep.subr.bf16.mxu0 0
      %1295 = vmatpush1.bf16.msra.mxu0 0
      %1296 = vmatprep.subr.bf16.mxu0 0
      %1297 = vmatpush1.bf16.msra.mxu0 0
      %1298 = vmatprep.subr.bf16.mxu0 0
      %1299 = vmatpush1.bf16.msra.mxu0 0
      %1300 = vmatprep.subr.bf16.mxu0 0
      %1301 = vmatpush1.bf16.msra.mxu0 0
      %1302 = vmatprep.subr.bf16.mxu0 0
      %1303 = vmatpush1.bf16.msra.mxu0 0
      %1304 = vmatprep.subr.bf16.mxu0 0
      %1305 = vmatpush1.bf16.msra.mxu0 0
      %1306 = vmatprep.subr.bf16.mxu0 0
      %1307 = vmatpush1.bf16.msra.mxu0 0
      %1308 = vmatprep.subr.bf16.mxu0 0
      %1309 = vmatpush1.bf16.msra.mxu0 0
      %1310 = vmatprep.subr.bf16.mxu0 0
      %1311 = vmatpush1.bf16.msra.mxu0 0
      %1312 = vmatprep.subr.bf16.mxu0 0
      %1313 = vmatpush1.bf16.msra.mxu0 0
      %1314 = vmatprep.mubr.bf16.mxu0 0
      %1315 = vmatmul.mubr.bf16.gmra.mrb[0].mxu0 %v1277
      %v1316 = vpop.f32.mrb[0].mxu0
      %v1317 = vadd.f32 0.0, %v1316
      %v1318 = vpop.f32.mrb[0].mxu0
      %v1319 = vpop.f32.mrb[0].mxu0
      %v1320 = vpop.f32.mrb[0].mxu0
      %1321 = vdwg.mxu0
      %v1322 = vadd.f32 %v1156, %v1317
      %1323 = vrot.lane.b32.xlu0 %v833, 104
      %v1324 = vpop.permute.xlu0 %1323
      %1325 = vrot.lane.b32.xlu0 %v834, 72
      %v1326 = vpop.permute.xlu0 %1325
      %v1327 = vrot.slane %v729, 3
      %v1330 = vsel %vm838, %v1324, 0
      %v1333 = vsel %vm838, %v1326, 0
      %1335 = vmatprep.subr.bf16.mxu0 0
      %1336 = vmatpush1.bf16.xpose.msra.mxu0 %v1333
      %1337 = vmatprep.subr.bf16.mxu0 0
      %1338 = vmatpush1.bf16.xpose.msra.mxu0 0
      %1339 = vmatprep.subr.bf16.mxu0 0
      %1340 = vmatpush1.bf16.xpose.msra.mxu0 0
      %1341 = vmatprep.subr.bf16.mxu0 0
      %1342 = vmatpush1.bf16.xpose.msra.mxu0 0
      %1343 = vmatprep.subr.bf16.mxu0 0
      %1344 = vmatpush1.bf16.xpose.msra.mxu0 0
      %1345 = vmatprep.subr.bf16.mxu0 0
      %1346 = vmatpush1.bf16.xpose.msra.mxu0 0
      %1347 = vmatprep.subr.bf16.mxu0 0
      %1348 = vmatpush1.bf16.xpose.msra.mxu0 0
      %1349 = vmatprep.subr.bf16.mxu0 0
      %1350 = vmatpush1.bf16.xpose.msra.mxu0 0
      %1351 = vmatprep.subr.bf16.mxu0 0
      %1352 = vmatpush1.bf16.xpose.msra.mxu0 0
      %1353 = vmatprep.subr.bf16.mxu0 0
      %1354 = vmatpush1.bf16.xpose.msra.mxu0 0
      %1355 = vmatprep.subr.bf16.mxu0 0
      %1356 = vmatpush1.bf16.xpose.msra.mxu0 0
      %1357 = vmatprep.subr.bf16.mxu0 0
      %1358 = vmatpush1.bf16.xpose.msra.mxu0 0
      %1359 = vmatprep.subr.bf16.mxu0 0
      %1360 = vmatpush1.bf16.xpose.msra.mxu0 0
      %1361 = vmatprep.subr.bf16.mxu0 0
      %1362 = vmatpush1.bf16.xpose.msra.mxu0 0
      %1363 = vmatprep.subr.bf16.mxu0 0
      %1364 = vmatpush1.bf16.xpose.msra.mxu0 0
      %1365 = vmatprep.subr.bf16.mxu0 0
      %1366 = vmatpush1.bf16.xpose.msra.mxu0 0
      %1367 = vmatprep.mubr.bf16.mxu0 0
      %1368 = vmatmul.mubr.bf16.gmra.mrb[0].mxu0 %v1330
      %v1369 = vpop.f32.mrb[0].mxu0
      %v1370 = vadd.f32 %v1327, %v1369
      %v1371 = vpop.f32.mrb[0].mxu0
      %v1372 = vpop.f32.mrb[0].mxu0
      %v1373 = vpop.f32.mrb[0].mxu0
      %1374 = vdwg.mxu0
      %v1375 = vadd.f32 %v1370, %v828
      %v1376 = vsel %vm886, %v1375, -inf
      %1377 = vmax.xlane.f32.xlu0 %v1376
      %v1378 = vpop.xlane.xlu0 %1377
      %v1379 = vsub.f32 %v1375, %v1378
      %v1380 = vmul.f32 %v1379, 1.442695
      %v1381 = vpow.pop %v1380
      %v1382 = vsel %vm886, %v1381, 0.0
      %1383 = vadd.xlane.f32.xlu0 %v1382
      %v1384 = vpop.xlane.xlu0 %1383
      %v1385 = vrcp.pop %v1384
      %v1386 = vmul.f32 %v1381, %v1385
      %v1387 = vpack.c.bf16 %v1386, %v1386
      %1388 = vrot.lane.b32.xlu0 %v899, 40
      %v1389 = vpop.permute.xlu0 %1388
      %v1391 = vsel %vm838, %v1387, 0
      %v1394 = vsel %vm906, %v1389, 0
      %1396 = vmatprep.subr.bf16.mxu0 0
      %1397 = vmatpush1.bf16.msra.mxu0 %v1394
      %1398 = vmatprep.subr.bf16.mxu0 0
      %1399 = vmatpush1.bf16.msra.mxu0 0
      %1400 = vmatprep.subr.bf16.mxu0 0
      %1401 = vmatpush1.bf16.msra.mxu0 0
      %1402 = vmatprep.subr.bf16.mxu0 0
      %1403 = vmatpush1.bf16.msra.mxu0 0
      %1404 = vmatprep.subr.bf16.mxu0 0
      %1405 = vmatpush1.bf16.msra.mxu0 0
      %1406 = vmatprep.subr.bf16.mxu0 0
      %1407 = vmatpush1.bf16.msra.mxu0 0
      %1408 = vmatprep.subr.bf16.mxu0 0
      %1409 = vmatpush1.bf16.msra.mxu0 0
      %1410 = vmatprep.subr.bf16.mxu0 0
      %1411 = vmatpush1.bf16.msra.mxu0 0
      %1412 = vmatprep.subr.bf16.mxu0 0
      %1413 = vmatpush1.bf16.msra.mxu0 0
      %1414 = vmatprep.subr.bf16.mxu0 0
      %1415 = vmatpush1.bf16.msra.mxu0 0
      %1416 = vmatprep.subr.bf16.mxu0 0
      %1417 = vmatpush1.bf16.msra.mxu0 0
      %1418 = vmatprep.subr.bf16.mxu0 0
      %1419 = vmatpush1.bf16.msra.mxu0 0
      %1420 = vmatprep.subr.bf16.mxu0 0
      %1421 = vmatpush1.bf16.msra.mxu0 0
      %1422 = vmatprep.subr.bf16.mxu0 0
      %1423 = vmatpush1.bf16.msra.mxu0 0
      %1424 = vmatprep.subr.bf16.mxu0 0
      %1425 = vmatpush1.bf16.msra.mxu0 0
      %1426 = vmatprep.subr.bf16.mxu0 0
      %1427 = vmatpush1.bf16.msra.mxu0 0
      %1428 = vmatprep.mubr.bf16.mxu0 0
      %1429 = vmatmul.mubr.bf16.gmra.mrb[0].mxu0 %v1391
      %v1430 = vpop.f32.mrb[0].mxu0
      %v1431 = vadd.f32 0.0, %v1430
      %v1432 = vpop.f32.mrb[0].mxu0
      %v1433 = vpop.f32.mrb[0].mxu0
      %v1434 = vpop.f32.mrb[0].mxu0
      %1435 = vdwg.mxu0
      %v1436 = vpack.c.bf16 %v1431, %v1431
      %v1437 = vpack.c.bf16 %v832, %v832
      %v1439 = vsel %vm838, %v1436, 0
      %v1442 = vsel %vm906, %v1437, 0
      %1444 = vmatprep.subr.bf16.mxu0 0
      %1445 = vmatpush1.bf16.msra.mxu0 %v1442
      %1446 = vmatprep.subr.bf16.mxu0 0
      %1447 = vmatpush1.bf16.msra.mxu0 0
      %1448 = vmatprep.subr.bf16.mxu0 0
      %1449 = vmatpush1.bf16.msra.mxu0 0
      %1450 = vmatprep.subr.bf16.mxu0 0
      %1451 = vmatpush1.bf16.msra.mxu0 0
      %1452 = vmatprep.subr.bf16.mxu0 0
      %1453 = vmatpush1.bf16.msra.mxu0 0
      %1454 = vmatprep.subr.bf16.mxu0 0
      %1455 = vmatpush1.bf16.msra.mxu0 0
      %1456 = vmatprep.subr.bf16.mxu0 0
      %1457 = vmatpush1.bf16.msra.mxu0 0
      %1458 = vmatprep.subr.bf16.mxu0 0
      %1459 = vmatpush1.bf16.msra.mxu0 0
      %1460 = vmatprep.subr.bf16.mxu0 0
      %1461 = vmatpush1.bf16.msra.mxu0 0
      %1462 = vmatprep.subr.bf16.mxu0 0
      %1463 = vmatpush1.bf16.msra.mxu0 0
      %1464 = vmatprep.subr.bf16.mxu0 0
      %1465 = vmatpush1.bf16.msra.mxu0 0
      %1466 = vmatprep.subr.bf16.mxu0 0
      %1467 = vmatpush1.bf16.msra.mxu0 0
      %1468 = vmatprep.subr.bf16.mxu0 0
      %1469 = vmatpush1.bf16.msra.mxu0 0
      %1470 = vmatprep.subr.bf16.mxu0 0
      %1471 = vmatpush1.bf16.msra.mxu0 0
      %1472 = vmatprep.subr.bf16.mxu0 0
      %1473 = vmatpush1.bf16.msra.mxu0 0
      %1474 = vmatprep.subr.bf16.mxu0 0
      %1475 = vmatpush1.bf16.msra.mxu0 0
      %1476 = vmatprep.mubr.bf16.mxu0 0
      %1477 = vmatmul.mubr.bf16.gmra.mrb[0].mxu0 %v1439
      %v1478 = vpop.f32.mrb[0].mxu0
      %v1479 = vadd.f32 0.0, %v1478
      %v1480 = vpop.f32.mrb[0].mxu0
      %v1481 = vpop.f32.mrb[0].mxu0
      %v1482 = vpop.f32.mrb[0].mxu0
      %1483 = vdwg.mxu0
      %v1484 = vadd.f32 %v1322, %v1479
      %v1485 = vadd.f32 %v727, %v1484
      %v1486 = vld [vmem:[%s11] sm:$0x1]
      %v1487 = vmul.f32 %v1485, %v1485
      %v1488 = vsel %vm732, %v1487, 0.0
      %1489 = vadd.xlane.f32.xlu0 %v1488
      %v1490 = vpop.xlane.xlu0 %1489
      %v1491 = vmul.f32 %v1490, %v736
      %v1492 = vadd.f32 %v1491, 1e-06
      %v1493 = vrsqrt.pop %v1492
      %v1494 = vmul.f32 %v1485, %v1493
      %v1495 = vmul.f32 %v1494, %v1486
      %v1496 = vld [vmem:[%s12] sm:$0xff]
      %v1497 = vld [vmem:[%s12 + $0x8] sm:$0xff]
      %v1498 = vld [vmem:[%s12 + $0x10] sm:$0xff]
      %v1499 = vld [vmem:[%s12 + $0x18] sm:$0xff]
      %v1500 = vpack.c.bf16 %v1495, %v1495
      %v1501 = vpack.c.bf16 %v1497, %v1496
      %v1502 = vpack.c.bf16 %v1499, %v1498
      %v1504 = vsel %vm749, %v1500, 0
      %1506 = vmatprep.subr.bf16.mxu0 0
      %1507 = vmatpush1.bf16.msra.mxu0 %v1501
      %1508 = vmatprep.subr.bf16.mxu0 0
      %1509 = vmatpush1.bf16.msra.mxu0 %v1502
      %1510 = vmatprep.subr.bf16.mxu0 0
      %1511 = vmatpush1.bf16.msra.mxu0 0
      %1512 = vmatprep.subr.bf16.mxu0 0
      %1513 = vmatpush1.bf16.msra.mxu0 0
      %1514 = vmatprep.subr.bf16.mxu0 0
      %1515 = vmatpush1.bf16.msra.mxu0 0
      %1516 = vmatprep.subr.bf16.mxu0 0
      %1517 = vmatpush1.bf16.msra.mxu0 0
      %1518 = vmatprep.subr.bf16.mxu0 0
      %1519 = vmatpush1.bf16.msra.mxu0 0
      %1520 = vmatprep.subr.bf16.mxu0 0
      %1521 = vmatpush1.bf16.msra.mxu0 0
      %1522 = vmatprep.subr.bf16.mxu0 0
      %1523 = vmatpush1.bf16.msra.mxu0 0
      %1524 = vmatprep.subr.bf16.mxu0 0
      %1525 = vmatpush1.bf16.msra.mxu0 0
      %1526 = vmatprep.subr.bf16.mxu0 0
      %1527 = vmatpush1.bf16.msra.mxu0 0
      %1528 = vmatprep.subr.bf16.mxu0 0
      %1529 = vmatpush1.bf16.msra.mxu0 0
      %1530 = vmatprep.subr.bf16.mxu0 0
      %1531 = vmatpush1.bf16.msra.mxu0 0
      %1532 = vmatprep.subr.bf16.mxu0 0
      %1533 = vmatpush1.bf16.msra.mxu0 0
      %1534 = vmatprep.subr.bf16.mxu0 0
      %1535 = vmatpush1.bf16.msra.mxu0 0
      %1536 = vmatprep.subr.bf16.mxu0 0
      %1537 = vmatpush1.bf16.msra.mxu0 0
      %1538 = vmatprep.mubr.bf16.mxu0 0
      %1539 = vmatmul.mubr.bf16.gmra.mrb[0].mxu0 %v1504
      %v1540 = vpop.f32.mrb[0].mxu0
      %v1541 = vadd.f32 0.0, %v1540
      %v1542 = vpop.f32.mrb[0].mxu0
      %v1543 = vpop.f32.mrb[0].mxu0
      %v1544 = vpop.f32.mrb[0].mxu0
      %1545 = vdwg.mxu0
      %v1546 = vld [vmem:[%s709] sm:$0xff]
      %v1547 = vld [vmem:[%s713] sm:$0xff]
      %v1548 = vld [vmem:[%s13] sm:$0xff]
      %v1549 = vld [vmem:[%s13 + $0x8] sm:$0xff]
      %v1550 = vld [vmem:[%s13 + $0x10] sm:$0xff]
      %v1551 = vld [vmem:[%s13 + $0x18] sm:$0xff]
      %v1552 = vpack.c.bf16 %v1541, %v1541
      %v1553 = vpack.c.bf16 %v1546, %v1546
      %v1555 = vsel %vm838, %v1552, 0
      %v1558 = vsel %vm838, %v1553, 0
      %1560 = vmatprep.subr.bf16.mxu0 0
      %1561 = vmatpush1.bf16.xpose.msra.mxu0 %v1558
      %1562 = vmatprep.subr.bf16.mxu0 0
      %1563 = vmatpush1.bf16.xpose.msra.mxu0 0
      %1564 = vmatprep.subr.bf16.mxu0 0
      %1565 = vmatpush1.bf16.xpose.msra.mxu0 0
      %1566 = vmatprep.subr.bf16.mxu0 0
      %1567 = vmatpush1.bf16.xpose.msra.mxu0 0
      %1568 = vmatprep.subr.bf16.mxu0 0
      %1569 = vmatpush1.bf16.xpose.msra.mxu0 0
      %1570 = vmatprep.subr.bf16.mxu0 0
      %1571 = vmatpush1.bf16.xpose.msra.mxu0 0
      %1572 = vmatprep.subr.bf16.mxu0 0
      %1573 = vmatpush1.bf16.xpose.msra.mxu0 0
      %1574 = vmatprep.subr.bf16.mxu0 0
      %1575 = vmatpush1.bf16.xpose.msra.mxu0 0
      %1576 = vmatprep.subr.bf16.mxu0 0
      %1577 = vmatpush1.bf16.xpose.msra.mxu0 0
      %1578 = vmatprep.subr.bf16.mxu0 0
      %1579 = vmatpush1.bf16.xpose.msra.mxu0 0
      %1580 = vmatprep.subr.bf16.mxu0 0
      %1581 = vmatpush1.bf16.xpose.msra.mxu0 0
      %1582 = vmatprep.subr.bf16.mxu0 0
      %1583 = vmatpush1.bf16.xpose.msra.mxu0 0
      %1584 = vmatprep.subr.bf16.mxu0 0
      %1585 = vmatpush1.bf16.xpose.msra.mxu0 0
      %1586 = vmatprep.subr.bf16.mxu0 0
      %1587 = vmatpush1.bf16.xpose.msra.mxu0 0
      %1588 = vmatprep.subr.bf16.mxu0 0
      %1589 = vmatpush1.bf16.xpose.msra.mxu0 0
      %1590 = vmatprep.subr.bf16.mxu0 0
      %1591 = vmatpush1.bf16.xpose.msra.mxu0 0
      %1592 = vmatprep.mubr.bf16.mxu0 0
      %1593 = vmatmul.mubr.bf16.gmra.mrb[0].mxu0 %v1555
      %v1594 = vpop.f32.mrb[0].mxu0
      %v1595 = vadd.f32 %v728, %v1594
      %v1596 = vpop.f32.mrb[0].mxu0
      %v1597 = vpop.f32.mrb[0].mxu0
      %v1598 = vpop.f32.mrb[0].mxu0
      %1599 = vdwg.mxu0
      %v1600 = vsel %vm886, %v1595, -inf
      %1601 = vmax.xlane.f32.xlu0 %v1600
      %v1602 = vpop.xlane.xlu0 %1601
      %v1603 = vsub.f32 %v1595, %v1602
      %v1604 = vmul.f32 %v1603, 1.442695
      %v1605 = vpow.pop %v1604
      %v1606 = vsel %vm886, %v1605, 0.0
      %1607 = vadd.xlane.f32.xlu0 %v1606
      %v1608 = vpop.xlane.xlu0 %1607
      %v1609 = vrcp.pop %v1608
      %v1610 = vmul.f32 %v1605, %v1609
      %v1611 = vpack.c.bf16 %v1610, %v1610
      %v1612 = vpack.c.bf16 %v1547, %v1547
      %v1614 = vsel %vm838, %v1611, 0
      %v1617 = vsel %vm906, %v1612, 0
      %1619 = vmatprep.subr.bf16.mxu0 0
      %1620 = vmatpush1.bf16.msra.mxu0 %v1617
      %1621 = vmatprep.subr.bf16.mxu0 0
      %1622 = vmatpush1.bf16.msra.mxu0 0
      %1623 = vmatprep.subr.bf16.mxu0 0
      %1624 = vmatpush1.bf16.msra.mxu0 0
      %1625 = vmatprep.subr.bf16.mxu0 0
      %1626 = vmatpush1.bf16.msra.mxu0 0
      %1627 = vmatprep.subr.bf16.mxu0 0
      %1628 = vmatpush1.bf16.msra.mxu0 0
      %1629 = vmatprep.subr.bf16.mxu0 0
      %1630 = vmatpush1.bf16.msra.mxu0 0
      %1631 = vmatprep.subr.bf16.mxu0 0
      %1632 = vmatpush1.bf16.msra.mxu0 0
      %1633 = vmatprep.subr.bf16.mxu0 0
      %1634 = vmatpush1.bf16.msra.mxu0 0
      %1635 = vmatprep.subr.bf16.mxu0 0
      %1636 = vmatpush1.bf16.msra.mxu0 0
      %1637 = vmatprep.subr.bf16.mxu0 0
      %1638 = vmatpush1.bf16.msra.mxu0 0
      %1639 = vmatprep.subr.bf16.mxu0 0
      %1640 = vmatpush1.bf16.msra.mxu0 0
      %1641 = vmatprep.subr.bf16.mxu0 0
      %1642 = vmatpush1.bf16.msra.mxu0 0
      %1643 = vmatprep.subr.bf16.mxu0 0
      %1644 = vmatpush1.bf16.msra.mxu0 0
      %1645 = vmatprep.subr.bf16.mxu0 0
      %1646 = vmatpush1.bf16.msra.mxu0 0
      %1647 = vmatprep.subr.bf16.mxu0 0
      %1648 = vmatpush1.bf16.msra.mxu0 0
      %1649 = vmatprep.subr.bf16.mxu0 0
      %1650 = vmatpush1.bf16.msra.mxu0 0
      %1651 = vmatprep.mubr.bf16.mxu0 0
      %1652 = vmatmul.mubr.bf16.gmra.mrb[0].mxu0 %v1614
      %v1653 = vpop.f32.mrb[0].mxu0
      %v1654 = vadd.f32 0.0, %v1653
      %v1655 = vpop.f32.mrb[0].mxu0
      %v1656 = vpop.f32.mrb[0].mxu0
      %v1657 = vpop.f32.mrb[0].mxu0
      %1658 = vdwg.mxu0
      %v1659 = vpack.c.bf16 %v1654, %v1654
      %v1660 = vpack.c.bf16 %v1548, %v1548
      %1662 = vrot.lane.b32.xlu0 %v1552, 120
      %v1663 = vpop.permute.xlu0 %1662
      %1665 = vrot.lane.b32.xlu0 %v1553, 120
      %v1666 = vpop.permute.xlu0 %1665
      %v1668 = vsel %vm838, %v1663, 0
      %v1671 = vsel %vm838, %v1666, 0
      %1673 = vmatprep.subr.bf16.mxu0 0
      %1674 = vmatpush1.bf16.xpose.msra.mxu0 %v1671
      %1675 = vmatprep.subr.bf16.mxu0 0
      %1676 = vmatpush1.bf16.xpose.msra.mxu0 0
      %1677 = vmatprep.subr.bf16.mxu0 0
      %1678 = vmatpush1.bf16.xpose.msra.mxu0 0
      %1679 = vmatprep.subr.bf16.mxu0 0
      %1680 = vmatpush1.bf16.xpose.msra.mxu0 0
      %1681 = vmatprep.subr.bf16.mxu0 0
      %1682 = vmatpush1.bf16.xpose.msra.mxu0 0
      %1683 = vmatprep.subr.bf16.mxu0 0
      %1684 = vmatpush1.bf16.xpose.msra.mxu0 0
      %1685 = vmatprep.subr.bf16.mxu0 0
      %1686 = vmatpush1.bf16.xpose.msra.mxu0 0
      %1687 = vmatprep.subr.bf16.mxu0 0
      %1688 = vmatpush1.bf16.xpose.msra.mxu0 0
      %1689 = vmatprep.subr.bf16.mxu0 0
      %1690 = vmatpush1.bf16.xpose.msra.mxu0 0
      %1691 = vmatprep.subr.bf16.mxu0 0
      %1692 = vmatpush1.bf16.xpose.msra.mxu0 0
      %1693 = vmatprep.subr.bf16.mxu0 0
      %1694 = vmatpush1.bf16.xpose.msra.mxu0 0
      %1695 = vmatprep.subr.bf16.mxu0 0
      %1696 = vmatpush1.bf16.xpose.msra.mxu0 0
      %1697 = vmatprep.subr.bf16.mxu0 0
      %1698 = vmatpush1.bf16.xpose.msra.mxu0 0
      %1699 = vmatprep.subr.bf16.mxu0 0
      %1700 = vmatpush1.bf16.xpose.msra.mxu0 0
      %1701 = vmatprep.subr.bf16.mxu0 0
      %1702 = vmatpush1.bf16.xpose.msra.mxu0 0
      %1703 = vmatprep.subr.bf16.mxu0 0
      %1704 = vmatpush1.bf16.xpose.msra.mxu0 0
      %1705 = vmatprep.mubr.bf16.mxu0 0
      %1706 = vmatmul.mubr.bf16.gmra.mrb[0].mxu0 %v1668
      %v1707 = vpop.f32.mrb[0].mxu0
      %v1708 = vadd.f32 %v728, %v1707
      %v1709 = vpop.f32.mrb[0].mxu0
      %v1710 = vpop.f32.mrb[0].mxu0
      %v1711 = vpop.f32.mrb[0].mxu0
      %1712 = vdwg.mxu0
      %v1713 = vsel %vm886, %v1708, -inf
      %1714 = vmax.xlane.f32.xlu0 %v1713
      %v1715 = vpop.xlane.xlu0 %1714
      %v1716 = vsub.f32 %v1708, %v1715
      %v1717 = vmul.f32 %v1716, 1.442695
      %v1718 = vpow.pop %v1717
      %v1719 = vsel %vm886, %v1718, 0.0
      %1720 = vadd.xlane.f32.xlu0 %v1719
      %v1721 = vpop.xlane.xlu0 %1720
      %v1722 = vrcp.pop %v1721
      %v1723 = vmul.f32 %v1718, %v1722
      %v1724 = vpack.c.bf16 %v1723, %v1723
      %1726 = vrot.lane.b32.xlu0 %v1612, 120
      %v1727 = vpop.permute.xlu0 %1726
      %v1729 = vsel %vm838, %v1724, 0
      %v1732 = vsel %vm906, %v1727, 0
      %1734 = vmatprep.subr.bf16.mxu0 0
      %1735 = vmatpush1.bf16.msra.mxu0 %v1732
      %1736 = vmatprep.subr.bf16.mxu0 0
      %1737 = vmatpush1.bf16.msra.mxu0 0
      %1738 = vmatprep.subr.bf16.mxu0 0
      %1739 = vmatpush1.bf16.msra.mxu0 0
      %1740 = vmatprep.subr.bf16.mxu0 0
      %1741 = vmatpush1.bf16.msra.mxu0 0
      %1742 = vmatprep.subr.bf16.mxu0 0
      %1743 = vmatpush1.bf16.msra.mxu0 0
      %1744 = vmatprep.subr.bf16.mxu0 0
      %1745 = vmatpush1.bf16.msra.mxu0 0
      %1746 = vmatprep.subr.bf16.mxu0 0
      %1747 = vmatpush1.bf16.msra.mxu0 0
      %1748 = vmatprep.subr.bf16.mxu0 0
      %1749 = vmatpush1.bf16.msra.mxu0 0
      %1750 = vmatprep.subr.bf16.mxu0 0
      %1751 = vmatpush1.bf16.msra.mxu0 0
      %1752 = vmatprep.subr.bf16.mxu0 0
      %1753 = vmatpush1.bf16.msra.mxu0 0
      %1754 = vmatprep.subr.bf16.mxu0 0
      %1755 = vmatpush1.bf16.msra.mxu0 0
      %1756 = vmatprep.subr.bf16.mxu0 0
      %1757 = vmatpush1.bf16.msra.mxu0 0
      %1758 = vmatprep.subr.bf16.mxu0 0
      %1759 = vmatpush1.bf16.msra.mxu0 0
      %1760 = vmatprep.subr.bf16.mxu0 0
      %1761 = vmatpush1.bf16.msra.mxu0 0
      %1762 = vmatprep.subr.bf16.mxu0 0
      %1763 = vmatpush1.bf16.msra.mxu0 0
      %1764 = vmatprep.subr.bf16.mxu0 0
      %1765 = vmatpush1.bf16.msra.mxu0 0
      %1766 = vmatprep.mubr.bf16.mxu0 0
      %1767 = vmatmul.mubr.bf16.gmra.mrb[0].mxu0 %v1729
      %v1768 = vpop.f32.mrb[0].mxu0
      %v1769 = vadd.f32 0.0, %v1768
      %v1770 = vpop.f32.mrb[0].mxu0
      %v1771 = vpop.f32.mrb[0].mxu0
      %v1772 = vpop.f32.mrb[0].mxu0
      %1773 = vdwg.mxu0
      %v1774 = vpack.c.bf16 %v1769, %v1769
      %v1775 = vpack.c.bf16 %v1549, %v1549
      %v1777 = vsel %vm838, %v1774, 0
      %v1780 = vsel %vm906, %v1775, 0
      %1782 = vmatprep.subr.bf16.mxu0 0
      %1783 = vmatpush1.bf16.msra.mxu0 %v1780
      %1784 = vmatprep.subr.bf16.mxu0 0
      %1785 = vmatpush1.bf16.msra.mxu0 0
      %1786 = vmatprep.subr.bf16.mxu0 0
      %1787 = vmatpush1.bf16.msra.mxu0 0
      %1788 = vmatprep.subr.bf16.mxu0 0
      %1789 = vmatpush1.bf16.msra.mxu0 0
      %1790 = vmatprep.subr.bf16.mxu0 0
      %1791 = vmatpush1.bf16.msra.mxu0 0
      %1792 = vmatprep.subr.bf16.mxu0 0
      %1793 = vmatpush1.bf16.msra.mxu0 0
      %1794 = vmatprep.subr.bf16.mxu0 0
      %1795 = vmatpush1.bf16.msra.mxu0 0
      %1796 = vmatprep.subr.bf16.mxu0 0
      %1797 = vmatpush1.bf16.msra.mxu0 0
      %1798 = vmatprep.subr.bf16.mxu0 0
      %1799 = vmatpush1.bf16.msra.mxu0 0
      %1800 = vmatprep.subr.bf16.mxu0 0
      %1801 = vmatpush1.bf16.msra.mxu0 0
      %1802 = vmatprep.subr.bf16.mxu0 0
      %1803 = vmatpush1.bf16.msra.mxu0 0
      %1804 = vmatprep.subr.bf16.mxu0 0
      %1805 = vmatpush1.bf16.msra.mxu0 0
      %1806 = vmatprep.subr.bf16.mxu0 0
      %1807 = vmatpush1.bf16.msra.mxu0 0
      %1808 = vmatprep.subr.bf16.mxu0 0
      %1809 = vmatpush1.bf16.msra.mxu0 0
      %1810 = vmatprep.subr.bf16.mxu0 0
      %1811 = vmatpush1.bf16.msra.mxu0 0
      %1812 = vmatprep.subr.bf16.mxu0 0
      %1813 = vmatpush1.bf16.msra.mxu0 0
      %1814 = vmatprep.mubr.bf16.mxu0 0
      %1815 = vmatmul.mubr.bf16.gmra.mrb[0].mxu0 %v1777
      %v1816 = vpop.f32.mrb[0].mxu0
      %v1817 = vadd.f32 0.0, %v1816
      %v1818 = vpop.f32.mrb[0].mxu0
      %v1819 = vpop.f32.mrb[0].mxu0
      %v1820 = vpop.f32.mrb[0].mxu0
      %1821 = vdwg.mxu0
      %v1823 = vsel %vm838, %v1659, 0
      %v1826 = vsel %vm906, %v1660, 0
      %1828 = vmatprep.subr.bf16.mxu0 0
      %1829 = vmatpush1.bf16.msra.mxu0 %v1826
      %1830 = vmatprep.subr.bf16.mxu0 0
      %1831 = vmatpush1.bf16.msra.mxu0 0
      %1832 = vmatprep.subr.bf16.mxu0 0
      %1833 = vmatpush1.bf16.msra.mxu0 0
      %1834 = vmatprep.subr.bf16.mxu0 0
      %1835 = vmatpush1.bf16.msra.mxu0 0
      %1836 = vmatprep.subr.bf16.mxu0 0
      %1837 = vmatpush1.bf16.msra.mxu0 0
      %1838 = vmatprep.subr.bf16.mxu0 0
      %1839 = vmatpush1.bf16.msra.mxu0 0
      %1840 = vmatprep.subr.bf16.mxu0 0
      %1841 = vmatpush1.bf16.msra.mxu0 0
      %1842 = vmatprep.subr.bf16.mxu0 0
      %1843 = vmatpush1.bf16.msra.mxu0 0
      %1844 = vmatprep.subr.bf16.mxu0 0
      %1845 = vmatpush1.bf16.msra.mxu0 0
      %1846 = vmatprep.subr.bf16.mxu0 0
      %1847 = vmatpush1.bf16.msra.mxu0 0
      %1848 = vmatprep.subr.bf16.mxu0 0
      %1849 = vmatpush1.bf16.msra.mxu0 0
      %1850 = vmatprep.subr.bf16.mxu0 0
      %1851 = vmatpush1.bf16.msra.mxu0 0
      %1852 = vmatprep.subr.bf16.mxu0 0
      %1853 = vmatpush1.bf16.msra.mxu0 0
      %1854 = vmatprep.subr.bf16.mxu0 0
      %1855 = vmatpush1.bf16.msra.mxu0 0
      %1856 = vmatprep.subr.bf16.mxu0 0
      %1857 = vmatpush1.bf16.msra.mxu0 0
      %1858 = vmatprep.subr.bf16.mxu0 0
      %1859 = vmatpush1.bf16.msra.mxu0 0
      %1860 = vmatprep.mubr.bf16.mxu0 0
      %1861 = vmatmul.mubr.bf16.gmra.mrb[0].mxu0 %v1823
      %v1862 = vpop.f32.mrb[0].mxu0
      %v1863 = vadd.f32 %v1817, %v1862
      %v1864 = vpop.f32.mrb[0].mxu0
      %v1865 = vpop.f32.mrb[0].mxu0
      %v1866 = vpop.f32.mrb[0].mxu0
      %1867 = vdwg.mxu0
      %1868 = vrot.lane.b32.xlu0 %v1552, 112
      %v1869 = vpop.permute.xlu0 %1868
      %1870 = vrot.lane.b32.xlu0 %v1553, 112
      %v1871 = vpop.permute.xlu0 %1870
      %v1873 = vsel %vm838, %v1869, 0
      %v1876 = vsel %vm838, %v1871, 0
      %1878 = vmatprep.subr.bf16.mxu0 0
      %1879 = vmatpush1.bf16.xpose.msra.mxu0 %v1876
      %1880 = vmatprep.subr.bf16.mxu0 0
      %1881 = vmatpush1.bf16.xpose.msra.mxu0 0
      %1882 = vmatprep.subr.bf16.mxu0 0
      %1883 = vmatpush1.bf16.xpose.msra.mxu0 0
      %1884 = vmatprep.subr.bf16.mxu0 0
      %1885 = vmatpush1.bf16.xpose.msra.mxu0 0
      %1886 = vmatprep.subr.bf16.mxu0 0
      %1887 = vmatpush1.bf16.xpose.msra.mxu0 0
      %1888 = vmatprep.subr.bf16.mxu0 0
      %1889 = vmatpush1.bf16.xpose.msra.mxu0 0
      %1890 = vmatprep.subr.bf16.mxu0 0
      %1891 = vmatpush1.bf16.xpose.msra.mxu0 0
      %1892 = vmatprep.subr.bf16.mxu0 0
      %1893 = vmatpush1.bf16.xpose.msra.mxu0 0
      %1894 = vmatprep.subr.bf16.mxu0 0
      %1895 = vmatpush1.bf16.xpose.msra.mxu0 0
      %1896 = vmatprep.subr.bf16.mxu0 0
      %1897 = vmatpush1.bf16.xpose.msra.mxu0 0
      %1898 = vmatprep.subr.bf16.mxu0 0
      %1899 = vmatpush1.bf16.xpose.msra.mxu0 0
      %1900 = vmatprep.subr.bf16.mxu0 0
      %1901 = vmatpush1.bf16.xpose.msra.mxu0 0
      %1902 = vmatprep.subr.bf16.mxu0 0
      %1903 = vmatpush1.bf16.xpose.msra.mxu0 0
      %1904 = vmatprep.subr.bf16.mxu0 0
      %1905 = vmatpush1.bf16.xpose.msra.mxu0 0
      %1906 = vmatprep.subr.bf16.mxu0 0
      %1907 = vmatpush1.bf16.xpose.msra.mxu0 0
      %1908 = vmatprep.subr.bf16.mxu0 0
      %1909 = vmatpush1.bf16.xpose.msra.mxu0 0
      %1910 = vmatprep.mubr.bf16.mxu0 0
      %1911 = vmatmul.mubr.bf16.gmra.mrb[0].mxu0 %v1873
      %v1912 = vpop.f32.mrb[0].mxu0
      %v1913 = vadd.f32 %v728, %v1912
      %v1914 = vpop.f32.mrb[0].mxu0
      %v1915 = vpop.f32.mrb[0].mxu0
      %v1916 = vpop.f32.mrb[0].mxu0
      %1917 = vdwg.mxu0
      %v1918 = vsel %vm886, %v1913, -inf
      %1919 = vmax.xlane.f32.xlu0 %v1918
      %v1920 = vpop.xlane.xlu0 %1919
      %v1921 = vsub.f32 %v1913, %v1920
      %v1922 = vmul.f32 %v1921, 1.442695
      %v1923 = vpow.pop %v1922
      %v1924 = vsel %vm886, %v1923, 0.0
      %1925 = vadd.xlane.f32.xlu0 %v1924
      %v1926 = vpop.xlane.xlu0 %1925
      %v1927 = vrcp.pop %v1926
      %v1928 = vmul.f32 %v1923, %v1927
      %v1929 = vpack.c.bf16 %v1928, %v1928
      %1930 = vrot.lane.b32.xlu0 %v1612, 112
      %v1931 = vpop.permute.xlu0 %1930
      %v1933 = vsel %vm838, %v1929, 0
      %v1936 = vsel %vm906, %v1931, 0
      %1938 = vmatprep.subr.bf16.mxu0 0
      %1939 = vmatpush1.bf16.msra.mxu0 %v1936
      %1940 = vmatprep.subr.bf16.mxu0 0
      %1941 = vmatpush1.bf16.msra.mxu0 0
      %1942 = vmatprep.subr.bf16.mxu0 0
      %1943 = vmatpush1.bf16.msra.mxu0 0
      %1944 = vmatprep.subr.bf16.mxu0 0
      %1945 = vmatpush1.bf16.msra.mxu0 0
      %1946 = vmatprep.subr.bf16.mxu0 0
      %1947 = vmatpush1.bf16.msra.mxu0 0
      %1948 = vmatprep.subr.bf16.mxu0 0
      %1949 = vmatpush1.bf16.msra.mxu0 0
      %1950 = vmatprep.subr.bf16.mxu0 0
      %1951 = vmatpush1.bf16.msra.mxu0 0
      %1952 = vmatprep.subr.bf16.mxu0 0
      %1953 = vmatpush1.bf16.msra.mxu0 0
      %1954 = vmatprep.subr.bf16.mxu0 0
      %1955 = vmatpush1.bf16.msra.mxu0 0
      %1956 = vmatprep.subr.bf16.mxu0 0
      %1957 = vmatpush1.bf16.msra.mxu0 0
      %1958 = vmatprep.subr.bf16.mxu0 0
      %1959 = vmatpush1.bf16.msra.mxu0 0
      %1960 = vmatprep.subr.bf16.mxu0 0
      %1961 = vmatpush1.bf16.msra.mxu0 0
      %1962 = vmatprep.subr.bf16.mxu0 0
      %1963 = vmatpush1.bf16.msra.mxu0 0
      %1964 = vmatprep.subr.bf16.mxu0 0
      %1965 = vmatpush1.bf16.msra.mxu0 0
      %1966 = vmatprep.subr.bf16.mxu0 0
      %1967 = vmatpush1.bf16.msra.mxu0 0
      %1968 = vmatprep.subr.bf16.mxu0 0
      %1969 = vmatpush1.bf16.msra.mxu0 0
      %1970 = vmatprep.mubr.bf16.mxu0 0
      %1971 = vmatmul.mubr.bf16.gmra.mrb[0].mxu0 %v1933
      %v1972 = vpop.f32.mrb[0].mxu0
      %v1973 = vadd.f32 0.0, %v1972
      %v1974 = vpop.f32.mrb[0].mxu0
      %v1975 = vpop.f32.mrb[0].mxu0
      %v1976 = vpop.f32.mrb[0].mxu0
      %1977 = vdwg.mxu0
      %v1978 = vpack.c.bf16 %v1973, %v1973
      %v1979 = vpack.c.bf16 %v1550, %v1550
      %v1981 = vsel %vm838, %v1978, 0
      %v1984 = vsel %vm906, %v1979, 0
      %1986 = vmatprep.subr.bf16.mxu0 0
      %1987 = vmatpush1.bf16.msra.mxu0 %v1984
      %1988 = vmatprep.subr.bf16.mxu0 0
      %1989 = vmatpush1.bf16.msra.mxu0 0
      %1990 = vmatprep.subr.bf16.mxu0 0
      %1991 = vmatpush1.bf16.msra.mxu0 0
      %1992 = vmatprep.subr.bf16.mxu0 0
      %1993 = vmatpush1.bf16.msra.mxu0 0
      %1994 = vmatprep.subr.bf16.mxu0 0
      %1995 = vmatpush1.bf16.msra.mxu0 0
      %1996 = vmatprep.subr.bf16.mxu0 0
      %1997 = vmatpush1.bf16.msra.mxu0 0
      %1998 = vmatprep.subr.bf16.mxu0 0
      %1999 = vmatpush1.bf16.msra.mxu0 0
      %2000 = vmatprep.subr.bf16.mxu0 0
      %2001 = vmatpush1.bf16.msra.mxu0 0
      %2002 = vmatprep.subr.bf16.mxu0 0
      %2003 = vmatpush1.bf16.msra.mxu0 0
      %2004 = vmatprep.subr.bf16.mxu0 0
      %2005 = vmatpush1.bf16.msra.mxu0 0
      %2006 = vmatprep.subr.bf16.mxu0 0
      %2007 = vmatpush1.bf16.msra.mxu0 0
      %2008 = vmatprep.subr.bf16.mxu0 0
      %2009 = vmatpush1.bf16.msra.mxu0 0
      %2010 = vmatprep.subr.bf16.mxu0 0
      %2011 = vmatpush1.bf16.msra.mxu0 0
      %2012 = vmatprep.subr.bf16.mxu0 0
      %2013 = vmatpush1.bf16.msra.mxu0 0
      %2014 = vmatprep.subr.bf16.mxu0 0
      %2015 = vmatpush1.bf16.msra.mxu0 0
      %2016 = vmatprep.subr.bf16.mxu0 0
      %2017 = vmatpush1.bf16.msra.mxu0 0
      %2018 = vmatprep.mubr.bf16.mxu0 0
      %2019 = vmatmul.mubr.bf16.gmra.mrb[0].mxu0 %v1981
      %v2020 = vpop.f32.mrb[0].mxu0
      %v2021 = vadd.f32 0.0, %v2020
      %v2022 = vpop.f32.mrb[0].mxu0
      %v2023 = vpop.f32.mrb[0].mxu0
      %v2024 = vpop.f32.mrb[0].mxu0
      %2025 = vdwg.mxu0
      %v2026 = vadd.f32 %v1863, %v2021
      %2027 = vrot.lane.b32.xlu0 %v1552, 104
      %v2028 = vpop.permute.xlu0 %2027
      %2029 = vrot.lane.b32.xlu0 %v1553, 104
      %v2030 = vpop.permute.xlu0 %2029
      %v2032 = vsel %vm838, %v2028, 0
      %v2035 = vsel %vm838, %v2030, 0
      %2037 = vmatprep.subr.bf16.mxu0 0
      %2038 = vmatpush1.bf16.xpose.msra.mxu0 %v2035
      %2039 = vmatprep.subr.bf16.mxu0 0
      %2040 = vmatpush1.bf16.xpose.msra.mxu0 0
      %2041 = vmatprep.subr.bf16.mxu0 0
      %2042 = vmatpush1.bf16.xpose.msra.mxu0 0
      %2043 = vmatprep.subr.bf16.mxu0 0
      %2044 = vmatpush1.bf16.xpose.msra.mxu0 0
      %2045 = vmatprep.subr.bf16.mxu0 0
      %2046 = vmatpush1.bf16.xpose.msra.mxu0 0
      %2047 = vmatprep.subr.bf16.mxu0 0
      %2048 = vmatpush1.bf16.xpose.msra.mxu0 0
      %2049 = vmatprep.subr.bf16.mxu0 0
      %2050 = vmatpush1.bf16.xpose.msra.mxu0 0
      %2051 = vmatprep.subr.bf16.mxu0 0
      %2052 = vmatpush1.bf16.xpose.msra.mxu0 0
      %2053 = vmatprep.subr.bf16.mxu0 0
      %2054 = vmatpush1.bf16.xpose.msra.mxu0 0
      %2055 = vmatprep.subr.bf16.mxu0 0
      %2056 = vmatpush1.bf16.xpose.msra.mxu0 0
      %2057 = vmatprep.subr.bf16.mxu0 0
      %2058 = vmatpush1.bf16.xpose.msra.mxu0 0
      %2059 = vmatprep.subr.bf16.mxu0 0
      %2060 = vmatpush1.bf16.xpose.msra.mxu0 0
      %2061 = vmatprep.subr.bf16.mxu0 0
      %2062 = vmatpush1.bf16.xpose.msra.mxu0 0
      %2063 = vmatprep.subr.bf16.mxu0 0
      %2064 = vmatpush1.bf16.xpose.msra.mxu0 0
      %2065 = vmatprep.subr.bf16.mxu0 0
      %2066 = vmatpush1.bf16.xpose.msra.mxu0 0
      %2067 = vmatprep.subr.bf16.mxu0 0
      %2068 = vmatpush1.bf16.xpose.msra.mxu0 0
      %2069 = vmatprep.mubr.bf16.mxu0 0
      %2070 = vmatmul.mubr.bf16.gmra.mrb[0].mxu0 %v2032
      %v2071 = vpop.f32.mrb[0].mxu0
      %v2072 = vadd.f32 %v728, %v2071
      %v2073 = vpop.f32.mrb[0].mxu0
      %v2074 = vpop.f32.mrb[0].mxu0
      %v2075 = vpop.f32.mrb[0].mxu0
      %2076 = vdwg.mxu0
      %v2077 = vsel %vm886, %v2072, -inf
      %2078 = vmax.xlane.f32.xlu0 %v2077
      %v2079 = vpop.xlane.xlu0 %2078
      %v2080 = vsub.f32 %v2072, %v2079
      %v2081 = vmul.f32 %v2080, 1.442695
      %v2082 = vpow.pop %v2081
      %v2083 = vsel %vm886, %v2082, 0.0
      %2084 = vadd.xlane.f32.xlu0 %v2083
      %v2085 = vpop.xlane.xlu0 %2084
      %v2086 = vrcp.pop %v2085
      %v2087 = vmul.f32 %v2082, %v2086
      %v2088 = vpack.c.bf16 %v2087, %v2087
      %2089 = vrot.lane.b32.xlu0 %v1612, 104
      %v2090 = vpop.permute.xlu0 %2089
      %v2092 = vsel %vm838, %v2088, 0
      %v2095 = vsel %vm906, %v2090, 0
      %2097 = vmatprep.subr.bf16.mxu0 0
      %2098 = vmatpush1.bf16.msra.mxu0 %v2095
      %2099 = vmatprep.subr.bf16.mxu0 0
      %2100 = vmatpush1.bf16.msra.mxu0 0
      %2101 = vmatprep.subr.bf16.mxu0 0
      %2102 = vmatpush1.bf16.msra.mxu0 0
      %2103 = vmatprep.subr.bf16.mxu0 0
      %2104 = vmatpush1.bf16.msra.mxu0 0
      %2105 = vmatprep.subr.bf16.mxu0 0
      %2106 = vmatpush1.bf16.msra.mxu0 0
      %2107 = vmatprep.subr.bf16.mxu0 0
      %2108 = vmatpush1.bf16.msra.mxu0 0
      %2109 = vmatprep.subr.bf16.mxu0 0
      %2110 = vmatpush1.bf16.msra.mxu0 0
      %2111 = vmatprep.subr.bf16.mxu0 0
      %2112 = vmatpush1.bf16.msra.mxu0 0
      %2113 = vmatprep.subr.bf16.mxu0 0
      %2114 = vmatpush1.bf16.msra.mxu0 0
      %2115 = vmatprep.subr.bf16.mxu0 0
      %2116 = vmatpush1.bf16.msra.mxu0 0
      %2117 = vmatprep.subr.bf16.mxu0 0
      %2118 = vmatpush1.bf16.msra.mxu0 0
      %2119 = vmatprep.subr.bf16.mxu0 0
      %2120 = vmatpush1.bf16.msra.mxu0 0
      %2121 = vmatprep.subr.bf16.mxu0 0
      %2122 = vmatpush1.bf16.msra.mxu0 0
      %2123 = vmatprep.subr.bf16.mxu0 0
      %2124 = vmatpush1.bf16.msra.mxu0 0
      %2125 = vmatprep.subr.bf16.mxu0 0
      %2126 = vmatpush1.bf16.msra.mxu0 0
      %2127 = vmatprep.subr.bf16.mxu0 0
      %2128 = vmatpush1.bf16.msra.mxu0 0
      %2129 = vmatprep.mubr.bf16.mxu0 0
      %2130 = vmatmul.mubr.bf16.gmra.mrb[0].mxu0 %v2092
      %v2131 = vpop.f32.mrb[0].mxu0
      %v2132 = vadd.f32 0.0, %v2131
      %v2133 = vpop.f32.mrb[0].mxu0
      %v2134 = vpop.f32.mrb[0].mxu0
      %v2135 = vpop.f32.mrb[0].mxu0
      %2136 = vdwg.mxu0
      %v2137 = vpack.c.bf16 %v2132, %v2132
      %v2138 = vpack.c.bf16 %v1551, %v1551
      %v2140 = vsel %vm838, %v2137, 0
      %v2143 = vsel %vm906, %v2138, 0
      %2145 = vmatprep.subr.bf16.mxu0 0
      %2146 = vmatpush1.bf16.msra.mxu0 %v2143
      %2147 = vmatprep.subr.bf16.mxu0 0
      %2148 = vmatpush1.bf16.msra.mxu0 0
      %2149 = vmatprep.subr.bf16.mxu0 0
      %2150 = vmatpush1.bf16.msra.mxu0 0
      %2151 = vmatprep.subr.bf16.mxu0 0
      %2152 = vmatpush1.bf16.msra.mxu0 0
      %2153 = vmatprep.subr.bf16.mxu0 0
      %2154 = vmatpush1.bf16.msra.mxu0 0
      %2155 = vmatprep.subr.bf16.mxu0 0
      %2156 = vmatpush1.bf16.msra.mxu0 0
      %2157 = vmatprep.subr.bf16.mxu0 0
      %2158 = vmatpush1.bf16.msra.mxu0 0
      %2159 = vmatprep.subr.bf16.mxu0 0
      %2160 = vmatpush1.bf16.msra.mxu0 0
      %2161 = vmatprep.subr.bf16.mxu0 0
      %2162 = vmatpush1.bf16.msra.mxu0 0
      %2163 = vmatprep.subr.bf16.mxu0 0
      %2164 = vmatpush1.bf16.msra.mxu0 0
      %2165 = vmatprep.subr.bf16.mxu0 0
      %2166 = vmatpush1.bf16.msra.mxu0 0
      %2167 = vmatprep.subr.bf16.mxu0 0
      %2168 = vmatpush1.bf16.msra.mxu0 0
      %2169 = vmatprep.subr.bf16.mxu0 0
      %2170 = vmatpush1.bf16.msra.mxu0 0
      %2171 = vmatprep.subr.bf16.mxu0 0
      %2172 = vmatpush1.bf16.msra.mxu0 0
      %2173 = vmatprep.subr.bf16.mxu0 0
      %2174 = vmatpush1.bf16.msra.mxu0 0
      %2175 = vmatprep.subr.bf16.mxu0 0
      %2176 = vmatpush1.bf16.msra.mxu0 0
      %2177 = vmatprep.mubr.bf16.mxu0 0
      %2178 = vmatmul.mubr.bf16.gmra.mrb[0].mxu0 %v2140
      %v2179 = vpop.f32.mrb[0].mxu0
      %v2180 = vadd.f32 0.0, %v2179
      %v2181 = vpop.f32.mrb[0].mxu0
      %v2182 = vpop.f32.mrb[0].mxu0
      %v2183 = vpop.f32.mrb[0].mxu0
      %2184 = vdwg.mxu0
      %v2185 = vadd.f32 %v2026, %v2180
      %v2186 = vadd.f32 %v1485, %v2185
      %v2187 = vld [vmem:[%s14] sm:$0x1]
      %v2188 = vmul.f32 %v2186, %v2186
      %v2189 = vsel %vm732, %v2188, 0.0
      %2190 = vadd.xlane.f32.xlu0 %v2189
      %v2191 = vpop.xlane.xlu0 %2190
      %v2192 = vmul.f32 %v2191, %v736
      %v2193 = vadd.f32 %v2192, 1e-06
      %v2194 = vrsqrt.pop %v2193
      %v2195 = vmul.f32 %v2186, %v2194
      %v2196 = vmul.f32 %v2195, %v2187
      %v2197 = vld [vmem:[%s15] sm:$0xff]
      %v2198 = vld [vmem:[%s15 + $0x8] sm:$0xff]
      %v2199 = vld [vmem:[%s15 + $0x10] sm:$0xff]
      %v2200 = vld [vmem:[%s15 + $0x18] sm:$0xff]
      %v2201 = vpack.c.bf16 %v2196, %v2196
      %v2202 = vpack.c.bf16 %v2198, %v2197
      %v2203 = vpack.c.bf16 %v2200, %v2199
      %v2205 = vsel %vm749, %v2201, 0
      %2207 = vmatprep.subr.bf16.mxu0 0
      %2208 = vmatpush1.bf16.msra.mxu0 %v2202
      %2209 = vmatprep.subr.bf16.mxu0 0
      %2210 = vmatpush1.bf16.msra.mxu0 %v2203
      %2211 = vmatprep.subr.bf16.mxu0 0
      %2212 = vmatpush1.bf16.msra.mxu0 0
      %2213 = vmatprep.subr.bf16.mxu0 0
      %2214 = vmatpush1.bf16.msra.mxu0 0
      %2215 = vmatprep.subr.bf16.mxu0 0
      %2216 = vmatpush1.bf16.msra.mxu0 0
      %2217 = vmatprep.subr.bf16.mxu0 0
      %2218 = vmatpush1.bf16.msra.mxu0 0
      %2219 = vmatprep.subr.bf16.mxu0 0
      %2220 = vmatpush1.bf16.msra.mxu0 0
      %2221 = vmatprep.subr.bf16.mxu0 0
      %2222 = vmatpush1.bf16.msra.mxu0 0
      %2223 = vmatprep.subr.bf16.mxu0 0
      %2224 = vmatpush1.bf16.msra.mxu0 0
      %2225 = vmatprep.subr.bf16.mxu0 0
      %2226 = vmatpush1.bf16.msra.mxu0 0
      %2227 = vmatprep.subr.bf16.mxu0 0
      %2228 = vmatpush1.bf16.msra.mxu0 0
      %2229 = vmatprep.subr.bf16.mxu0 0
      %2230 = vmatpush1.bf16.msra.mxu0 0
      %2231 = vmatprep.subr.bf16.mxu0 0
      %2232 = vmatpush1.bf16.msra.mxu0 0
      %2233 = vmatprep.subr.bf16.mxu0 0
      %2234 = vmatpush1.bf16.msra.mxu0 0
      %2235 = vmatprep.subr.bf16.mxu0 0
      %2236 = vmatpush1.bf16.msra.mxu0 0
      %2237 = vmatprep.subr.bf16.mxu0 0
      %2238 = vmatpush1.bf16.msra.mxu0 0
      %2239 = vmatprep.mubr.bf16.mxu0 0
      %2240 = vmatmul.mubr.bf16.gmra.mrb[0].mxu0 %v2205
      %v2241 = vpop.f32.mrb[0].mxu0
      %v2242 = vadd.f32 0.0, %v2241
      %v2243 = vpop.f32.mrb[0].mxu0
      %v2244 = vpop.f32.mrb[0].mxu0
      %v2245 = vpop.f32.mrb[0].mxu0
      %2246 = vdwg.mxu0
      %v2247 = vmax.f32 %v2242, 0.0
      %v2248 = vld [vmem:[%s16] sm:$0xff]
      %v2249 = vld [vmem:[%s16 + $0x8] sm:$0xff]
      %v2250 = vld [vmem:[%s16 + $0x10] sm:$0xff]
      %v2251 = vld [vmem:[%s16 + $0x18] sm:$0xff]
      %v2252 = vld [vmem:[%s16 + $0x20] sm:$0xff]
      %v2253 = vld [vmem:[%s16 + $0x28] sm:$0xff]
      %v2254 = vld [vmem:[%s16 + $0x30] sm:$0xff]
      %v2255 = vld [vmem:[%s16 + $0x38] sm:$0xff]
      %v2256 = vpack.c.bf16 %v2247, %v2247
      %v2257 = vpack.c.bf16 %v2249, %v2248
      %v2258 = vpack.c.bf16 %v2251, %v2250
      %v2259 = vpack.c.bf16 %v2253, %v2252
      %v2260 = vpack.c.bf16 %v2255, %v2254
      %vm2261 = vcmask 523264
      %v2263 = vsel %vm2261, %v2256, 0
      %2265 = vmatprep.subr.bf16.mxu0 0
      %2266 = vmatpush1.bf16.msra.mxu0 %v2257
      %2267 = vmatprep.subr.bf16.mxu0 0
      %2268 = vmatpush1.bf16.msra.mxu0 %v2258
      %2269 = vmatprep.subr.bf16.mxu0 0
      %2270 = vmatpush1.bf16.msra.mxu0 %v2259
      %2271 = vmatprep.subr.bf16.mxu0 0
      %2272 = vmatpush1.bf16.msra.mxu0 %v2260
      %2273 = vmatprep.subr.bf16.mxu0 0
      %2274 = vmatpush1.bf16.msra.mxu0 0
      %2275 = vmatprep.subr.bf16.mxu0 0
      %2276 = vmatpush1.bf16.msra.mxu0 0
      %2277 = vmatprep.subr.bf16.mxu0 0
      %2278 = vmatpush1.bf16.msra.mxu0 0
      %2279 = vmatprep.subr.bf16.mxu0 0
      %2280 = vmatpush1.bf16.msra.mxu0 0
      %2281 = vmatprep.subr.bf16.mxu0 0
      %2282 = vmatpush1.bf16.msra.mxu0 0
      %2283 = vmatprep.subr.bf16.mxu0 0
      %2284 = vmatpush1.bf16.msra.mxu0 0
      %2285 = vmatprep.subr.bf16.mxu0 0
      %2286 = vmatpush1.bf16.msra.mxu0 0
      %2287 = vmatprep.subr.bf16.mxu0 0
      %2288 = vmatpush1.bf16.msra.mxu0 0
      %2289 = vmatprep.subr.bf16.mxu0 0
      %2290 = vmatpush1.bf16.msra.mxu0 0
      %2291 = vmatprep.subr.bf16.mxu0 0
      %2292 = vmatpush1.bf16.msra.mxu0 0
      %2293 = vmatprep.subr.bf16.mxu0 0
      %2294 = vmatpush1.bf16.msra.mxu0 0
      %2295 = vmatprep.subr.bf16.mxu0 0
      %2296 = vmatpush1.bf16.msra.mxu0 0
      %2297 = vmatprep.mubr.bf16.mxu0 0
      %2298 = vmatmul.mubr.bf16.gmra.mrb[0].mxu0 %v2263
      %v2299 = vpop.f32.mrb[0].mxu0
      %v2300 = vadd.f32 0.0, %v2299
      %v2301 = vpop.f32.mrb[0].mxu0
      %v2302 = vpop.f32.mrb[0].mxu0
      %v2303 = vpop.f32.mrb[0].mxu0
      %2304 = vdwg.mxu0
      %v2305 = vadd.f32 %v2186, %v2300
      %v2306 = vld [vmem:[%s17] sm:$0x1]
      %v2307 = vmul.f32 %v2305, %v2305
      %v2308 = vsel %vm732, %v2307, 0.0
      %2309 = vadd.xlane.f32.xlu0 %v2308
      %v2310 = vpop.xlane.xlu0 %2309
      %v2311 = vmul.f32 %v2310, %v736
      %v2312 = vadd.f32 %v2311, 1e-06
      %v2313 = vrsqrt.pop %v2312
      %v2314 = vmul.f32 %v2305, %v2313
      %v2315 = vmul.f32 %v2314, %v2306
      %v2316 = vld [vmem:[%s18] sm:$0xff]
      %v2317 = vld [vmem:[%s18 + $0x8] sm:$0xff]
      %v2318 = vld [vmem:[%s18 + $0x10] sm:$0xff]
      %v2319 = vld [vmem:[%s18 + $0x18] sm:$0xff]
      %v2320 = vpack.c.bf16 %v2315, %v2315
      %v2321 = vpack.c.bf16 %v2317, %v2316
      %v2322 = vpack.c.bf16 %v2319, %v2318
      %v2324 = vsel %vm749, %v2320, 0
      %2326 = vmatprep.subr.bf16.mxu0 0
      %2327 = vmatpush1.bf16.msra.mxu0 %v2321
      %2328 = vmatprep.subr.bf16.mxu0 0
      %2329 = vmatpush1.bf16.msra.mxu0 %v2322
      %2330 = vmatprep.subr.bf16.mxu0 0
      %2331 = vmatpush1.bf16.msra.mxu0 0
      %2332 = vmatprep.subr.bf16.mxu0 0
      %2333 = vmatpush1.bf16.msra.mxu0 0
      %2334 = vmatprep.subr.bf16.mxu0 0
      %2335 = vmatpush1.bf16.msra.mxu0 0
      %2336 = vmatprep.subr.bf16.mxu0 0
      %2337 = vmatpush1.bf16.msra.mxu0 0
      %2338 = vmatprep.subr.bf16.mxu0 0
      %2339 = vmatpush1.bf16.msra.mxu0 0
      %2340 = vmatprep.subr.bf16.mxu0 0
      %2341 = vmatpush1.bf16.msra.mxu0 0
      %2342 = vmatprep.subr.bf16.mxu0 0
      %2343 = vmatpush1.bf16.msra.mxu0 0
      %2344 = vmatprep.subr.bf16.mxu0 0
      %2345 = vmatpush1.bf16.msra.mxu0 0
      %2346 = vmatprep.subr.bf16.mxu0 0
      %2347 = vmatpush1.bf16.msra.mxu0 0
      %2348 = vmatprep.subr.bf16.mxu0 0
      %2349 = vmatpush1.bf16.msra.mxu0 0
      %2350 = vmatprep.subr.bf16.mxu0 0
      %2351 = vmatpush1.bf16.msra.mxu0 0
      %2352 = vmatprep.subr.bf16.mxu0 0
      %2353 = vmatpush1.bf16.msra.mxu0 0
      %2354 = vmatprep.subr.bf16.mxu0 0
      %2355 = vmatpush1.bf16.msra.mxu0 0
      %2356 = vmatprep.subr.bf16.mxu0 0
      %2357 = vmatpush1.bf16.msra.mxu0 0
      %2358 = vmatprep.mubr.bf16.mxu0 0
      %2359 = vmatmul.mubr.bf16.gmra.mrb[0].mxu0 %v2324
      %v2360 = vpop.f32.mrb[0].mxu0
      %v2361 = vadd.f32 0.0, %v2360
      %v2362 = vpop.f32.mrb[0].mxu0
      %v2363 = vpop.f32.mrb[0].mxu0
      %v2364 = vpop.f32.mrb[0].mxu0
      %2365 = vdwg.mxu0
      %2366 = vst [vmem:[%s716] sm:$0x1] %v2361
      %p2367 = scmp.lt.s32.totalorder %s34, 3
      %s2368 = scalar_select %p2367, %s34, 3
      %s2369 = scalar_lea.vmem %s19, %s2368
      %p2370 = scmp.lt.s32.totalorder %s34, 3
      %s2371 = scalar_select %p2370, %s34, 3
      %s2372 = smul.addr %s2371, 8
      %s2373 = scalar_lea.vmem %s20, %s2372
      %p2374 = scmp.lt.s32.totalorder %s34, 3
      %s2375 = scalar_select %p2374, %s34, 3
      %s2376 = smul.addr %s2375, 8
      %s2377 = scalar_lea.vmem %s21, %s2376
      // Predicated region
      $region93: #{closed_call.25} parent=91 // pred_check
        %p2378 = pneg %p460
      $region94: #{closed_call.25} parent=91 // pred_check_branch
        %2380 = sbr.rel (%p2378) target = $region96
      $region95: #{closed_call.25} parent=91 // pred_region
        _
      $region96: #{closed_call.25} parent=91 // pred_fallthru
        _
      // Predicated region
      $region97: #{closed_call.25} parent=91 // pred_check
        %p2381 = pneg %p486
      $region98: #{closed_call.25} parent=91 // pred_check_branch
        %2383 = sbr.rel (%p2381) target = $region100
      $region99: #{closed_call.25} parent=91 // pred_region
        _
      $region100: #{closed_call.25} parent=91 // pred_fallthru
        _
      // Predicated region
      $region101: #{closed_call.25} parent=91 // pred_check
        %p2384 = pneg %p512
      $region102: #{closed_call.25} parent=91 // pred_check_branch
        %2386 = sbr.rel (%p2384) target = $region104
      $region103: #{closed_call.25} parent=91 // pred_region
        _
      $region104: #{closed_call.25} parent=91 // pred_fallthru
        _
    $region92: #{closed_call.25} parent=5 // pred_fallthru
      _
    %p2387 = scmp.le.s32.totalorder 2, %s29
    // Predicated region
    $region105: #{closed_call.25} parent=5 // pred_check
      %p2388 = pneg %p2387
    $region106: #{closed_call.25} parent=5 // pred_check_branch
      %2390 = sbr.rel (%p2388) target = $region108
    $region107: #{closed_call.25} parent=5 // pred_region
      %s2391 = ssub.s32 %s29, 2
      // Predicated region
      $region109: #{closed_call.25} parent=107 // pred_check
        %p2392 = pneg %p466
      $region110: #{closed_call.25} parent=107 // pred_check_branch
        %2394 = sbr.rel (%p2392) target = $region112
      $region111: #{closed_call.25} parent=107 // pred_region
        %p2395 = scmp.lt.s32.totalorder %s35, 3
        %s2396 = scalar_select %p2395, %s35, 3
        %s2397 = scalar_lea.vmem %s19, %s2396
      $region112: #{closed_call.25} parent=107 // pred_fallthru
        _
      // Predicated region
      $region113: #{closed_call.25} parent=107 // pred_check
        %p2398 = pneg %p492
      $region114: #{closed_call.25} parent=107 // pred_check_branch
        %2400 = sbr.rel (%p2398) target = $region116
      $region115: #{closed_call.25} parent=107 // pred_region
        %p2401 = scmp.lt.s32.totalorder %s35, 3
        %s2402 = scalar_select %p2401, %s35, 3
        %s2403 = smul.addr %s2402, 8
        %s2404 = scalar_lea.vmem %s20, %s2403
      $region116: #{closed_call.25} parent=107 // pred_fallthru
        _
      // Predicated region
      $region117: #{closed_call.25} parent=107 // pred_check
        %p2405 = pneg %p518
      $region118: #{closed_call.25} parent=107 // pred_check_branch
        %2407 = sbr.rel (%p2405) target = $region120
      $region119: #{closed_call.25} parent=107 // pred_region
        %p2408 = scmp.lt.s32.totalorder %s35, 3
        %s2409 = scalar_select %p2408, %s35, 3
        %s2410 = smul.addr %s2409, 8
        %s2411 = scalar_lea.vmem %s21, %s2410
      $region120: #{closed_call.25} parent=107 // pred_fallthru
        _
    $region108: #{closed_call.25} parent=5 // pred_fallthru
      _
  $region6: #{closed_call.25} parent=0 // loop_footer
    %s33 = sadd.s32 1, %s29
  $region7: #{closed_call.25} parent=0 // loop_footer_branch
    %28 = sbr.rel target = $region3
  $region8: #{closed_call.25} parent=0 // loop_exit
    _

</llo_original>
